<compile_context>
chip_gen: v6e
topology: v6e:2x2x1
jax: 0.10.0
libtpu: 0.0.40
codegen_flags: <defaults>
</compile_context>

<pallas_src>
import functools
import math

import jax
import jax.numpy as jnp
from jax import lax
from jax.experimental import pallas as pl
from jax.experimental.pallas import tpu as pltpu

FEAT = 16          # self.imfeatures
IN_CH = 1          # self.input_channels
BN_EPS = 1e-5


def _round_up(x, m):
    return ((x + m - 1) // m) * m


# --------------------------------------------------------------------------- #
# Kernel
# --------------------------------------------------------------------------- #
def _make_kernel(H, W, N, pad):
    """Kernel for one grid step: N flattened pixels on the lane axis (N % 128 == 0)."""
    pow2 = (W & (W - 1)) == 0 and ((H * W) & (H * W - 1)) == 0

    def kernel(x_ref,
               w1_ref, b1_ref, w2_ref, b2_ref, w3_ref, b3_ref, w4_ref, b4_ref,
               out_ref, act_buf, row_buf):
        # ----- border-validity masks generated in-kernel (no HBM mask operand) -----
        lane = lax.broadcasted_iota(jnp.int32, (1, N), 1)
        if pow2:
            wp = lane & (W - 1)
            hp = (lane & (H * W - 1)) >> (W.bit_length() - 1)
        else:
            # TODO(synk): Mosaic vector int div/rem support varies by release; move
            # these four masks to a small host-side operand for non-pow2 H/W if needed.
            wp = lane % W
            hp = (lane % (H * W)) // W
        cv_m1 = wp >= 1            # left neighbour  (dx = -1) stays inside the row
        cv_p1 = wp <= W - 2        # right neighbour (dx = +1)
        rv_m1 = hp >= 1            # row above (dy = -1) stays inside the image
        rv_p1 = hp <= H - 2        # row below (dy = +1)
        # Hoist the (1,N)->(FEAT,N) broadcasts once (JAX does not CSE broadcast_in_dim).
        cv_m1_f = jnp.broadcast_to(cv_m1, (FEAT, N))
        cv_p1_f = jnp.broadcast_to(cv_p1, (FEAT, N))
        rv_m1_f = jnp.broadcast_to(rv_m1, (FEAT, N))
        rv_p1_f = jnp.broadcast_to(rv_p1, (FEAT, N))

        def shifted_taps(feat, cvm, cvp):
            """feat[:, p-1] and feat[:, p+1] via a halo'd VMEM staging buffer.

            Any read that crosses an image / buffer boundary is zeroed by the
            column mask, so the halo contents never leak into real outputs.
            """
            c = feat.shape[0]
            act_buf[0:c, pad:pad + N] = feat                      # aligned store
            zero = jnp.zeros((), feat.dtype)
            f_m1 = jnp.where(cvm, act_buf[0:c, pad - 1:pad - 1 + N], zero)
            f_p1 = jnp.where(cvp, act_buf[0:c, pad + 1:pad + 1 + N], zero)
            return f_m1, f_p1

        def conv3x3(feat, w_ref, b_ref, cvm, cvp, rvm, rvp, relu):
            """3x3 'SAME' conv on the flattened pixel axis.

            w_ref: (3, 3*Cout, Cin) bf16 -- one (3*Cout, Cin) matrix per column
            offset dx; rows grouped by row offset dy, so a single MXU matmul per
            dx yields all three row partials T_{dy} at once (3 matmuls/layer,
            no im2col concatenate).  The dy shift is applied to the matmul
            OUTPUT (cheaper / mask-equivalent), via the same staging-buffer trick.
            """
            cout = b_ref.shape[0]
            cin = feat.shape[0]
            f_m1, f_p1 = shifted_taps(feat, cvm, cvp)
            taps = (f_m1, feat, f_p1)
            if cin == 1:
                # Cin == 1: the "matmul" is an outer product; keep it on the VPU
                # in f32 (the MXU has huge slack at these widths anyway).
                s = w_ref[0].astype(jnp.float32) * taps[0].astype(jnp.float32)
                s = s + w_ref[1].astype(jnp.float32) * taps[1].astype(jnp.float32)
                s = s + w_ref[2].astype(jnp.float32) * taps[2].astype(jnp.float32)
            else:
                s = jnp.dot(w_ref[0], taps[0], preferred_element_type=jnp.float32)
                s = s + jnp.dot(w_ref[1], taps[1], preferred_element_type=jnp.float32)
                s = s + jnp.dot(w_ref[2], taps[2], preferred_element_type=jnp.float32)
            # Row partials: rows [0:cout] = dy=-1, [cout:2c] = dy=0, [2c:3c] = dy=+1.
            t_up = s[0:cout]
            t_mid = s[cout:2 * cout]
            t_dn = s[2 * cout:3 * cout]
            row_buf[0:cout, pad:pad + N] = t_up
            row_buf[cout:2 * cout, pad:pad + N] = t_dn
            y = t_mid
            y = y + jnp.where(rvm, row_buf[0:cout, pad - W:pad - W + N], 0.0)
            y = y + jnp.where(rvp, row_buf[cout:2 * cout, pad + W:pad + W + N], 0.0)
            y = y + b_ref[...]
            return jnp.maximum(y, 0.0) if relu else y

        x = x_ref[0]                                               # (1, N) bf16
        f1 = conv3x3(x, w1_ref, b1_ref, cv_m1, cv_p1, rv_m1_f, rv_p1_f, True)
        f2 = conv3x3(f1.astype(jnp.bfloat16), w2_ref, b2_ref,
                     cv_m1_f, cv_p1_f, rv_m1_f, rv_p1_f, True)     # center_feature
        f3 = conv3x3(f2.astype(jnp.bfloat16), w3_ref, b3_ref,
                     cv_m1_f, cv_p1_f, rv_m1_f, rv_p1_f, True)     # edge_tensor
        e = conv3x3(f3.astype(jnp.bfloat16), w4_ref, b4_ref,
                    cv_m1_f, cv_p1_f, rv_m1, rv_p1, False)         # edge_out (1, N)
        out_ref[0] = 1.0 / (1.0 + jnp.exp(-e))                     # exact sigmoid

    return kernel


# --------------------------------------------------------------------------- #
# Params (matches FastLF_Net.__init__ init scheme) and host-side weight prep
# --------------------------------------------------------------------------- #
def init_params(key, feat=FEAT):
    """Conv2d weight ~ N(0, sqrt(2/n)), n = kh*kw*Cout; BN gamma=1, beta=0 and
    (placeholder) running stats mean=0, var=1."""
    ks = jax.random.split(key, 4)

    def conv_w(k, cout, cin):
        n = 3 * 3 * cout
        return math.sqrt(2.0 / n) * jax.random.normal(k, (cout, cin, 3, 3), jnp.float32)

    bn = (jnp.ones((feat,), jnp.float32),    # gamma
          jnp.zeros((feat,), jnp.float32),   # beta
          jnp.zeros((feat,), jnp.float32),   # running_mean
          jnp.ones((feat,), jnp.float32))    # running_var

    return dict(
        w1=conv_w(ks[0], feat, IN_CH), bn1=bn,
        w2=conv_w(ks[1], feat, feat),  bn2=bn,
        w3=conv_w(ks[2], feat, feat),  bn3=bn,
        w4=conv_w(ks[3], 1, feat),     b4=jnp.zeros((1,), jnp.float32),
    )


def _fold_bn(w_oihw, bn):
    gamma, beta, mean, var = bn
    s = gamma / jnp.sqrt(var + BN_EPS)
    return w_oihw * s[:, None, None, None], beta - mean * s


def _to_kernel_layout(w_oihw, b):
    # (Cout, Cin, ky, kx) -> (kx, ky*Cout + o, Cin): one (3*Cout, Cin) matrix per
    # column offset dx, rows grouped by row offset dy.  Weights in bf16, bias f32.
    cout, cin = w_oihw.shape[:2]
    wk = jnp.transpose(w_oihw, (3, 2, 0, 1)).reshape(3, 3 * cout, cin)
    return wk.astype(jnp.bfloat16), b.reshape(cout, 1).astype(jnp.float32)


# --------------------------------------------------------------------------- #
# Wrapper
# --------------------------------------------------------------------------- #
@functools.partial(jax.jit, static_argnames=("batch_tile",))
def fastlf_forward(x_nchw, params, *, batch_tile=None):
    B, Cin, H, W = x_nchw.shape
    assert Cin == IN_CH

    # One fat grid step by default (v5e/v6e single TensorCore, ~0.35us/step
    # overhead); split over the batch only when a step gets large, which also
    # gives v7x's two TensorCores >=2 'parallel' steps.
    if batch_tile is None:
        batch_tile = B
        if B % 2 == 0 and B * H * W > (1 << 17):
            batch_tile = B // 2
    BT = batch_tile
    assert B % BT == 0
    G = B // BT

    n_real = BT * H * W
    N = _round_up(n_real, 128)          # lane-dense, 128-aligned pixel axis
    pad = _round_up(max(W, 1), 128)     # staging-buffer halo (covers +-1 and +-W)

    # ---- fold BN into conv weights/bias; convert to kernel layout ----
    w1, b1 = _fold_bn(params["w1"], params["bn1"])
    w2, b2 = _fold_bn(params["w2"], params["bn2"])
    w3, b3 = _fold_bn(params["w3"], params["bn3"])
    w4, b4 = params["w4"], params["b4"]
    w1k, b1k = _to_kernel_layout(w1, b1)
    w2k, b2k = _to_kernel_layout(w2, b2)
    w3k, b3k = _to_kernel_layout(w3, b3)
    w4k, b4k = _to_kernel_layout(w4, b4)

    # ---- input: NCHW -> (G, 1, N) bf16, pixels (and batch tile) on the lane axis ----
    x3 = x_nchw.astype(jnp.bfloat16).reshape(G, 1, n_real)
    if N != n_real:
        x3 = jnp.pad(x3, ((0, 0), (0, 0), (0, N - n_real)))

    def const_spec(a):
        zeros = (0,) * a.ndim
        return pl.BlockSpec(a.shape, lambda i, _z=zeros: _z)

    weights = (w1k, b1k, w2k, b2k, w3k, b3k, w4k, b4k)

    out = pl.pallas_call(
        _make_kernel(H, W, N, pad),
        out_shape=jax.ShapeDtypeStruct((G, 1, N), jnp.float32),
        grid=(G,),
        in_specs=[pl.BlockSpec((1, 1, N), lambda i: (i, 0, 0))]
                 + [const_spec(a) for a in weights],
        out_specs=pl.BlockSpec((1, 1, N), lambda i: (i, 0, 0)),
        scratch_shapes=[
            pltpu.VMEM((FEAT, N + 2 * pad), jnp.bfloat16),       # +-1 column taps
            pltpu.VMEM((2 * FEAT, N + 2 * pad), jnp.float32),    # +-W row partials
        ],
        compiler_params=pltpu.CompilerParams(
            dimension_semantics=("parallel",),
            vmem_limit_bytes=56 * 1024 * 1024,   # above the 16/32 MiB scoped default
        ),
    )(x3, *weights)

    # back to PyTorch NCHW: (B, 1, H, W) == torch.sigmoid(edge_out)
    out = out[:, :, :n_real].reshape(B, H, W)
    return out[:, None, :, :]


# --------------------------------------------------------------------------- #
# Pure-JAX reference (XLA conv, f32) with the same BN-folded weights
# --------------------------------------------------------------------------- #
def reference_forward(x_nchw, params):
    w1, b1 = _fold_bn(params["w1"], params["bn1"])
    w2, b2 = _fold_bn(params["w2"], params["bn2"])
    w3, b3 = _fold_bn(params["w3"], params["bn3"])
    w4, b4 = params["w4"], params["b4"]

    def conv(x, w, b, relu=True):
        y = lax.conv_general_dilated(x, w, window_strides=(1, 1), padding="SAME",
                                     dimension_numbers=("NCHW", "OIHW", "NCHW"))
        y = y + b.reshape(1, -1, 1, 1)
        return jnp.maximum(y, 0.0) if relu else y

    x = x_nchw.astype(jnp.float32)
    f1 = conv(x, w1, b1)
    f2 = conv(f1, w2, b2)
    f3 = conv(f2, w3, b3)
    e = conv(f3, w4, b4, relu=False)
    return 1.0 / (1.0 + jnp.exp(-e))


if __name__ == "__main__":
    key = jax.random.PRNGKey(0)
    k_param, k_input = jax.random.split(key)

    params = init_params(k_param)
    # deterministic NCHW input matching the module: batch=2, 1 channel, 16x16
    center_input = jax.random.normal(k_input, (2, 1, 16, 16), jnp.float32)

    out = fastlf_forward(center_input, params)
    out = jax.block_until_ready(out)

    assert out.shape == (2, 1, 16, 16)
    assert bool(jnp.all(jnp.isfinite(out)))
    assert bool(jnp.all((out >= 0.0) & (out <= 1.0)))             # sigmoid range

    ref = reference_forward(center_input, params)
    max_err = float(jnp.max(jnp.abs(out - ref)))
    # bf16 activations/weights vs the f32 reference: a few 1e-3 absolute error on
    # the sigmoid output is expected.
    assert max_err < 2e-2, f"mismatch vs reference: max abs err {max_err}"

    print("KERNEL_OK")
</pallas_src>

<mosaic_0001>
module attributes {stable_mosaic.version = 11 : i64} {
  func.func @kernel(%arg0: i32, %arg1: memref<1x1x512xbf16, #tpu.memory_space<vmem>>, %arg2: memref<3x48x1xbf16, #tpu.memory_space<vmem>>, %arg3: memref<16x1xf32, #tpu.memory_space<vmem>>, %arg4: memref<3x48x16xbf16, #tpu.memory_space<vmem>>, %arg5: memref<16x1xf32, #tpu.memory_space<vmem>>, %arg6: memref<3x48x16xbf16, #tpu.memory_space<vmem>>, %arg7: memref<16x1xf32, #tpu.memory_space<vmem>>, %arg8: memref<3x3x16xbf16, #tpu.memory_space<vmem>>, %arg9: memref<1x1xf32, #tpu.memory_space<vmem>>, %arg10: memref<1x1x512xf32, #tpu.memory_space<vmem>>, %arg11: memref<16x768xbf16, #tpu.memory_space<vmem>>, %arg12: memref<32x768xf32, #tpu.memory_space<vmem>>) attributes {dimension_semantics = [#tpu.dimension_semantics<parallel>], iteration_bounds = array<i64: 1>, scalar_prefetch = 0 : i64, scratch_operands = 2 : i64, tpu.core_type = #tpu.core_type<tc>, window_params = [{transform_indices = @transform_0, window_bounds = array<i64: 1, 1, 512>}, {pipeline_mode = #tpu.pipeline_mode<synchronous>, transform_indices = @transform_1, window_bounds = array<i64: 3, 48, 1>}, {pipeline_mode = #tpu.pipeline_mode<synchronous>, transform_indices = @transform_2, window_bounds = array<i64: 16, 1>}, {pipeline_mode = #tpu.pipeline_mode<synchronous>, transform_indices = @transform_3, window_bounds = array<i64: 3, 48, 16>}, {pipeline_mode = #tpu.pipeline_mode<synchronous>, transform_indices = @transform_4, window_bounds = array<i64: 16, 1>}, {pipeline_mode = #tpu.pipeline_mode<synchronous>, transform_indices = @transform_5, window_bounds = array<i64: 3, 48, 16>}, {pipeline_mode = #tpu.pipeline_mode<synchronous>, transform_indices = @transform_6, window_bounds = array<i64: 16, 1>}, {pipeline_mode = #tpu.pipeline_mode<synchronous>, transform_indices = @transform_7, window_bounds = array<i64: 3, 3, 16>}, {pipeline_mode = #tpu.pipeline_mode<synchronous>, transform_indices = @transform_8, window_bounds = array<i64: 1, 1>}, {transform_indices = @transform_9, window_bounds = array<i64: 1, 1, 512>}]} {
    %0 = tpu.iota {dimensions = array<i32: 1>} : vector<1x512xi32>
    %c15_i32 = arith.constant 15 : i32
    %1 = vector.broadcast %c15_i32 : i32 to vector<1x512xi32>
    %2 = arith.andi %0, %1 : vector<1x512xi32>
    %c255_i32 = arith.constant 255 : i32
    %3 = vector.broadcast %c255_i32 : i32 to vector<1x512xi32>
    %4 = arith.andi %0, %3 : vector<1x512xi32>
    %c4_i32 = arith.constant 4 : i32
    %5 = vector.broadcast %c4_i32 : i32 to vector<1x512xi32>
    %6 = arith.shrsi %4, %5 : vector<1x512xi32>
    %c1_i32 = arith.constant 1 : i32
    %7 = vector.broadcast %c1_i32 : i32 to vector<1x512xi32>
    %8 = arith.cmpi sge, %2, %7 : vector<1x512xi32>
    %c14_i32 = arith.constant 14 : i32
    %9 = vector.broadcast %c14_i32 : i32 to vector<1x512xi32>
    %10 = arith.cmpi sle, %2, %9 : vector<1x512xi32>
    %c1_i32_0 = arith.constant 1 : i32
    %11 = vector.broadcast %c1_i32_0 : i32 to vector<1x512xi32>
    %12 = arith.cmpi sge, %6, %11 : vector<1x512xi32>
    %c14_i32_1 = arith.constant 14 : i32
    %13 = vector.broadcast %c14_i32_1 : i32 to vector<1x512xi32>
    %14 = arith.cmpi sle, %6, %13 : vector<1x512xi32>
    %15 = vector.shape_cast %8 : vector<1x512xi1> to vector<1x512xi1>
    %16 = vector.broadcast %15 : vector<1x512xi1> to vector<16x512xi1>
    %17 = vector.shape_cast %10 : vector<1x512xi1> to vector<1x512xi1>
    %18 = vector.broadcast %17 : vector<1x512xi1> to vector<16x512xi1>
    %19 = vector.shape_cast %12 : vector<1x512xi1> to vector<1x512xi1>
    %20 = vector.broadcast %19 : vector<1x512xi1> to vector<16x512xi1>
    %21 = vector.shape_cast %14 : vector<1x512xi1> to vector<1x512xi1>
    %22 = vector.broadcast %21 : vector<1x512xi1> to vector<16x512xi1>
    %c0 = arith.constant 0 : index
    %c0_2 = arith.constant 0 : index
    %c0_3 = arith.constant 0 : index
    %23 = vector.load %arg1[%c0, %c0_2, %c0_3] : memref<1x1x512xbf16, #tpu.memory_space<vmem>>, vector<1x1x512xbf16>
    %24 = vector.shape_cast %23 : vector<1x1x512xbf16> to vector<1x512xbf16>
    %c0_4 = arith.constant 0 : index
    %c128 = arith.constant 128 : index
    %25 = vector.load %arg11[%c0_4, %c128] : memref<16x768xbf16, #tpu.memory_space<vmem>>, vector<1x512xbf16>
    tpu.vector_store %arg11[%c0_4, %c128], %24 {strides = array<i32>} : memref<16x768xbf16, #tpu.memory_space<vmem>>, vector<1x512xbf16>,
    %c0_5 = arith.constant 0 : index
    %c127 = arith.constant 127 : index
    %26 = vector.load %arg11[%c0_5, %c127] : memref<16x768xbf16, #tpu.memory_space<vmem>>, vector<1x512xbf16>
    %cst = arith.constant 0.000000e+00 : bf16
    %27 = vector.broadcast %cst : bf16 to vector<1x512xbf16>
    %28 = arith.select %8, %26, %27 : vector<1x512xi1>, vector<1x512xbf16>
    %c0_6 = arith.constant 0 : index
    %c129 = arith.constant 129 : index
    %29 = vector.load %arg11[%c0_6, %c129] : memref<16x768xbf16, #tpu.memory_space<vmem>>, vector<1x512xbf16>
    %cst_7 = arith.constant 0.000000e+00 : bf16
    %30 = vector.broadcast %cst_7 : bf16 to vector<1x512xbf16>
    %31 = arith.select %10, %29, %30 : vector<1x512xi1>, vector<1x512xbf16>
    %c0_8 = arith.constant 0 : index
    %c0_9 = arith.constant 0 : index
    %c0_10 = arith.constant 0 : index
    %32 = vector.load %arg2[%c0_8, %c0_9, %c0_10] : memref<3x48x1xbf16, #tpu.memory_space<vmem>>, vector<1x48x1xbf16>
    %33 = vector.shape_cast %32 : vector<1x48x1xbf16> to vector<48x1xbf16>
    %34 = arith.extf %33 : vector<48x1xbf16> to vector<48x1xf32>
    %35 = arith.extf %28 : vector<1x512xbf16> to vector<1x512xf32>
    %36 = vector.broadcast %34 : vector<48x1xf32> to vector<48x512xf32>
    %37 = vector.broadcast %35 : vector<1x512xf32> to vector<48x512xf32>
    %38 = arith.mulf %36, %37 : vector<48x512xf32>
    %c1 = arith.constant 1 : index
    %c0_11 = arith.constant 0 : index
    %c0_12 = arith.constant 0 : index
    %39 = vector.load %arg2[%c1, %c0_11, %c0_12] : memref<3x48x1xbf16, #tpu.memory_space<vmem>>, vector<1x48x1xbf16>
    %40 = vector.shape_cast %39 : vector<1x48x1xbf16> to vector<48x1xbf16>
    %41 = arith.extf %40 : vector<48x1xbf16> to vector<48x1xf32>
    %42 = arith.extf %24 : vector<1x512xbf16> to vector<1x512xf32>
    %43 = vector.broadcast %41 : vector<48x1xf32> to vector<48x512xf32>
    %44 = vector.broadcast %42 : vector<1x512xf32> to vector<48x512xf32>
    %45 = arith.mulf %43, %44 : vector<48x512xf32>
    %46 = arith.addf %38, %45 : vector<48x512xf32>
    %c2 = arith.constant 2 : index
    %c0_13 = arith.constant 0 : index
    %c0_14 = arith.constant 0 : index
    %47 = vector.load %arg2[%c2, %c0_13, %c0_14] : memref<3x48x1xbf16, #tpu.memory_space<vmem>>, vector<1x48x1xbf16>
    %48 = vector.shape_cast %47 : vector<1x48x1xbf16> to vector<48x1xbf16>
    %49 = arith.extf %48 : vector<48x1xbf16> to vector<48x1xf32>
    %50 = arith.extf %31 : vector<1x512xbf16> to vector<1x512xf32>
    %51 = vector.broadcast %49 : vector<48x1xf32> to vector<48x512xf32>
    %52 = vector.broadcast %50 : vector<1x512xf32> to vector<48x512xf32>
    %53 = arith.mulf %51, %52 : vector<48x512xf32>
    %54 = arith.addf %46, %53 : vector<48x512xf32>
    %55 = vector.extract_strided_slice %54 {offsets = [0, 0], sizes = [16, 512], strides = [1, 1]} : vector<48x512xf32> to vector<16x512xf32>
    %56 = vector.extract_strided_slice %54 {offsets = [16, 0], sizes = [16, 512], strides = [1, 1]} : vector<48x512xf32> to vector<16x512xf32>
    %57 = vector.extract_strided_slice %54 {offsets = [32, 0], sizes = [16, 512], strides = [1, 1]} : vector<48x512xf32> to vector<16x512xf32>
    %c0_15 = arith.constant 0 : index
    %c128_16 = arith.constant 128 : index
    %58 = vector.load %arg12[%c0_15, %c128_16] : memref<32x768xf32, #tpu.memory_space<vmem>>, vector<16x512xf32>
    tpu.vector_store %arg12[%c0_15, %c128_16], %55 {strides = array<i32>} : memref<32x768xf32, #tpu.memory_space<vmem>>, vector<16x512xf32>,
    %c16 = arith.constant 16 : index
    %c128_17 = arith.constant 128 : index
    %59 = vector.load %arg12[%c16, %c128_17] : memref<32x768xf32, #tpu.memory_space<vmem>>, vector<16x512xf32>
    tpu.vector_store %arg12[%c16, %c128_17], %57 {strides = array<i32>} : memref<32x768xf32, #tpu.memory_space<vmem>>, vector<16x512xf32>,
    %c0_18 = arith.constant 0 : index
    %c112 = arith.constant 112 : index
    %60 = vector.load %arg12[%c0_18, %c112] : memref<32x768xf32, #tpu.memory_space<vmem>>, vector<16x512xf32>
    %cst_19 = arith.constant 0.000000e+00 : f32
    %61 = vector.broadcast %cst_19 : f32 to vector<16x512xf32>
    %62 = arith.select %20, %60, %61 : vector<16x512xi1>, vector<16x512xf32>
    %63 = arith.addf %56, %62 : vector<16x512xf32>
    %c16_20 = arith.constant 16 : index
    %c144 = arith.constant 144 : index
    %64 = vector.load %arg12[%c16_20, %c144] : memref<32x768xf32, #tpu.memory_space<vmem>>, vector<16x512xf32>
    %cst_21 = arith.constant 0.000000e+00 : f32
    %65 = vector.broadcast %cst_21 : f32 to vector<16x512xf32>
    %66 = arith.select %22, %64, %65 : vector<16x512xi1>, vector<16x512xf32>
    %67 = arith.addf %63, %66 : vector<16x512xf32>
    %c0_22 = arith.constant 0 : index
    %c0_23 = arith.constant 0 : index
    %68 = vector.load %arg3[%c0_22, %c0_23] : memref<16x1xf32, #tpu.memory_space<vmem>>, vector<16x1xf32>
    %69 = vector.broadcast %68 : vector<16x1xf32> to vector<16x512xf32>
    %70 = arith.addf %67, %69 : vector<16x512xf32>
    %cst_24 = arith.constant 0.000000e+00 : f32
    %71 = vector.broadcast %cst_24 : f32 to vector<16x512xf32>
    %72 = arith.maximumf %70, %71 : vector<16x512xf32>
    %73 = arith.truncf %72 : vector<16x512xf32> to vector<16x512xbf16>
    %c0_25 = arith.constant 0 : index
    %c128_26 = arith.constant 128 : index
    %74 = vector.load %arg11[%c0_25, %c128_26] : memref<16x768xbf16, #tpu.memory_space<vmem>>, vector<16x512xbf16>
    tpu.vector_store %arg11[%c0_25, %c128_26], %73 {strides = array<i32>} : memref<16x768xbf16, #tpu.memory_space<vmem>>, vector<16x512xbf16>,
    %c0_27 = arith.constant 0 : index
    %c127_28 = arith.constant 127 : index
    %75 = vector.load %arg11[%c0_27, %c127_28] : memref<16x768xbf16, #tpu.memory_space<vmem>>, vector<16x512xbf16>
    %cst_29 = arith.constant 0.000000e+00 : bf16
    %76 = vector.broadcast %cst_29 : bf16 to vector<16x512xbf16>
    %77 = arith.select %16, %75, %76 : vector<16x512xi1>, vector<16x512xbf16>
    %c0_30 = arith.constant 0 : index
    %c129_31 = arith.constant 129 : index
    %78 = vector.load %arg11[%c0_30, %c129_31] : memref<16x768xbf16, #tpu.memory_space<vmem>>, vector<16x512xbf16>
    %cst_32 = arith.constant 0.000000e+00 : bf16
    %79 = vector.broadcast %cst_32 : bf16 to vector<16x512xbf16>
    %80 = arith.select %18, %78, %79 : vector<16x512xi1>, vector<16x512xbf16>
    %c0_33 = arith.constant 0 : index
    %c0_34 = arith.constant 0 : index
    %c0_35 = arith.constant 0 : index
    %81 = vector.load %arg4[%c0_33, %c0_34, %c0_35] : memref<3x48x16xbf16, #tpu.memory_space<vmem>>, vector<1x48x16xbf16>
    %82 = vector.shape_cast %81 : vector<1x48x16xbf16> to vector<48x16xbf16>
    %cst_36 = arith.constant dense<0.000000e+00> : vector<48x512xf32>
    %83 = tpu.matmul %82, %77, %cst_36 {dimension_numbers = #tpu.dot_dimension_numbers<[1], [0], [0], [1], [0, 0, 1, 1], [], []>} : vector<48x16xbf16>, vector<16x512xbf16>, vector<48x512xf32> -> vector<48x512xf32>
    %c1_37 = arith.constant 1 : index
    %c0_38 = arith.constant 0 : index
    %c0_39 = arith.constant 0 : index
    %84 = vector.load %arg4[%c1_37, %c0_38, %c0_39] : memref<3x48x16xbf16, #tpu.memory_space<vmem>>, vector<1x48x16xbf16>
    %85 = vector.shape_cast %84 : vector<1x48x16xbf16> to vector<48x16xbf16>
    %cst_40 = arith.constant dense<0.000000e+00> : vector<48x512xf32>
    %86 = tpu.matmul %85, %73, %cst_40 {dimension_numbers = #tpu.dot_dimension_numbers<[1], [0], [0], [1], [0, 0, 1, 1], [], []>} : vector<48x16xbf16>, vector<16x512xbf16>, vector<48x512xf32> -> vector<48x512xf32>
    %87 = arith.addf %83, %86 : vector<48x512xf32>
    %c2_41 = arith.constant 2 : index
    %c0_42 = arith.constant 0 : index
    %c0_43 = arith.constant 0 : index
    %88 = vector.load %arg4[%c2_41, %c0_42, %c0_43] : memref<3x48x16xbf16, #tpu.memory_space<vmem>>, vector<1x48x16xbf16>
    %89 = vector.shape_cast %88 : vector<1x48x16xbf16> to vector<48x16xbf16>
    %cst_44 = arith.constant dense<0.000000e+00> : vector<48x512xf32>
    %90 = tpu.matmul %89, %80, %cst_44 {dimension_numbers = #tpu.dot_dimension_numbers<[1], [0], [0], [1], [0, 0, 1, 1], [], []>} : vector<48x16xbf16>, vector<16x512xbf16>, vector<48x512xf32> -> vector<48x512xf32>
    %91 = arith.addf %87, %90 : vector<48x512xf32>
    %92 = vector.extract_strided_slice %91 {offsets = [0, 0], sizes = [16, 512], strides = [1, 1]} : vector<48x512xf32> to vector<16x512xf32>
    %93 = vector.extract_strided_slice %91 {offsets = [16, 0], sizes = [16, 512], strides = [1, 1]} : vector<48x512xf32> to vector<16x512xf32>
    %94 = vector.extract_strided_slice %91 {offsets = [32, 0], sizes = [16, 512], strides = [1, 1]} : vector<48x512xf32> to vector<16x512xf32>
    %c0_45 = arith.constant 0 : index
    %c128_46 = arith.constant 128 : index
    %95 = vector.load %arg12[%c0_45, %c128_46] : memref<32x768xf32, #tpu.memory_space<vmem>>, vector<16x512xf32>
    tpu.vector_store %arg12[%c0_45, %c128_46], %92 {strides = array<i32>} : memref<32x768xf32, #tpu.memory_space<vmem>>, vector<16x512xf32>,
    %c16_47 = arith.constant 16 : index
    %c128_48 = arith.constant 128 : index
    %96 = vector.load %arg12[%c16_47, %c128_48] : memref<32x768xf32, #tpu.memory_space<vmem>>, vector<16x512xf32>
    tpu.vector_store %arg12[%c16_47, %c128_48], %94 {strides = array<i32>} : memref<32x768xf32, #tpu.memory_space<vmem>>, vector<16x512xf32>,
    %c0_49 = arith.constant 0 : index
    %c112_50 = arith.constant 112 : index
    %97 = vector.load %arg12[%c0_49, %c112_50] : memref<32x768xf32, #tpu.memory_space<vmem>>, vector<16x512xf32>
    %cst_51 = arith.constant 0.000000e+00 : f32
    %98 = vector.broadcast %cst_51 : f32 to vector<16x512xf32>
    %99 = arith.select %20, %97, %98 : vector<16x512xi1>, vector<16x512xf32>
    %100 = arith.addf %93, %99 : vector<16x512xf32>
    %c16_52 = arith.constant 16 : index
    %c144_53 = arith.constant 144 : index
    %101 = vector.load %arg12[%c16_52, %c144_53] : memref<32x768xf32, #tpu.memory_space<vmem>>, vector<16x512xf32>
    %cst_54 = arith.constant 0.000000e+00 : f32
    %102 = vector.broadcast %cst_54 : f32 to vector<16x512xf32>
    %103 = arith.select %22, %101, %102 : vector<16x512xi1>, vector<16x512xf32>
    %104 = arith.addf %100, %103 : vector<16x512xf32>
    %c0_55 = arith.constant 0 : index
    %c0_56 = arith.constant 0 : index
    %105 = vector.load %arg5[%c0_55, %c0_56] : memref<16x1xf32, #tpu.memory_space<vmem>>, vector<16x1xf32>
    %106 = vector.broadcast %105 : vector<16x1xf32> to vector<16x512xf32>
    %107 = arith.addf %104, %106 : vector<16x512xf32>
    %cst_57 = arith.constant 0.000000e+00 : f32
    %108 = vector.broadcast %cst_57 : f32 to vector<16x512xf32>
    %109 = arith.maximumf %107, %108 : vector<16x512xf32>
    %110 = arith.truncf %109 : vector<16x512xf32> to vector<16x512xbf16>
    %c0_58 = arith.constant 0 : index
    %c128_59 = arith.constant 128 : index
    %111 = vector.load %arg11[%c0_58, %c128_59] : memref<16x768xbf16, #tpu.memory_space<vmem>>, vector<16x512xbf16>
    tpu.vector_store %arg11[%c0_58, %c128_59], %110 {strides = array<i32>} : memref<16x768xbf16, #tpu.memory_space<vmem>>, vector<16x512xbf16>,
    %c0_60 = arith.constant 0 : index
    %c127_61 = arith.constant 127 : index
    %112 = vector.load %arg11[%c0_60, %c127_61] : memref<16x768xbf16, #tpu.memory_space<vmem>>, vector<16x512xbf16>
    %cst_62 = arith.constant 0.000000e+00 : bf16
    %113 = vector.broadcast %cst_62 : bf16 to vector<16x512xbf16>
    %114 = arith.select %16, %112, %113 : vector<16x512xi1>, vector<16x512xbf16>
    %c0_63 = arith.constant 0 : index
    %c129_64 = arith.constant 129 : index
    %115 = vector.load %arg11[%c0_63, %c129_64] : memref<16x768xbf16, #tpu.memory_space<vmem>>, vector<16x512xbf16>
    %cst_65 = arith.constant 0.000000e+00 : bf16
    %116 = vector.broadcast %cst_65 : bf16 to vector<16x512xbf16>
    %117 = arith.select %18, %115, %116 : vector<16x512xi1>, vector<16x512xbf16>
    %c0_66 = arith.constant 0 : index
    %c0_67 = arith.constant 0 : index
    %c0_68 = arith.constant 0 : index
    %118 = vector.load %arg6[%c0_66, %c0_67, %c0_68] : memref<3x48x16xbf16, #tpu.memory_space<vmem>>, vector<1x48x16xbf16>
    %119 = vector.shape_cast %118 : vector<1x48x16xbf16> to vector<48x16xbf16>
    %cst_69 = arith.constant dense<0.000000e+00> : vector<48x512xf32>
    %120 = tpu.matmul %119, %114, %cst_69 {dimension_numbers = #tpu.dot_dimension_numbers<[1], [0], [0], [1], [0, 0, 1, 1], [], []>} : vector<48x16xbf16>, vector<16x512xbf16>, vector<48x512xf32> -> vector<48x512xf32>
    %c1_70 = arith.constant 1 : index
    %c0_71 = arith.constant 0 : index
    %c0_72 = arith.constant 0 : index
    %121 = vector.load %arg6[%c1_70, %c0_71, %c0_72] : memref<3x48x16xbf16, #tpu.memory_space<vmem>>, vector<1x48x16xbf16>
    %122 = vector.shape_cast %121 : vector<1x48x16xbf16> to vector<48x16xbf16>
    %cst_73 = arith.constant dense<0.000000e+00> : vector<48x512xf32>
    %123 = tpu.matmul %122, %110, %cst_73 {dimension_numbers = #tpu.dot_dimension_numbers<[1], [0], [0], [1], [0, 0, 1, 1], [], []>} : vector<48x16xbf16>, vector<16x512xbf16>, vector<48x512xf32> -> vector<48x512xf32>
    %124 = arith.addf %120, %123 : vector<48x512xf32>
    %c2_74 = arith.constant 2 : index
    %c0_75 = arith.constant 0 : index
    %c0_76 = arith.constant 0 : index
    %125 = vector.load %arg6[%c2_74, %c0_75, %c0_76] : memref<3x48x16xbf16, #tpu.memory_space<vmem>>, vector<1x48x16xbf16>
    %126 = vector.shape_cast %125 : vector<1x48x16xbf16> to vector<48x16xbf16>
    %cst_77 = arith.constant dense<0.000000e+00> : vector<48x512xf32>
    %127 = tpu.matmul %126, %117, %cst_77 {dimension_numbers = #tpu.dot_dimension_numbers<[1], [0], [0], [1], [0, 0, 1, 1], [], []>} : vector<48x16xbf16>, vector<16x512xbf16>, vector<48x512xf32> -> vector<48x512xf32>
    %128 = arith.addf %124, %127 : vector<48x512xf32>
    %129 = vector.extract_strided_slice %128 {offsets = [0, 0], sizes = [16, 512], strides = [1, 1]} : vector<48x512xf32> to vector<16x512xf32>
    %130 = vector.extract_strided_slice %128 {offsets = [16, 0], sizes = [16, 512], strides = [1, 1]} : vector<48x512xf32> to vector<16x512xf32>
    %131 = vector.extract_strided_slice %128 {offsets = [32, 0], sizes = [16, 512], strides = [1, 1]} : vector<48x512xf32> to vector<16x512xf32>
    %c0_78 = arith.constant 0 : index
    %c128_79 = arith.constant 128 : index
    %132 = vector.load %arg12[%c0_78, %c128_79] : memref<32x768xf32, #tpu.memory_space<vmem>>, vector<16x512xf32>
    tpu.vector_store %arg12[%c0_78, %c128_79], %129 {strides = array<i32>} : memref<32x768xf32, #tpu.memory_space<vmem>>, vector<16x512xf32>,
    %c16_80 = arith.constant 16 : index
    %c128_81 = arith.constant 128 : index
    %133 = vector.load %arg12[%c16_80, %c128_81] : memref<32x768xf32, #tpu.memory_space<vmem>>, vector<16x512xf32>
    tpu.vector_store %arg12[%c16_80, %c128_81], %131 {strides = array<i32>} : memref<32x768xf32, #tpu.memory_space<vmem>>, vector<16x512xf32>,
    %c0_82 = arith.constant 0 : index
    %c112_83 = arith.constant 112 : index
    %134 = vector.load %arg12[%c0_82, %c112_83] : memref<32x768xf32, #tpu.memory_space<vmem>>, vector<16x512xf32>
    %cst_84 = arith.constant 0.000000e+00 : f32
    %135 = vector.broadcast %cst_84 : f32 to vector<16x512xf32>
    %136 = arith.select %20, %134, %135 : vector<16x512xi1>, vector<16x512xf32>
    %137 = arith.addf %130, %136 : vector<16x512xf32>
    %c16_85 = arith.constant 16 : index
    %c144_86 = arith.constant 144 : index
    %138 = vector.load %arg12[%c16_85, %c144_86] : memref<32x768xf32, #tpu.memory_space<vmem>>, vector<16x512xf32>
    %cst_87 = arith.constant 0.000000e+00 : f32
    %139 = vector.broadcast %cst_87 : f32 to vector<16x512xf32>
    %140 = arith.select %22, %138, %139 : vector<16x512xi1>, vector<16x512xf32>
    %141 = arith.addf %137, %140 : vector<16x512xf32>
    %c0_88 = arith.constant 0 : index
    %c0_89 = arith.constant 0 : index
    %142 = vector.load %arg7[%c0_88, %c0_89] : memref<16x1xf32, #tpu.memory_space<vmem>>, vector<16x1xf32>
    %143 = vector.broadcast %142 : vector<16x1xf32> to vector<16x512xf32>
    %144 = arith.addf %141, %143 : vector<16x512xf32>
    %cst_90 = arith.constant 0.000000e+00 : f32
    %145 = vector.broadcast %cst_90 : f32 to vector<16x512xf32>
    %146 = arith.maximumf %144, %145 : vector<16x512xf32>
    %147 = arith.truncf %146 : vector<16x512xf32> to vector<16x512xbf16>
    %c0_91 = arith.constant 0 : index
    %c128_92 = arith.constant 128 : index
    %148 = vector.load %arg11[%c0_91, %c128_92] : memref<16x768xbf16, #tpu.memory_space<vmem>>, vector<16x512xbf16>
    tpu.vector_store %arg11[%c0_91, %c128_92], %147 {strides = array<i32>} : memref<16x768xbf16, #tpu.memory_space<vmem>>, vector<16x512xbf16>,
    %c0_93 = arith.constant 0 : index
    %c127_94 = arith.constant 127 : index
    %149 = vector.load %arg11[%c0_93, %c127_94] : memref<16x768xbf16, #tpu.memory_space<vmem>>, vector<16x512xbf16>
    %cst_95 = arith.constant 0.000000e+00 : bf16
    %150 = vector.broadcast %cst_95 : bf16 to vector<16x512xbf16>
    %151 = arith.select %16, %149, %150 : vector<16x512xi1>, vector<16x512xbf16>
    %c0_96 = arith.constant 0 : index
    %c129_97 = arith.constant 129 : index
    %152 = vector.load %arg11[%c0_96, %c129_97] : memref<16x768xbf16, #tpu.memory_space<vmem>>, vector<16x512xbf16>
    %cst_98 = arith.constant 0.000000e+00 : bf16
    %153 = vector.broadcast %cst_98 : bf16 to vector<16x512xbf16>
    %154 = arith.select %18, %152, %153 : vector<16x512xi1>, vector<16x512xbf16>
    %c0_99 = arith.constant 0 : index
    %c0_100 = arith.constant 0 : index
    %c0_101 = arith.constant 0 : index
    %155 = vector.load %arg8[%c0_99, %c0_100, %c0_101] : memref<3x3x16xbf16, #tpu.memory_space<vmem>>, vector<1x3x16xbf16>
    %156 = vector.shape_cast %155 : vector<1x3x16xbf16> to vector<3x16xbf16>
    %cst_102 = arith.constant dense<0.000000e+00> : vector<3x512xf32>
    %157 = tpu.matmul %156, %151, %cst_102 {dimension_numbers = #tpu.dot_dimension_numbers<[1], [0], [0], [1], [0, 0, 1, 1], [], []>} : vector<3x16xbf16>, vector<16x512xbf16>, vector<3x512xf32> -> vector<3x512xf32>
    %c1_103 = arith.constant 1 : index
    %c0_104 = arith.constant 0 : index
    %c0_105 = arith.constant 0 : index
    %158 = vector.load %arg8[%c1_103, %c0_104, %c0_105] : memref<3x3x16xbf16, #tpu.memory_space<vmem>>, vector<1x3x16xbf16>
    %159 = vector.shape_cast %158 : vector<1x3x16xbf16> to vector<3x16xbf16>
    %cst_106 = arith.constant dense<0.000000e+00> : vector<3x512xf32>
    %160 = tpu.matmul %159, %147, %cst_106 {dimension_numbers = #tpu.dot_dimension_numbers<[1], [0], [0], [1], [0, 0, 1, 1], [], []>} : vector<3x16xbf16>, vector<16x512xbf16>, vector<3x512xf32> -> vector<3x512xf32>
    %161 = arith.addf %157, %160 : vector<3x512xf32>
    %c2_107 = arith.constant 2 : index
    %c0_108 = arith.constant 0 : index
    %c0_109 = arith.constant 0 : index
    %162 = vector.load %arg8[%c2_107, %c0_108, %c0_109] : memref<3x3x16xbf16, #tpu.memory_space<vmem>>, vector<1x3x16xbf16>
    %163 = vector.shape_cast %162 : vector<1x3x16xbf16> to vector<3x16xbf16>
    %cst_110 = arith.constant dense<0.000000e+00> : vector<3x512xf32>
    %164 = tpu.matmul %163, %154, %cst_110 {dimension_numbers = #tpu.dot_dimension_numbers<[1], [0], [0], [1], [0, 0, 1, 1], [], []>} : vector<3x16xbf16>, vector<16x512xbf16>, vector<3x512xf32> -> vector<3x512xf32>
    %165 = arith.addf %161, %164 : vector<3x512xf32>
    %166 = vector.extract_strided_slice %165 {offsets = [0, 0], sizes = [1, 512], strides = [1, 1]} : vector<3x512xf32> to vector<1x512xf32>
    %167 = vector.extract_strided_slice %165 {offsets = [1, 0], sizes = [1, 512], strides = [1, 1]} : vector<3x512xf32> to vector<1x512xf32>
    %168 = vector.extract_strided_slice %165 {offsets = [2, 0], sizes = [1, 512], strides = [1, 1]} : vector<3x512xf32> to vector<1x512xf32>
    %c0_111 = arith.constant 0 : index
    %c128_112 = arith.constant 128 : index
    %169 = vector.load %arg12[%c0_111, %c128_112] : memref<32x768xf32, #tpu.memory_space<vmem>>, vector<1x512xf32>
    tpu.vector_store %arg12[%c0_111, %c128_112], %166 {strides = array<i32>} : memref<32x768xf32, #tpu.memory_space<vmem>>, vector<1x512xf32>,
    %c1_113 = arith.constant 1 : index
    %c128_114 = arith.constant 128 : index
    %170 = vector.load %arg12[%c1_113, %c128_114] : memref<32x768xf32, #tpu.memory_space<vmem>>, vector<1x512xf32>
    tpu.vector_store %arg12[%c1_113, %c128_114], %168 {strides = array<i32>} : memref<32x768xf32, #tpu.memory_space<vmem>>, vector<1x512xf32>,
    %c0_115 = arith.constant 0 : index
    %c112_116 = arith.constant 112 : index
    %171 = vector.load %arg12[%c0_115, %c112_116] : memref<32x768xf32, #tpu.memory_space<vmem>>, vector<1x512xf32>
    %cst_117 = arith.constant 0.000000e+00 : f32
    %172 = vector.broadcast %cst_117 : f32 to vector<1x512xf32>
    %173 = arith.select %12, %171, %172 : vector<1x512xi1>, vector<1x512xf32>
    %174 = arith.addf %167, %173 : vector<1x512xf32>
    %c1_118 = arith.constant 1 : index
    %c144_119 = arith.constant 144 : index
    %175 = vector.load %arg12[%c1_118, %c144_119] : memref<32x768xf32, #tpu.memory_space<vmem>>, vector<1x512xf32>
    %cst_120 = arith.constant 0.000000e+00 : f32
    %176 = vector.broadcast %cst_120 : f32 to vector<1x512xf32>
    %177 = arith.select %14, %175, %176 : vector<1x512xi1>, vector<1x512xf32>
    %178 = arith.addf %174, %177 : vector<1x512xf32>
    %c0_121 = arith.constant 0 : index
    %c0_122 = arith.constant 0 : index
    %179 = vector.load %arg9[%c0_121, %c0_122] : memref<1x1xf32, #tpu.memory_space<vmem>>, vector<1x1xf32>
    %180 = vector.broadcast %179 : vector<1x1xf32> to vector<1x512xf32>
    %181 = arith.addf %178, %180 : vector<1x512xf32>
    %cst_123 = arith.constant 0.000000e+00 : f32
    %182 = vector.broadcast %cst_123 : f32 to vector<1x512xf32>
    %183 = arith.subf %182, %181 : vector<1x512xf32>
    %184 = math.exp %183 : vector<1x512xf32>
    %cst_124 = arith.constant 1.000000e+00 : f32
    %185 = vector.broadcast %cst_124 : f32 to vector<1x512xf32>
    %186 = arith.addf %185, %184 : vector<1x512xf32>
    %cst_125 = arith.constant 1.000000e+00 : f32
    %187 = vector.broadcast %cst_125 : f32 to vector<1x512xf32>
    %188 = arith.divf %187, %186 : vector<1x512xf32>
    %c0_126 = arith.constant 0 : index
    %c0_127 = arith.constant 0 : index
    %c0_128 = arith.constant 0 : index
    %189 = vector.load %arg10[%c0_126, %c0_127, %c0_128] : memref<1x1x512xf32, #tpu.memory_space<vmem>>, vector<1x1x512xf32>
    %190 = vector.shape_cast %189 : vector<1x1x512xf32> to vector<1x512xf32>
    %191 = vector.shape_cast %188 : vector<1x512xf32> to vector<1x1x512xf32>
    tpu.vector_store %arg10[%c0_126, %c0_127, %c0_128], %191 {strides = array<i32>} : memref<1x1x512xf32, #tpu.memory_space<vmem>>, vector<1x1x512xf32>,
    return
  }
  func.func @transform_0(%arg0: i32) -> (i32, i32, i32) {
    %c0_i32 = arith.constant 0 : i32
    %c0_i32_0 = arith.constant 0 : i32
    %c0_i32_1 = arith.constant 0 : i32
    return %arg0, %c0_i32, %c0_i32_0 : i32, i32, i32
  }
  func.func @transform_1(%arg0: i32) -> (i32, i32, i32) {
    %c0_i32 = arith.constant 0 : i32
    %c0_i32_0 = arith.constant 0 : i32
    %c0_i32_1 = arith.constant 0 : i32
    %c0_i32_2 = arith.constant 0 : i32
    return %c0_i32, %c0_i32_0, %c0_i32_1 : i32, i32, i32
  }
  func.func @transform_2(%arg0: i32) -> (i32, i32) {
    %c0_i32 = arith.constant 0 : i32
    %c0_i32_0 = arith.constant 0 : i32
    %c0_i32_1 = arith.constant 0 : i32
    return %c0_i32, %c0_i32_0 : i32, i32
  }
  func.func @transform_3(%arg0: i32) -> (i32, i32, i32) {
    %c0_i32 = arith.constant 0 : i32
    %c0_i32_0 = arith.constant 0 : i32
    %c0_i32_1 = arith.constant 0 : i32
    %c0_i32_2 = arith.constant 0 : i32
    return %c0_i32, %c0_i32_0, %c0_i32_1 : i32, i32, i32
  }
  func.func @transform_4(%arg0: i32) -> (i32, i32) {
    %c0_i32 = arith.constant 0 : i32
    %c0_i32_0 = arith.constant 0 : i32
    %c0_i32_1 = arith.constant 0 : i32
    return %c0_i32, %c0_i32_0 : i32, i32
  }
  func.func @transform_5(%arg0: i32) -> (i32, i32, i32) {
    %c0_i32 = arith.constant 0 : i32
    %c0_i32_0 = arith.constant 0 : i32
    %c0_i32_1 = arith.constant 0 : i32
    %c0_i32_2 = arith.constant 0 : i32
    return %c0_i32, %c0_i32_0, %c0_i32_1 : i32, i32, i32
  }
  func.func @transform_6(%arg0: i32) -> (i32, i32) {
    %c0_i32 = arith.constant 0 : i32
    %c0_i32_0 = arith.constant 0 : i32
    %c0_i32_1 = arith.constant 0 : i32
    return %c0_i32, %c0_i32_0 : i32, i32
  }
  func.func @transform_7(%arg0: i32) -> (i32, i32, i32) {
    %c0_i32 = arith.constant 0 : i32
    %c0_i32_0 = arith.constant 0 : i32
    %c0_i32_1 = arith.constant 0 : i32
    %c0_i32_2 = arith.constant 0 : i32
    return %c0_i32, %c0_i32_0, %c0_i32_1 : i32, i32, i32
  }
  func.func @transform_8(%arg0: i32) -> (i32, i32) {
    %c0_i32 = arith.constant 0 : i32
    %c0_i32_0 = arith.constant 0 : i32
    %c0_i32_1 = arith.constant 0 : i32
    return %c0_i32, %c0_i32_0 : i32, i32
  }
  func.func @transform_9(%arg0: i32) -> (i32, i32, i32) {
    %c0_i32 = arith.constant 0 : i32
    %c0_i32_0 = arith.constant 0 : i32
    %c0_i32_1 = arith.constant 0 : i32
    return %arg0, %c0_i32, %c0_i32_0 : i32, i32, i32
  }
}

</mosaic_0001>

<llo_original>
// kernel: fastlf_forward.1
$region0: #{fastlf_forward.1}
  #allocation0 [shape = 'u32[]', space=smem, size = 0x4, offset = 0x4, fixed_abs, tag = 'smem constant byte address 0x4 - core index']
  #allocation1 [shape = 'u32[144,128]{1,0:T(1,128)}', space=vmem, size = 0x12000, scoped, tag = 'internal scratch']
  #allocation2 [shape = 'bf16[16,768]{1,0:T(8,128)(2,1)}', space=vmem, size = 0x6000, scoped, tag = 'scratch operand']
  #allocation3 [shape = 'f32[32,768]{1,0:T(8,128)}', space=vmem, size = 0x18000, scoped, tag = 'scratch operand']
  #allocation4 [shape = 'f32[1,1]{1,0:T(1,128)S(1)}', space=vmem, size = 0x200, scoped, tag = 'scoped memory for fastlf_forward.1']
  %s0 = inlined_call_operand.vmem [shape: bf16[1,1,512], index: 0, kind: input, shape index: {}]
  %s1 = inlined_call_operand.vmem [shape: bf16[3,48,1], index: 1, kind: input, shape index: {}]
  %s2 = inlined_call_operand.vmem [shape: f32[16,1], index: 2, kind: input, shape index: {}]
  %s3 = inlined_call_operand.vmem [shape: bf16[3,48,16], index: 3, kind: input, shape index: {}]
  %s4 = inlined_call_operand.vmem [shape: f32[16,1], index: 4, kind: input, shape index: {}]
  %s5 = inlined_call_operand.vmem [shape: bf16[3,48,16], index: 5, kind: input, shape index: {}]
  %s6 = inlined_call_operand.vmem [shape: f32[16,1], index: 6, kind: input, shape index: {}]
  %s7 = inlined_call_operand.vmem [shape: bf16[3,3,16], index: 7, kind: input, shape index: {}]
  %s8 = inlined_call_operand.<no memory space> [shape: f32[1,1], index: 8, kind: input, shape index: {}]
  %s9 = inlined_call_operand.vmem [shape: f32[1,1,512], index: 9, kind: output, shape index: {}]
  %s10 = sld [smem:[#allocation0]]
  $region46: #{fastlf_forward.1} parent=0
    _
  %s12 = ssub.s32 1, %s10
  %s13 = scalar_select 0, %s12, %s10
  %v14 = vstv %s8
  %15 = vst [vmem:[#allocation4] sm:$0x1] %v14
  // Predicated region
  $region2: #{fastlf_forward.1} parent=0 // pred_check
    _
  $region3: #{fastlf_forward.1} parent=0 // pred_check_branch
    %17 = sbr.rel (0) target = $region5
  $region4: #{fastlf_forward.1} parent=0 // pred_region
    _
  $region5: #{fastlf_forward.1} parent=0 // pred_fallthru
    _
  // Predicated region
  $region6: #{fastlf_forward.1} parent=0 // pred_check
    _
  $region7: #{fastlf_forward.1} parent=0 // pred_check_branch
    %19 = sbr.rel (0) target = $region9
  $region8: #{fastlf_forward.1} parent=0 // pred_region
    _
  $region9: #{fastlf_forward.1} parent=0 // pred_fallthru
    _
  // Predicated region
  $region10: #{fastlf_forward.1} parent=0 // pred_check
    _
  $region11: #{fastlf_forward.1} parent=0 // pred_check_branch
    %21 = sbr.rel (0) target = $region13
  $region12: #{fastlf_forward.1} parent=0 // pred_region
    _
  $region13: #{fastlf_forward.1} parent=0 // pred_fallthru
    _
  // Predicated region
  $region14: #{fastlf_forward.1} parent=0 // pred_check
    _
  $region15: #{fastlf_forward.1} parent=0 // pred_check_branch
    %23 = sbr.rel (0) target = $region17
  $region16: #{fastlf_forward.1} parent=0 // pred_region
    _
  $region17: #{fastlf_forward.1} parent=0 // pred_fallthru
    _
  // Predicated region
  $region18: #{fastlf_forward.1} parent=0 // pred_check
    _
  $region19: #{fastlf_forward.1} parent=0 // pred_check_branch
    %25 = sbr.rel (0) target = $region21
  $region20: #{fastlf_forward.1} parent=0 // pred_region
    _
  $region21: #{fastlf_forward.1} parent=0 // pred_fallthru
    _
  // Predicated region
  $region22: #{fastlf_forward.1} parent=0 // pred_check
    _
  $region23: #{fastlf_forward.1} parent=0 // pred_check_branch
    %27 = sbr.rel (0) target = $region25
  $region24: #{fastlf_forward.1} parent=0 // pred_region
    _
  $region25: #{fastlf_forward.1} parent=0 // pred_fallthru
    _
  // Predicated region
  $region26: #{fastlf_forward.1} parent=0 // pred_check
    _
  $region27: #{fastlf_forward.1} parent=0 // pred_check_branch
    %29 = sbr.rel (0) target = $region29
  $region28: #{fastlf_forward.1} parent=0 // pred_region
    _
  $region29: #{fastlf_forward.1} parent=0 // pred_fallthru
    _
  // Predicated region
  $region30: #{fastlf_forward.1} parent=0 // pred_check
    _
  $region31: #{fastlf_forward.1} parent=0 // pred_check_branch
    %31 = sbr.rel (0) target = $region33
  $region32: #{fastlf_forward.1} parent=0 // pred_region
    _
  $region33: #{fastlf_forward.1} parent=0 // pred_fallthru
    _
  // Predicated region
  $region34: #{fastlf_forward.1} parent=0 // pred_check
    _
  $region35: #{fastlf_forward.1} parent=0 // pred_check_branch
    %33 = sbr.rel (0) target = $region37
  $region36: #{fastlf_forward.1} parent=0 // pred_region
    _
  $region37: #{fastlf_forward.1} parent=0 // pred_fallthru
    _
  %v37 = vlaneseq
  %v38 = vand.u32 %v37, 127
  %v39 = vadd.s32 %v38, 128
  %v40 = vadd.s32 %v38, 256
  %v41 = vadd.s32 %v38, 384
  %v42 = vand.u32 %v38, 15
  %v43 = vand.u32 %v39, 15
  %v44 = vand.u32 %v40, 15
  %v45 = vand.u32 %v41, 15
  %v46 = vand.u32 %v38, 255
  %v47 = vand.u32 %v39, 255
  %v48 = vand.u32 %v40, 255
  %v49 = vand.u32 %v41, 255
  %v50 = vshra.s32 %v46, 4
  %v51 = vshra.s32 %v47, 4
  %v52 = vshra.s32 %v48, 4
  %v53 = vshra.s32 %v49, 4
  %vm54 = vcmp.ge.s32.totalorder %v42, 1
  %vm55 = vcmp.ge.s32.totalorder %v43, 1
  %vm56 = vcmp.ge.s32.totalorder %v44, 1
  %vm57 = vcmp.ge.s32.totalorder %v45, 1
  %vm58 = vcmp.le.s32.totalorder %v42, 14
  %vm59 = vcmp.le.s32.totalorder %v43, 14
  %vm60 = vcmp.le.s32.totalorder %v44, 14
  %vm61 = vcmp.le.s32.totalorder %v45, 14
  %vm62 = vcmp.ge.s32.totalorder %v50, 1
  %vm63 = vcmp.ge.s32.totalorder %v51, 1
  %vm64 = vcmp.ge.s32.totalorder %v52, 1
  %vm65 = vcmp.ge.s32.totalorder %v53, 1
  %vm66 = vcmp.le.s32.totalorder %v50, 14
  %vm67 = vcmp.le.s32.totalorder %v51, 14
  %vm68 = vcmp.le.s32.totalorder %v52, 14
  %vm69 = vcmp.le.s32.totalorder %v53, 14
  %v70 = vsel %vm54, 1, 0
  %v71 = vsel %vm55, 1, 0
  %v72 = vsel %vm56, 1, 0
  %v73 = vsel %vm57, 1, 0
  %vm74 = vcmp.eq.s32.totalorder %v70, 1
  %vm75 = vcmp.eq.s32.totalorder %v71, 1
  %vm76 = vcmp.eq.s32.totalorder %v72, 1
  %vm77 = vcmp.eq.s32.totalorder %v73, 1
  %v78 = vsel %vm58, 1, 0
  %v79 = vsel %vm59, 1, 0
  %v80 = vsel %vm60, 1, 0
  %v81 = vsel %vm61, 1, 0
  %vm82 = vcmp.eq.s32.totalorder %v78, 1
  %vm83 = vcmp.eq.s32.totalorder %v79, 1
  %vm84 = vcmp.eq.s32.totalorder %v80, 1
  %vm85 = vcmp.eq.s32.totalorder %v81, 1
  %v86 = vsel %vm62, 1, 0
  %v87 = vsel %vm63, 1, 0
  %v88 = vsel %vm64, 1, 0
  %v89 = vsel %vm65, 1, 0
  %vm90 = vcmp.eq.s32.totalorder %v86, 1
  %vm91 = vcmp.eq.s32.totalorder %v87, 1
  %vm92 = vcmp.eq.s32.totalorder %v88, 1
  %vm93 = vcmp.eq.s32.totalorder %v89, 1
  %v94 = vsel %vm66, 1, 0
  %v95 = vsel %vm67, 1, 0
  %v96 = vsel %vm68, 1, 0
  %v97 = vsel %vm69, 1, 0
  %vm98 = vcmp.eq.s32.totalorder %v94, 1
  %vm99 = vcmp.eq.s32.totalorder %v95, 1
  %vm100 = vcmp.eq.s32.totalorder %v96, 1
  %vm101 = vcmp.eq.s32.totalorder %v97, 1
  %v102 = vld [vmem:[%s0] sm:$0xf]
  %v105 = vunpack.c.l.s4 1935823168
  %v106 = vunpack.c.0.s8 %v105
  %v107 = vlaneseq
  %v108 = vshrl.u32 %v107, 7
  %v109 = vsub.s32 %v106, %v108
  %v110 = vrot.slane %v102, %v109
  %v111 = vcombine.high %v110, %v110
  %v113 = vunpack.c.l.s4 1935823168
  %v114 = vunpack.c.0.s8 %v113
  %v115 = vlaneseq
  %v116 = vshrl.u32 %v115, 7
  %v117 = vsub.s32 %v114, %v116
  %v118 = vrot.slane %v110, %v117
  %v120 = vunpack.c.l.s4 1935823168
  %v121 = vunpack.c.0.s8 %v120
  %v122 = vlaneseq
  %v123 = vshrl.u32 %v122, 7
  %v124 = vsub.s32 %v121, %v123
  %v125 = vrot.slane %v111, %v124
  %vm128 = vcmask 1040384
  %vm129 = vsmask.f32 256
  %vm130 = vmand %vm128, %vm129
  %vm131 = vcmask 1044484
  %vm132 = vsmask.f32 4352
  %vm133 = vmand %vm131, %vm132
  %vm134 = vmor %vm133, %vm130
  %v135 = vld [vmem:[#allocation2 + $0x4] sm:$0x11]
  %v136 = vsel %vm134, %v118, %v135
  %137 = vst [vmem:[#allocation2 + $0x4] sm:$0x11] %v136
  %v138 = vld [vmem:[#allocation2 + $0xc] sm:$0x11]
  %v139 = vsel %vm134, %v125, %v138
  %140 = vst [vmem:[#allocation2 + $0xc] sm:$0x11] %v139
  %v141 = vld [vmem:[#allocation2] sm:$0x11]
  %v142 = vld [vmem:[#allocation2 + $0x8] sm:$0x11]
  %v143 = vld [vmem:[#allocation2 + $0x10] sm:$0x1]
  %vm144 = vmpackc.low %vm55, %vm54
  %vm145 = vmpackc.low %vm57, %vm56
  %v146 = vsel %vm144, 65537, 0
  %v147 = vsel %vm145, 65537, 0
  %148 = vrot.lane.b32.xlu0 %v146, 127
  %v149 = vpop.permute.xlu0 %148
  %150 = vrot.lane.b32.xlu0 %v147, 127
  %v151 = vpop.permute.xlu0 %150
  %v152 = vrot.slane %v149, 4
  %v153 = vrot.slane %v151, 4
  %vm154 = vcmask 1039360
  %v155 = vsel %vm154, %v152, %v149
  %vm156 = vcmask 1043456
  %v157 = vsel %vm156, %v152, %v153
  %v158 = vsel %vm154, %v157, %v151
  %vm159 = vcmp.ne.s16.totalorder %v155, 0
  %vm160 = vcmp.ne.s16.totalorder %v158, 0
  %vm161 = vcmp.ne.s16.totalorder %v153, 0
  %v162 = vsel %vm159, %v141, 0
  %v163 = vsel %vm160, %v142, 0
  %v164 = vsel %vm161, %v143, 0
  %v165 = vld [vmem:[#allocation2 + $0x4] sm:$0x11]
  %v166 = vld [vmem:[#allocation2 + $0xc] sm:$0x11]
  %v167 = vld [vmem:[#allocation2 + $0x14] sm:$0x1]
  %vm168 = vmpackc.low %vm59, %vm58
  %vm169 = vmpackc.low %vm61, %vm60
  %v170 = vsel %vm168, 65537, 0
  %v171 = vsel %vm169, 65537, 0
  %172 = vrot.lane.b32.xlu0 %v170, 1
  %v173 = vpop.permute.xlu0 %172
  %174 = vrot.lane.b32.xlu0 %v171, 1
  %v175 = vpop.permute.xlu0 %174
  %v176 = vrot.slane %v173, 4
  %v177 = vrot.slane %v175, 4
  %vm178 = vcmask 7168
  %v179 = vsel %vm178, %v176, %v173
  %v180 = vsel %vm156, %v176, %v177
  %v181 = vsel %vm178, %v180, %v175
  %vm182 = vcmp.ne.s16.totalorder %v179, 0
  %vm183 = vcmp.ne.s16.totalorder %v181, 0
  %vm184 = vcmp.ne.s16.totalorder %v177, 0
  %v185 = vsel %vm182, %v165, 0
  %v186 = vsel %vm183, %v166, 0
  %v187 = vsel %vm184, %v167, 0
  %v188 = vld [vmem:[%s1] sm:$0xf]
  %v189 = vld [vmem:[%s1 + $0x4] sm:$0xf]
  %v190 = vld [vmem:[%s1 + $0x8] sm:$0xf]
  %v191 = vld [vmem:[%s1 + $0xc] sm:$0xf]
  %v192 = vld [vmem:[%s1 + $0x10] sm:$0xf]
  %v193 = vld [vmem:[%s1 + $0x14] sm:$0xf]
  %v194 = vunpack.c.l.bf16 %v188
  %v195 = vunpack.c.l.bf16 %v189
  %v196 = vunpack.c.l.bf16 %v190
  %v197 = vunpack.c.l.bf16 %v191
  %v198 = vunpack.c.l.bf16 %v192
  %v199 = vunpack.c.l.bf16 %v193
  %v200 = vunpack.c.l.bf16 %v162
  %v201 = vunpack.c.h.bf16 %v162
  %v202 = vunpack.c.l.bf16 %v163
  %v203 = vunpack.c.h.bf16 %v163
  %v204 = vunpack.c.l.bf16 %v164
  %206 = vset.pattern.permute.xlu0 0
  %207 = vperm.xlu0 %206, %v194
  %v208 = vpop.permute.xlu0 %207
  %211 = vset.pattern.permute.xlu0 0
  %212 = vperm.xlu0 %211, %v195
  %v213 = vpop.permute.xlu0 %212
  %216 = vset.pattern.permute.xlu0 0
  %217 = vperm.xlu0 %216, %v196
  %v218 = vpop.permute.xlu0 %217
  %221 = vset.pattern.permute.xlu0 0
  %222 = vperm.xlu0 %221, %v197
  %v223 = vpop.permute.xlu0 %222
  %226 = vset.pattern.permute.xlu0 0
  %227 = vperm.xlu0 %226, %v198
  %v228 = vpop.permute.xlu0 %227
  %231 = vset.pattern.permute.xlu0 0
  %232 = vperm.xlu0 %231, %v199
  %v233 = vpop.permute.xlu0 %232
  %v235 = vlaneseq
  %v236 = vshrl.u32 %v235, 7
  %v237 = vsub.s32 0, %v236
  %v238 = vrot.slane %v200, %v237
  %v239 = vlaneseq
  %v240 = vshrl.u32 %v239, 7
  %v241 = vsub.s32 0, %v240
  %v242 = vrot.slane %v201, %v241
  %v243 = vlaneseq
  %v244 = vshrl.u32 %v243, 7
  %v245 = vsub.s32 0, %v244
  %v246 = vrot.slane %v202, %v245
  %v247 = vlaneseq
  %v248 = vshrl.u32 %v247, 7
  %v249 = vsub.s32 0, %v248
  %v250 = vrot.slane %v203, %v249
  %v251 = vlaneseq
  %v252 = vshrl.u32 %v251, 7
  %v253 = vsub.s32 0, %v252
  %v254 = vrot.slane %v204, %v253
  %v255 = vmul.f32 %v208, %v238
  %v256 = vmul.f32 %v208, %v242
  %v257 = vmul.f32 %v208, %v246
  %v258 = vmul.f32 %v208, %v250
  %v259 = vmul.f32 %v208, %v254
  %v260 = vmul.f32 %v213, %v238
  %v261 = vmul.f32 %v213, %v242
  %v262 = vmul.f32 %v213, %v246
  %v263 = vmul.f32 %v213, %v250
  %v264 = vmul.f32 %v213, %v254
  %v265 = vmul.f32 %v218, %v238
  %v266 = vmul.f32 %v218, %v242
  %v267 = vmul.f32 %v218, %v246
  %v268 = vmul.f32 %v218, %v250
  %v269 = vmul.f32 %v218, %v254
  %v270 = vmul.f32 %v223, %v238
  %v271 = vmul.f32 %v223, %v242
  %v272 = vmul.f32 %v223, %v246
  %v273 = vmul.f32 %v223, %v250
  %v274 = vmul.f32 %v223, %v254
  %v275 = vmul.f32 %v228, %v238
  %v276 = vmul.f32 %v228, %v242
  %v277 = vmul.f32 %v228, %v246
  %v278 = vmul.f32 %v228, %v250
  %v279 = vmul.f32 %v228, %v254
  %v280 = vmul.f32 %v233, %v238
  %v281 = vmul.f32 %v233, %v242
  %v282 = vmul.f32 %v233, %v246
  %v283 = vmul.f32 %v233, %v250
  %v284 = vmul.f32 %v233, %v254
  %s285 = scalar_lea.vmem %s1, 24
  %v286 = vld [vmem:[%s285] sm:$0xf]
  %v287 = vld [vmem:[%s285 + $0x4] sm:$0xf]
  %v288 = vld [vmem:[%s285 + $0x8] sm:$0xf]
  %v289 = vld [vmem:[%s285 + $0xc] sm:$0xf]
  %v290 = vld [vmem:[%s285 + $0x10] sm:$0xf]
  %v291 = vld [vmem:[%s285 + $0x14] sm:$0xf]
  %v292 = vunpack.c.l.bf16 %v286
  %v293 = vunpack.c.l.bf16 %v287
  %v294 = vunpack.c.l.bf16 %v288
  %v295 = vunpack.c.l.bf16 %v289
  %v296 = vunpack.c.l.bf16 %v290
  %v297 = vunpack.c.l.bf16 %v291
  %v298 = vunpack.c.l.bf16 %v102
  %300 = vset.pattern.permute.xlu0 0
  %301 = vperm.xlu0 %300, %v292
  %v302 = vpop.permute.xlu0 %301
  %305 = vset.pattern.permute.xlu0 0
  %306 = vperm.xlu0 %305, %v293
  %v307 = vpop.permute.xlu0 %306
  %310 = vset.pattern.permute.xlu0 0
  %311 = vperm.xlu0 %310, %v294
  %v312 = vpop.permute.xlu0 %311
  %315 = vset.pattern.permute.xlu0 0
  %316 = vperm.xlu0 %315, %v295
  %v317 = vpop.permute.xlu0 %316
  %320 = vset.pattern.permute.xlu0 0
  %321 = vperm.xlu0 %320, %v296
  %v322 = vpop.permute.xlu0 %321
  %325 = vset.pattern.permute.xlu0 0
  %326 = vperm.xlu0 %325, %v297
  %v327 = vpop.permute.xlu0 %326
  %v330 = vlaneseq
  %v331 = vshrl.u32 %v330, 7
  %v332 = vsub.s32 0, %v331
  %v333 = vrot.slane %v298, %v332
  %v334 = vlaneseq
  %v335 = vshrl.u32 %v334, 7
  %v336 = vsub.s32 2, %v335
  %v337 = vrot.slane %v298, %v336
  %v338 = vlaneseq
  %v339 = vshrl.u32 %v338, 7
  %v340 = vsub.s32 4, %v339
  %v341 = vrot.slane %v298, %v340
  %v342 = vlaneseq
  %v343 = vshrl.u32 %v342, 7
  %v344 = vsub.s32 6, %v343
  %v345 = vrot.slane %v298, %v344
  %v350 = vlaneseq
  %v351 = vshrl.u32 %v350, 7
  %v352 = vsub.s32 0, %v351
  %v353 = vrot.slane %v333, %v352
  %v354 = vlaneseq
  %v355 = vshrl.u32 %v354, 7
  %v356 = vsub.s32 0, %v355
  %v357 = vrot.slane %v337, %v356
  %v358 = vlaneseq
  %v359 = vshrl.u32 %v358, 7
  %v360 = vsub.s32 0, %v359
  %v361 = vrot.slane %v341, %v360
  %v362 = vlaneseq
  %v363 = vshrl.u32 %v362, 7
  %v364 = vsub.s32 0, %v363
  %v365 = vrot.slane %v345, %v364
  %v366 = vmul.f32 %v302, %v353
  %v367 = vmul.f32 %v302, %v357
  %v368 = vmul.f32 %v302, %v361
  %v369 = vmul.f32 %v302, %v365
  %v370 = vmul.f32 %v307, %v353
  %v371 = vmul.f32 %v307, %v357
  %v372 = vmul.f32 %v307, %v361
  %v373 = vmul.f32 %v307, %v365
  %v374 = vmul.f32 %v312, %v353
  %v375 = vmul.f32 %v312, %v357
  %v376 = vmul.f32 %v312, %v361
  %v377 = vmul.f32 %v312, %v365
  %v378 = vmul.f32 %v317, %v353
  %v379 = vmul.f32 %v317, %v357
  %v380 = vmul.f32 %v317, %v361
  %v381 = vmul.f32 %v317, %v365
  %v382 = vmul.f32 %v322, %v353
  %v383 = vmul.f32 %v322, %v357
  %v384 = vmul.f32 %v322, %v361
  %v385 = vmul.f32 %v322, %v365
  %v386 = vmul.f32 %v327, %v353
  %v387 = vmul.f32 %v327, %v357
  %v388 = vmul.f32 %v327, %v361
  %v389 = vmul.f32 %v327, %v365
  %414 = vrot.lane.b32.xlu0 %v366, 127
  %v415 = vpop.permute.xlu0 %414
  %416 = vrot.lane.b32.xlu0 %v367, 127
  %v417 = vpop.permute.xlu0 %416
  %418 = vrot.lane.b32.xlu0 %v368, 127
  %v419 = vpop.permute.xlu0 %418
  %420 = vrot.lane.b32.xlu0 %v369, 127
  %v421 = vpop.permute.xlu0 %420
  %422 = vrot.lane.b32.xlu0 %v370, 127
  %v423 = vpop.permute.xlu0 %422
  %424 = vrot.lane.b32.xlu0 %v371, 127
  %v425 = vpop.permute.xlu0 %424
  %426 = vrot.lane.b32.xlu0 %v372, 127
  %v427 = vpop.permute.xlu0 %426
  %428 = vrot.lane.b32.xlu0 %v373, 127
  %v429 = vpop.permute.xlu0 %428
  %430 = vrot.lane.b32.xlu0 %v374, 127
  %v431 = vpop.permute.xlu0 %430
  %432 = vrot.lane.b32.xlu0 %v375, 127
  %v433 = vpop.permute.xlu0 %432
  %434 = vrot.lane.b32.xlu0 %v376, 127
  %v435 = vpop.permute.xlu0 %434
  %436 = vrot.lane.b32.xlu0 %v377, 127
  %v437 = vpop.permute.xlu0 %436
  %438 = vrot.lane.b32.xlu0 %v378, 127
  %v439 = vpop.permute.xlu0 %438
  %440 = vrot.lane.b32.xlu0 %v379, 127
  %v441 = vpop.permute.xlu0 %440
  %442 = vrot.lane.b32.xlu0 %v380, 127
  %v443 = vpop.permute.xlu0 %442
  %444 = vrot.lane.b32.xlu0 %v381, 127
  %v445 = vpop.permute.xlu0 %444
  %446 = vrot.lane.b32.xlu0 %v382, 127
  %v447 = vpop.permute.xlu0 %446
  %448 = vrot.lane.b32.xlu0 %v383, 127
  %v449 = vpop.permute.xlu0 %448
  %450 = vrot.lane.b32.xlu0 %v384, 127
  %v451 = vpop.permute.xlu0 %450
  %452 = vrot.lane.b32.xlu0 %v385, 127
  %v453 = vpop.permute.xlu0 %452
  %454 = vrot.lane.b32.xlu0 %v386, 127
  %v455 = vpop.permute.xlu0 %454
  %456 = vrot.lane.b32.xlu0 %v387, 127
  %v457 = vpop.permute.xlu0 %456
  %458 = vrot.lane.b32.xlu0 %v388, 127
  %v459 = vpop.permute.xlu0 %458
  %460 = vrot.lane.b32.xlu0 %v389, 127
  %v461 = vpop.permute.xlu0 %460
  %vm462 = vcmask 1039360
  %v463 = vsel %vm462, %v415, %v417
  %v464 = vsel %vm462, %v417, %v419
  %v465 = vsel %vm462, %v419, %v421
  %v466 = vsel %vm462, %v423, %v425
  %v467 = vsel %vm462, %v425, %v427
  %v468 = vsel %vm462, %v427, %v429
  %v469 = vsel %vm462, %v431, %v433
  %v470 = vsel %vm462, %v433, %v435
  %v471 = vsel %vm462, %v435, %v437
  %v472 = vsel %vm462, %v439, %v441
  %v473 = vsel %vm462, %v441, %v443
  %v474 = vsel %vm462, %v443, %v445
  %v475 = vsel %vm462, %v447, %v449
  %v476 = vsel %vm462, %v449, %v451
  %v477 = vsel %vm462, %v451, %v453
  %v478 = vsel %vm462, %v455, %v457
  %v479 = vsel %vm462, %v457, %v459
  %v480 = vsel %vm462, %v459, %v461
  %v511 = vadd.f32 %v255, %v415
  %v512 = vadd.f32 %v256, %v463
  %v513 = vadd.f32 %v257, %v464
  %v514 = vadd.f32 %v258, %v465
  %v515 = vadd.f32 %v259, %v421
  %v516 = vadd.f32 %v260, %v423
  %v517 = vadd.f32 %v261, %v466
  %v518 = vadd.f32 %v262, %v467
  %v519 = vadd.f32 %v263, %v468
  %v520 = vadd.f32 %v264, %v429
  %v521 = vadd.f32 %v265, %v431
  %v522 = vadd.f32 %v266, %v469
  %v523 = vadd.f32 %v267, %v470
  %v524 = vadd.f32 %v268, %v471
  %v525 = vadd.f32 %v269, %v437
  %v526 = vadd.f32 %v270, %v439
  %v527 = vadd.f32 %v271, %v472
  %v528 = vadd.f32 %v272, %v473
  %v529 = vadd.f32 %v273, %v474
  %v530 = vadd.f32 %v274, %v445
  %v531 = vadd.f32 %v275, %v447
  %v532 = vadd.f32 %v276, %v475
  %v533 = vadd.f32 %v277, %v476
  %v534 = vadd.f32 %v278, %v477
  %v535 = vadd.f32 %v279, %v453
  %v536 = vadd.f32 %v280, %v455
  %v537 = vadd.f32 %v281, %v478
  %v538 = vadd.f32 %v282, %v479
  %v539 = vadd.f32 %v283, %v480
  %v540 = vadd.f32 %v284, %v461
  %s541 = scalar_lea.vmem %s1, 48
  %v542 = vld [vmem:[%s541] sm:$0xf]
  %v543 = vld [vmem:[%s541 + $0x4] sm:$0xf]
  %v544 = vld [vmem:[%s541 + $0x8] sm:$0xf]
  %v545 = vld [vmem:[%s541 + $0xc] sm:$0xf]
  %v546 = vld [vmem:[%s541 + $0x10] sm:$0xf]
  %v547 = vld [vmem:[%s541 + $0x14] sm:$0xf]
  %v548 = vunpack.c.l.bf16 %v542
  %v549 = vunpack.c.l.bf16 %v543
  %v550 = vunpack.c.l.bf16 %v544
  %v551 = vunpack.c.l.bf16 %v545
  %v552 = vunpack.c.l.bf16 %v546
  %v553 = vunpack.c.l.bf16 %v547
  %v554 = vunpack.c.l.bf16 %v185
  %v555 = vunpack.c.h.bf16 %v185
  %v556 = vunpack.c.l.bf16 %v186
  %v557 = vunpack.c.h.bf16 %v186
  %v558 = vunpack.c.l.bf16 %v187
  %560 = vset.pattern.permute.xlu0 0
  %561 = vperm.xlu0 %560, %v548
  %v562 = vpop.permute.xlu0 %561
  %565 = vset.pattern.permute.xlu0 0
  %566 = vperm.xlu0 %565, %v549
  %v567 = vpop.permute.xlu0 %566
  %570 = vset.pattern.permute.xlu0 0
  %571 = vperm.xlu0 %570, %v550
  %v572 = vpop.permute.xlu0 %571
  %575 = vset.pattern.permute.xlu0 0
  %576 = vperm.xlu0 %575, %v551
  %v577 = vpop.permute.xlu0 %576
  %580 = vset.pattern.permute.xlu0 0
  %581 = vperm.xlu0 %580, %v552
  %v582 = vpop.permute.xlu0 %581
  %585 = vset.pattern.permute.xlu0 0
  %586 = vperm.xlu0 %585, %v553
  %v587 = vpop.permute.xlu0 %586
  %v589 = vlaneseq
  %v590 = vshrl.u32 %v589, 7
  %v591 = vsub.s32 0, %v590
  %v592 = vrot.slane %v554, %v591
  %v593 = vlaneseq
  %v594 = vshrl.u32 %v593, 7
  %v595 = vsub.s32 0, %v594
  %v596 = vrot.slane %v555, %v595
  %v597 = vlaneseq
  %v598 = vshrl.u32 %v597, 7
  %v599 = vsub.s32 0, %v598
  %v600 = vrot.slane %v556, %v599
  %v601 = vlaneseq
  %v602 = vshrl.u32 %v601, 7
  %v603 = vsub.s32 0, %v602
  %v604 = vrot.slane %v557, %v603
  %v605 = vlaneseq
  %v606 = vshrl.u32 %v605, 7
  %v607 = vsub.s32 0, %v606
  %v608 = vrot.slane %v558, %v607
  %v609 = vmul.f32 %v562, %v592
  %v610 = vmul.f32 %v562, %v596
  %v611 = vmul.f32 %v562, %v600
  %v612 = vmul.f32 %v562, %v604
  %v613 = vmul.f32 %v562, %v608
  %v614 = vmul.f32 %v567, %v592
  %v615 = vmul.f32 %v567, %v596
  %v616 = vmul.f32 %v567, %v600
  %v617 = vmul.f32 %v567, %v604
  %v618 = vmul.f32 %v567, %v608
  %v619 = vmul.f32 %v572, %v592
  %v620 = vmul.f32 %v572, %v596
  %v621 = vmul.f32 %v572, %v600
  %v622 = vmul.f32 %v572, %v604
  %v623 = vmul.f32 %v572, %v608
  %v624 = vmul.f32 %v577, %v592
  %v625 = vmul.f32 %v577, %v596
  %v626 = vmul.f32 %v577, %v600
  %v627 = vmul.f32 %v577, %v604
  %v628 = vmul.f32 %v577, %v608
  %v629 = vmul.f32 %v582, %v592
  %v630 = vmul.f32 %v582, %v596
  %v631 = vmul.f32 %v582, %v600
  %v632 = vmul.f32 %v582, %v604
  %v633 = vmul.f32 %v582, %v608
  %v634 = vmul.f32 %v587, %v592
  %v635 = vmul.f32 %v587, %v596
  %v636 = vmul.f32 %v587, %v600
  %v637 = vmul.f32 %v587, %v604
  %v638 = vmul.f32 %v587, %v608
  %669 = vrot.lane.b32.xlu0 %v609, 126
  %v670 = vpop.permute.xlu0 %669
  %671 = vrot.lane.b32.xlu0 %v610, 126
  %v672 = vpop.permute.xlu0 %671
  %673 = vrot.lane.b32.xlu0 %v611, 126
  %v674 = vpop.permute.xlu0 %673
  %675 = vrot.lane.b32.xlu0 %v612, 126
  %v676 = vpop.permute.xlu0 %675
  %677 = vrot.lane.b32.xlu0 %v613, 126
  %v678 = vpop.permute.xlu0 %677
  %679 = vrot.lane.b32.xlu0 %v614, 126
  %v680 = vpop.permute.xlu0 %679
  %681 = vrot.lane.b32.xlu0 %v615, 126
  %v682 = vpop.permute.xlu0 %681
  %683 = vrot.lane.b32.xlu0 %v616, 126
  %v684 = vpop.permute.xlu0 %683
  %685 = vrot.lane.b32.xlu0 %v617, 126
  %v686 = vpop.permute.xlu0 %685
  %687 = vrot.lane.b32.xlu0 %v618, 126
  %v688 = vpop.permute.xlu0 %687
  %689 = vrot.lane.b32.xlu0 %v619, 126
  %v690 = vpop.permute.xlu0 %689
  %691 = vrot.lane.b32.xlu0 %v620, 126
  %v692 = vpop.permute.xlu0 %691
  %693 = vrot.lane.b32.xlu0 %v621, 126
  %v694 = vpop.permute.xlu0 %693
  %695 = vrot.lane.b32.xlu0 %v622, 126
  %v696 = vpop.permute.xlu0 %695
  %697 = vrot.lane.b32.xlu0 %v623, 126
  %v698 = vpop.permute.xlu0 %697
  %699 = vrot.lane.b32.xlu0 %v624, 126
  %v700 = vpop.permute.xlu0 %699
  %701 = vrot.lane.b32.xlu0 %v625, 126
  %v702 = vpop.permute.xlu0 %701
  %703 = vrot.lane.b32.xlu0 %v626, 126
  %v704 = vpop.permute.xlu0 %703
  %705 = vrot.lane.b32.xlu0 %v627, 126
  %v706 = vpop.permute.xlu0 %705
  %707 = vrot.lane.b32.xlu0 %v628, 126
  %v708 = vpop.permute.xlu0 %707
  %709 = vrot.lane.b32.xlu0 %v629, 126
  %v710 = vpop.permute.xlu0 %709
  %711 = vrot.lane.b32.xlu0 %v630, 126
  %v712 = vpop.permute.xlu0 %711
  %713 = vrot.lane.b32.xlu0 %v631, 126
  %v714 = vpop.permute.xlu0 %713
  %715 = vrot.lane.b32.xlu0 %v632, 126
  %v716 = vpop.permute.xlu0 %715
  %717 = vrot.lane.b32.xlu0 %v633, 126
  %v718 = vpop.permute.xlu0 %717
  %719 = vrot.lane.b32.xlu0 %v634, 126
  %v720 = vpop.permute.xlu0 %719
  %721 = vrot.lane.b32.xlu0 %v635, 126
  %v722 = vpop.permute.xlu0 %721
  %723 = vrot.lane.b32.xlu0 %v636, 126
  %v724 = vpop.permute.xlu0 %723
  %725 = vrot.lane.b32.xlu0 %v637, 126
  %v726 = vpop.permute.xlu0 %725
  %727 = vrot.lane.b32.xlu0 %v638, 126
  %v728 = vpop.permute.xlu0 %727
  %vm729 = vcmask 1031168
  %v730 = vsel %vm729, %v670, %v672
  %v731 = vsel %vm729, %v672, %v674
  %v732 = vsel %vm729, %v674, %v676
  %v733 = vsel %vm729, %v676, %v678
  %v734 = vsel %vm729, %v680, %v682
  %v735 = vsel %vm729, %v682, %v684
  %v736 = vsel %vm729, %v684, %v686
  %v737 = vsel %vm729, %v686, %v688
  %v738 = vsel %vm729, %v690, %v692
  %v739 = vsel %vm729, %v692, %v694
  %v740 = vsel %vm729, %v694, %v696
  %v741 = vsel %vm729, %v696, %v698
  %v742 = vsel %vm729, %v700, %v702
  %v743 = vsel %vm729, %v702, %v704
  %v744 = vsel %vm729, %v704, %v706
  %v745 = vsel %vm729, %v706, %v708
  %v746 = vsel %vm729, %v710, %v712
  %v747 = vsel %vm729, %v712, %v714
  %v748 = vsel %vm729, %v714, %v716
  %v749 = vsel %vm729, %v716, %v718
  %v750 = vsel %vm729, %v720, %v722
  %v751 = vsel %vm729, %v722, %v724
  %v752 = vsel %vm729, %v724, %v726
  %v753 = vsel %vm729, %v726, %v728
  %v784 = vadd.f32 %v511, %v670
  %v785 = vadd.f32 %v512, %v730
  %v786 = vadd.f32 %v513, %v731
  %v787 = vadd.f32 %v514, %v732
  %v788 = vadd.f32 %v515, %v733
  %v789 = vadd.f32 %v516, %v680
  %v790 = vadd.f32 %v517, %v734
  %v791 = vadd.f32 %v518, %v735
  %v792 = vadd.f32 %v519, %v736
  %v793 = vadd.f32 %v520, %v737
  %v794 = vadd.f32 %v521, %v690
  %v795 = vadd.f32 %v522, %v738
  %v796 = vadd.f32 %v523, %v739
  %v797 = vadd.f32 %v524, %v740
  %v798 = vadd.f32 %v525, %v741
  %v799 = vadd.f32 %v526, %v700
  %v800 = vadd.f32 %v527, %v742
  %v801 = vadd.f32 %v528, %v743
  %v802 = vadd.f32 %v529, %v744
  %v803 = vadd.f32 %v530, %v745
  %v804 = vadd.f32 %v531, %v710
  %v805 = vadd.f32 %v532, %v746
  %v806 = vadd.f32 %v533, %v747
  %v807 = vadd.f32 %v534, %v748
  %v808 = vadd.f32 %v535, %v749
  %v809 = vadd.f32 %v536, %v720
  %v810 = vadd.f32 %v537, %v750
  %v811 = vadd.f32 %v538, %v751
  %v812 = vadd.f32 %v539, %v752
  %v813 = vadd.f32 %v540, %v753
  %824 = vrot.lane.b32.xlu0 %v784, 1
  %v825 = vpop.permute.xlu0 %824
  %826 = vrot.lane.b32.xlu0 %v785, 1
  %v827 = vpop.permute.xlu0 %826
  %828 = vrot.lane.b32.xlu0 %v786, 1
  %v829 = vpop.permute.xlu0 %828
  %830 = vrot.lane.b32.xlu0 %v787, 1
  %v831 = vpop.permute.xlu0 %830
  %832 = vrot.lane.b32.xlu0 %v788, 1
  %v833 = vpop.permute.xlu0 %832
  %834 = vrot.lane.b32.xlu0 %v789, 1
  %v835 = vpop.permute.xlu0 %834
  %836 = vrot.lane.b32.xlu0 %v790, 1
  %v837 = vpop.permute.xlu0 %836
  %838 = vrot.lane.b32.xlu0 %v791, 1
  %v839 = vpop.permute.xlu0 %838
  %840 = vrot.lane.b32.xlu0 %v792, 1
  %v841 = vpop.permute.xlu0 %840
  %842 = vrot.lane.b32.xlu0 %v793, 1
  %v843 = vpop.permute.xlu0 %842
  %vm844 = vcmask 7168
  %v845 = vsel %vm844, %v825, %v827
  %v846 = vsel %vm844, %v827, %v829
  %v847 = vsel %vm844, %v829, %v831
  %v848 = vsel %vm844, %v831, %v833
  %v849 = vsel %vm844, %v835, %v837
  %v850 = vsel %vm844, %v837, %v839
  %v851 = vsel %vm844, %v839, %v841
  %v852 = vsel %vm844, %v841, %v843
  %861 = vst [vmem:[#allocation3 + $0x8] sm:$0xff] %v845
  %862 = vst [vmem:[#allocation3 + $0x10] sm:$0xff] %v846
  %863 = vst [vmem:[#allocation3 + $0x18] sm:$0xff] %v847
  %864 = vst [vmem:[#allocation3 + $0x20] sm:$0xff] %v848
  %865 = vst [vmem:[#allocation3 + $0x38] sm:$0xff] %v849
  %866 = vst [vmem:[#allocation3 + $0x40] sm:$0xff] %v850
  %867 = vst [vmem:[#allocation3 + $0x48] sm:$0xff] %v851
  %868 = vst [vmem:[#allocation3 + $0x50] sm:$0xff] %v852
  %879 = vrot.lane.b32.xlu0 %v804, 1
  %v880 = vpop.permute.xlu0 %879
  %881 = vrot.lane.b32.xlu0 %v805, 1
  %v882 = vpop.permute.xlu0 %881
  %883 = vrot.lane.b32.xlu0 %v806, 1
  %v884 = vpop.permute.xlu0 %883
  %885 = vrot.lane.b32.xlu0 %v807, 1
  %v886 = vpop.permute.xlu0 %885
  %887 = vrot.lane.b32.xlu0 %v808, 1
  %v888 = vpop.permute.xlu0 %887
  %889 = vrot.lane.b32.xlu0 %v809, 1
  %v890 = vpop.permute.xlu0 %889
  %891 = vrot.lane.b32.xlu0 %v810, 1
  %v892 = vpop.permute.xlu0 %891
  %893 = vrot.lane.b32.xlu0 %v811, 1
  %v894 = vpop.permute.xlu0 %893
  %895 = vrot.lane.b32.xlu0 %v812, 1
  %v896 = vpop.permute.xlu0 %895
  %897 = vrot.lane.b32.xlu0 %v813, 1
  %v898 = vpop.permute.xlu0 %897
  %v899 = vsel %vm844, %v880, %v882
  %v900 = vsel %vm844, %v882, %v884
  %v901 = vsel %vm844, %v884, %v886
  %v902 = vsel %vm844, %v886, %v888
  %v903 = vsel %vm844, %v890, %v892
  %v904 = vsel %vm844, %v892, %v894
  %v905 = vsel %vm844, %v894, %v896
  %v906 = vsel %vm844, %v896, %v898
  %915 = vst [vmem:[#allocation3 + $0x68] sm:$0xff] %v899
  %916 = vst [vmem:[#allocation3 + $0x70] sm:$0xff] %v900
  %917 = vst [vmem:[#allocation3 + $0x78] sm:$0xff] %v901
  %918 = vst [vmem:[#allocation3 + $0x80] sm:$0xff] %v902
  %919 = vst [vmem:[#allocation3 + $0x98] sm:$0xff] %v903
  %920 = vst [vmem:[#allocation3 + $0xa0] sm:$0xff] %v904
  %921 = vst [vmem:[#allocation3 + $0xa8] sm:$0xff] %v905
  %922 = vst [vmem:[#allocation3 + $0xb0] sm:$0xff] %v906
  %v923 = vld [vmem:[#allocation3] sm:$0xff]
  %v924 = vld [vmem:[#allocation3 + $0x8] sm:$0xff]
  %v925 = vld [vmem:[#allocation3 + $0x10] sm:$0xff]
  %v926 = vld [vmem:[#allocation3 + $0x18] sm:$0xff]
  %v927 = vld [vmem:[#allocation3 + $0x20] sm:$0xff]
  %v928 = vld [vmem:[#allocation3 + $0x30] sm:$0xff]
  %v929 = vld [vmem:[#allocation3 + $0x38] sm:$0xff]
  %v930 = vld [vmem:[#allocation3 + $0x40] sm:$0xff]
  %v931 = vld [vmem:[#allocation3 + $0x48] sm:$0xff]
  %v932 = vld [vmem:[#allocation3 + $0x50] sm:$0xff]
  %943 = vrot.lane.b32.xlu0 %v923, 16
  %v944 = vpop.permute.xlu0 %943
  %945 = vrot.lane.b32.xlu0 %v924, 16
  %v946 = vpop.permute.xlu0 %945
  %947 = vrot.lane.b32.xlu0 %v925, 16
  %v948 = vpop.permute.xlu0 %947
  %949 = vrot.lane.b32.xlu0 %v926, 16
  %v950 = vpop.permute.xlu0 %949
  %951 = vrot.lane.b32.xlu0 %v927, 16
  %v952 = vpop.permute.xlu0 %951
  %953 = vrot.lane.b32.xlu0 %v928, 16
  %v954 = vpop.permute.xlu0 %953
  %955 = vrot.lane.b32.xlu0 %v929, 16
  %v956 = vpop.permute.xlu0 %955
  %957 = vrot.lane.b32.xlu0 %v930, 16
  %v958 = vpop.permute.xlu0 %957
  %959 = vrot.lane.b32.xlu0 %v931, 16
  %v960 = vpop.permute.xlu0 %959
  %961 = vrot.lane.b32.xlu0 %v932, 16
  %v962 = vpop.permute.xlu0 %961
  %vm963 = vcmask 130048
  %v964 = vsel %vm963, %v944, %v946
  %v965 = vsel %vm963, %v946, %v948
  %v966 = vsel %vm963, %v948, %v950
  %v967 = vsel %vm963, %v950, %v952
  %v968 = vsel %vm963, %v954, %v956
  %v969 = vsel %vm963, %v956, %v958
  %v970 = vsel %vm963, %v958, %v960
  %v971 = vsel %vm963, %v960, %v962
  %v980 = vsel %vm90, %v964, 0.0
  %v981 = vsel %vm91, %v965, 0.0
  %v982 = vsel %vm92, %v966, 0.0
  %v983 = vsel %vm93, %v967, 0.0
  %v984 = vsel %vm90, %v968, 0.0
  %v985 = vsel %vm91, %v969, 0.0
  %v986 = vsel %vm92, %v970, 0.0
  %v987 = vsel %vm93, %v971, 0.0
  %996 = vrot.lane.b32.xlu0 %v980, 127
  %v997 = vpop.permute.xlu0 %996
  %998 = vrot.lane.b32.xlu0 %v981, 127
  %v999 = vpop.permute.xlu0 %998
  %1000 = vrot.lane.b32.xlu0 %v982, 127
  %v1001 = vpop.permute.xlu0 %1000
  %1002 = vrot.lane.b32.xlu0 %v983, 127
  %v1003 = vpop.permute.xlu0 %1002
  %1004 = vrot.lane.b32.xlu0 %v984, 127
  %v1005 = vpop.permute.xlu0 %1004
  %1006 = vrot.lane.b32.xlu0 %v985, 127
  %v1007 = vpop.permute.xlu0 %1006
  %1008 = vrot.lane.b32.xlu0 %v986, 127
  %v1009 = vpop.permute.xlu0 %1008
  %1010 = vrot.lane.b32.xlu0 %v987, 127
  %v1011 = vpop.permute.xlu0 %1010
  %v1012 = vsel %vm462, %v997, %v999
  %v1013 = vsel %vm462, %v999, %v1001
  %v1014 = vsel %vm462, %v1001, %v1003
  %v1015 = vsel %vm462, %v1005, %v1007
  %v1016 = vsel %vm462, %v1007, %v1009
  %v1017 = vsel %vm462, %v1009, %v1011
  %v1028 = vadd.f32 %v794, %v997
  %v1029 = vadd.f32 %v795, %v1012
  %v1030 = vadd.f32 %v796, %v1013
  %v1031 = vadd.f32 %v797, %v1014
  %v1032 = vadd.f32 %v798, %v1003
  %v1033 = vadd.f32 %v799, %v1005
  %v1034 = vadd.f32 %v800, %v1015
  %v1035 = vadd.f32 %v801, %v1016
  %v1036 = vadd.f32 %v802, %v1017
  %v1037 = vadd.f32 %v803, %v1011
  %v1038 = vld [vmem:[#allocation3 + $0x68] sm:$0xff]
  %v1039 = vld [vmem:[#allocation3 + $0x70] sm:$0xff]
  %v1040 = vld [vmem:[#allocation3 + $0x78] sm:$0xff]
  %v1041 = vld [vmem:[#allocation3 + $0x80] sm:$0xff]
  %v1042 = vld [vmem:[#allocation3 + $0x88] sm:$0xff]
  %v1043 = vld [vmem:[#allocation3 + $0x98] sm:$0xff]
  %v1044 = vld [vmem:[#allocation3 + $0xa0] sm:$0xff]
  %v1045 = vld [vmem:[#allocation3 + $0xa8] sm:$0xff]
  %v1046 = vld [vmem:[#allocation3 + $0xb0] sm:$0xff]
  %v1047 = vld [vmem:[#allocation3 + $0xb8] sm:$0xff]
  %1058 = vrot.lane.b32.xlu0 %v1038, 112
  %v1059 = vpop.permute.xlu0 %1058
  %1060 = vrot.lane.b32.xlu0 %v1039, 112
  %v1061 = vpop.permute.xlu0 %1060
  %1062 = vrot.lane.b32.xlu0 %v1040, 112
  %v1063 = vpop.permute.xlu0 %1062
  %1064 = vrot.lane.b32.xlu0 %v1041, 112
  %v1065 = vpop.permute.xlu0 %1064
  %1066 = vrot.lane.b32.xlu0 %v1042, 112
  %v1067 = vpop.permute.xlu0 %1066
  %1068 = vrot.lane.b32.xlu0 %v1043, 112
  %v1069 = vpop.permute.xlu0 %1068
  %1070 = vrot.lane.b32.xlu0 %v1044, 112
  %v1071 = vpop.permute.xlu0 %1070
  %1072 = vrot.lane.b32.xlu0 %v1045, 112
  %v1073 = vpop.permute.xlu0 %1072
  %1074 = vrot.lane.b32.xlu0 %v1046, 112
  %v1075 = vpop.permute.xlu0 %1074
  %1076 = vrot.lane.b32.xlu0 %v1047, 112
  %v1077 = vpop.permute.xlu0 %1076
  %vm1078 = vcmask 916480
  %v1079 = vsel %vm1078, %v1059, %v1061
  %v1080 = vsel %vm1078, %v1061, %v1063
  %v1081 = vsel %vm1078, %v1063, %v1065
  %v1082 = vsel %vm1078, %v1065, %v1067
  %v1083 = vsel %vm1078, %v1069, %v1071
  %v1084 = vsel %vm1078, %v1071, %v1073
  %v1085 = vsel %vm1078, %v1073, %v1075
  %v1086 = vsel %vm1078, %v1075, %v1077
  %v1095 = vsel %vm98, %v1079, 0.0
  %v1096 = vsel %vm99, %v1080, 0.0
  %v1097 = vsel %vm100, %v1081, 0.0
  %v1098 = vsel %vm101, %v1082, 0.0
  %v1099 = vsel %vm98, %v1083, 0.0
  %v1100 = vsel %vm99, %v1084, 0.0
  %v1101 = vsel %vm100, %v1085, 0.0
  %v1102 = vsel %vm101, %v1086, 0.0
  %1111 = vrot.lane.b32.xlu0 %v1095, 127
  %v1112 = vpop.permute.xlu0 %1111
  %1113 = vrot.lane.b32.xlu0 %v1096, 127
  %v1114 = vpop.permute.xlu0 %1113
  %1115 = vrot.lane.b32.xlu0 %v1097, 127
  %v1116 = vpop.permute.xlu0 %1115
  %1117 = vrot.lane.b32.xlu0 %v1098, 127
  %v1118 = vpop.permute.xlu0 %1117
  %1119 = vrot.lane.b32.xlu0 %v1099, 127
  %v1120 = vpop.permute.xlu0 %1119
  %1121 = vrot.lane.b32.xlu0 %v1100, 127
  %v1122 = vpop.permute.xlu0 %1121
  %1123 = vrot.lane.b32.xlu0 %v1101, 127
  %v1124 = vpop.permute.xlu0 %1123
  %1125 = vrot.lane.b32.xlu0 %v1102, 127
  %v1126 = vpop.permute.xlu0 %1125
  %v1127 = vsel %vm462, %v1112, %v1114
  %v1128 = vsel %vm462, %v1114, %v1116
  %v1129 = vsel %vm462, %v1116, %v1118
  %v1130 = vsel %vm462, %v1120, %v1122
  %v1131 = vsel %vm462, %v1122, %v1124
  %v1132 = vsel %vm462, %v1124, %v1126
  %v1143 = vadd.f32 %v1028, %v1112
  %v1144 = vadd.f32 %v1029, %v1127
  %v1145 = vadd.f32 %v1030, %v1128
  %v1146 = vadd.f32 %v1031, %v1129
  %v1147 = vadd.f32 %v1032, %v1118
  %v1148 = vadd.f32 %v1033, %v1120
  %v1149 = vadd.f32 %v1034, %v1130
  %v1150 = vadd.f32 %v1035, %v1131
  %v1151 = vadd.f32 %v1036, %v1132
  %v1152 = vadd.f32 %v1037, %v1126
  %v1153 = vld [vmem:[%s2] sm:$0xff]
  %v1154 = vld [vmem:[%s2 + $0x8] sm:$0xff]
  %1156 = vset.pattern.permute.xlu0 0
  %1157 = vperm.xlu0 %1156, %v1153
  %v1158 = vpop.permute.xlu0 %1157
  %1161 = vset.pattern.permute.xlu0 0
  %1162 = vperm.xlu0 %1161, %v1154
  %v1163 = vpop.permute.xlu0 %1162
  %v1165 = vadd.f32 %v1143, %v1158
  %v1166 = vadd.f32 %v1144, %v1158
  %v1167 = vadd.f32 %v1145, %v1158
  %v1168 = vadd.f32 %v1146, %v1158
  %v1169 = vadd.f32 %v1147, %v1158
  %v1170 = vadd.f32 %v1148, %v1163
  %v1171 = vadd.f32 %v1149, %v1163
  %v1172 = vadd.f32 %v1150, %v1163
  %v1173 = vadd.f32 %v1151, %v1163
  %v1174 = vadd.f32 %v1152, %v1163
  %v1175 = vmax.f32 %v1165, 0.0
  %v1176 = vmax.f32 %v1166, 0.0
  %v1177 = vmax.f32 %v1167, 0.0
  %v1178 = vmax.f32 %v1168, 0.0
  %v1179 = vmax.f32 %v1169, 0.0
  %v1180 = vmax.f32 %v1170, 0.0
  %v1181 = vmax.f32 %v1171, 0.0
  %v1182 = vmax.f32 %v1172, 0.0
  %v1183 = vmax.f32 %v1173, 0.0
  %v1184 = vmax.f32 %v1174, 0.0
  %v1185 = vpack.c.bf16 %v1180, %v1175
  %v1186 = vpack.c.bf16 %v1181, %v1176
  %v1187 = vpack.c.bf16 %v1182, %v1177
  %v1188 = vpack.c.bf16 %v1183, %v1178
  %v1189 = vpack.c.bf16 %v1184, %v1179
  %v1195 = vunpack.c.l.b16 %v1185
  %v1196 = vunpack.c.l.b16 %v1186
  %v1197 = vunpack.c.l.b16 %v1187
  %v1198 = vunpack.c.l.b16 %v1188
  %v1199 = vunpack.c.l.b16 %v1189
  %v1200 = vunpack.c.h.b16 %v1185
  %v1201 = vunpack.c.h.b16 %v1186
  %v1202 = vunpack.c.h.b16 %v1187
  %v1203 = vunpack.c.h.b16 %v1188
  %v1204 = vunpack.c.h.b16 %v1189
  %v1205 = vpack.c.b16 %v1196, %v1195
  %v1206 = vpack.c.b16 %v1198, %v1197
  %v1207 = vpack.c.b16 %v1199, %v1199
  %v1208 = vpack.c.b16 %v1201, %v1200
  %v1209 = vpack.c.b16 %v1203, %v1202
  %v1210 = vpack.c.b16 %v1204, %v1204
  %1211 = vrot.lane.b32.xlu0 %v1205, 1
  %v1212 = vpop.permute.xlu0 %1211
  %1213 = vrot.lane.b32.xlu0 %v1206, 1
  %v1214 = vpop.permute.xlu0 %1213
  %1215 = vrot.lane.b32.xlu0 %v1207, 1
  %v1216 = vpop.permute.xlu0 %1215
  %1217 = vrot.lane.b32.xlu0 %v1208, 1
  %v1218 = vpop.permute.xlu0 %1217
  %1219 = vrot.lane.b32.xlu0 %v1209, 1
  %v1220 = vpop.permute.xlu0 %1219
  %1221 = vrot.lane.b32.xlu0 %v1210, 1
  %v1222 = vpop.permute.xlu0 %1221
  %v1223 = vrot.slane %v1212, 4
  %v1224 = vrot.slane %v1214, 4
  %v1225 = vrot.slane %v1216, 4
  %v1226 = vrot.slane %v1218, 4
  %v1227 = vrot.slane %v1220, 4
  %v1228 = vrot.slane %v1222, 4
  %v1229 = vsel %vm156, %v1223, %v1224
  %v1230 = vsel %vm178, %v1212, %v1229
  %v1231 = vsel %vm156, %v1224, %v1225
  %v1232 = vsel %vm178, %v1214, %v1231
  %v1233 = vsel %vm156, %v1226, %v1227
  %v1234 = vsel %vm178, %v1218, %v1233
  %v1235 = vsel %vm156, %v1227, %v1228
  %v1236 = vsel %vm178, %v1220, %v1235
  %1241 = vst [vmem:[#allocation2 + $0x4] sm:$0xff] %v1230
  %1242 = vst [vmem:[#allocation2 + $0xc] sm:$0xff] %v1232
  %1243 = vst [vmem:[#allocation2 + $0x1c] sm:$0xff] %v1234
  %1244 = vst [vmem:[#allocation2 + $0x24] sm:$0xff] %v1236
  %v1245 = vld [vmem:[#allocation2] sm:$0xff]
  %v1246 = vld [vmem:[#allocation2 + $0x8] sm:$0xff]
  %v1247 = vld [vmem:[#allocation2 + $0x10] sm:$0xf]
  %v1248 = vld [vmem:[#allocation2 + $0x18] sm:$0xff]
  %v1249 = vld [vmem:[#allocation2 + $0x20] sm:$0xff]
  %v1250 = vld [vmem:[#allocation2 + $0x28] sm:$0xf]
  %vm1251 = vmpackc.low %vm75, %vm74
  %vm1252 = vmpackc.low %vm77, %vm76
  %v1253 = vsel %vm1251, 65537, 0
  %v1254 = vsel %vm1252, 65537, 0
  %1255 = vrot.lane.b32.xlu0 %v1253, 127
  %v1256 = vpop.permute.xlu0 %1255
  %1257 = vrot.lane.b32.xlu0 %v1254, 127
  %v1258 = vpop.permute.xlu0 %1257
  %v1259 = vrot.slane %v1256, 4
  %v1260 = vrot.slane %v1258, 4
  %v1261 = vsel %vm154, %v1259, %v1256
  %v1262 = vsel %vm156, %v1259, %v1260
  %v1263 = vsel %vm154, %v1262, %v1258
  %vm1264 = vcmp.ne.s16.totalorder %v1261, 0
  %vm1265 = vcmp.ne.s16.totalorder %v1263, 0
  %vm1266 = vcmp.ne.s16.totalorder %v1260, 0
  %v1267 = vsel %vm1264, %v1245, 0
  %v1268 = vsel %vm1265, %v1246, 0
  %v1269 = vsel %vm1266, %v1247, 0
  %v1270 = vsel %vm1264, %v1248, 0
  %v1271 = vsel %vm1265, %v1249, 0
  %v1272 = vsel %vm1266, %v1250, 0
  %v1273 = vld [vmem:[#allocation2 + $0x4] sm:$0xff]
  %v1274 = vld [vmem:[#allocation2 + $0xc] sm:$0xff]
  %v1275 = vld [vmem:[#allocation2 + $0x14] sm:$0xf]
  %v1276 = vld [vmem:[#allocation2 + $0x1c] sm:$0xff]
  %v1277 = vld [vmem:[#allocation2 + $0x24] sm:$0xff]
  %v1278 = vld [vmem:[#allocation2 + $0x2c] sm:$0xf]
  %vm1279 = vmpackc.low %vm83, %vm82
  %vm1280 = vmpackc.low %vm85, %vm84
  %v1281 = vsel %vm1279, 65537, 0
  %v1282 = vsel %vm1280, 65537, 0
  %1283 = vrot.lane.b32.xlu0 %v1281, 1
  %v1284 = vpop.permute.xlu0 %1283
  %1285 = vrot.lane.b32.xlu0 %v1282, 1
  %v1286 = vpop.permute.xlu0 %1285
  %v1287 = vrot.slane %v1284, 4
  %v1288 = vrot.slane %v1286, 4
  %v1289 = vsel %vm178, %v1287, %v1284
  %v1290 = vsel %vm156, %v1287, %v1288
  %v1291 = vsel %vm178, %v1290, %v1286
  %vm1292 = vcmp.ne.s16.totalorder %v1289, 0
  %vm1293 = vcmp.ne.s16.totalorder %v1291, 0
  %vm1294 = vcmp.ne.s16.totalorder %v1288, 0
  %v1295 = vsel %vm1292, %v1273, 0
  %v1296 = vsel %vm1293, %v1274, 0
  %v1297 = vsel %vm1294, %v1275, 0
  %v1298 = vsel %vm1292, %v1276, 0
  %v1299 = vsel %vm1293, %v1277, 0
  %v1300 = vsel %vm1294, %v1278, 0
  %v1301 = vld [vmem:[%s3] sm:$0xf]
  %v1302 = vld [vmem:[%s3 + $0x4] sm:$0xf]
  %v1303 = vld [vmem:[%s3 + $0x8] sm:$0xf]
  %v1304 = vld [vmem:[%s3 + $0xc] sm:$0xf]
  %v1305 = vld [vmem:[%s3 + $0x10] sm:$0xf]
  %v1306 = vld [vmem:[%s3 + $0x14] sm:$0xf]
  %s1307 = scalar_lea.vmem %s3, 24
  %v1308 = vld [vmem:[%s1307] sm:$0xf]
  %v1309 = vld [vmem:[%s1307 + $0x4] sm:$0xf]
  %v1310 = vld [vmem:[%s1307 + $0x8] sm:$0xf]
  %v1311 = vld [vmem:[%s1307 + $0xc] sm:$0xf]
  %v1312 = vld [vmem:[%s1307 + $0x10] sm:$0xf]
  %v1313 = vld [vmem:[%s1307 + $0x14] sm:$0xf]
  %v1320 = vunpack.c.l.b16 %v1308
  %v1321 = vunpack.c.l.b16 %v1309
  %v1322 = vunpack.c.l.b16 %v1310
  %v1323 = vunpack.c.l.b16 %v1311
  %v1324 = vunpack.c.l.b16 %v1312
  %v1325 = vunpack.c.l.b16 %v1313
  %v1326 = vpack.c.b16 %v1321, %v1320
  %v1327 = vpack.c.b16 %v1323, %v1322
  %v1328 = vpack.c.b16 %v1325, %v1324
  %1329 = vrot.lane.b32.xlu0 %v1185, 1
  %v1330 = vpop.permute.xlu0 %1329
  %1331 = vrot.lane.b32.xlu0 %v1186, 1
  %v1332 = vpop.permute.xlu0 %1331
  %1333 = vrot.lane.b32.xlu0 %v1187, 1
  %v1334 = vpop.permute.xlu0 %1333
  %1335 = vrot.lane.b32.xlu0 %v1188, 1
  %v1336 = vpop.permute.xlu0 %1335
  %1337 = vrot.lane.b32.xlu0 %v1189, 1
  %v1338 = vpop.permute.xlu0 %1337
  %v1339 = vsel %vm178, %v1330, %v1332
  %v1340 = vsel %vm178, %v1332, %v1334
  %v1341 = vsel %vm178, %v1334, %v1336
  %v1342 = vsel %vm178, %v1336, %v1338
  %v1348 = vsel %vm963, %v1326, 0
  %v1351 = vsel %vm963, %v1327, 0
  %v1354 = vsel %vm963, %v1328, 0
  %1356 = vmatprep.subr.bf16.mxu0 0
  %1357 = vmatpush1.bf16.msra.mxu0 0
  %1358 = vmatprep.subr.bf16.mxu0 0
  %1359 = vmatpush1.bf16.msra.mxu0 0
  %1360 = vmatprep.subr.bf16.mxu0 0
  %1361 = vmatpush1.bf16.msra.mxu0 0
  %1362 = vmatprep.subr.bf16.mxu0 0
  %1363 = vmatpush1.bf16.msra.mxu0 0
  %1364 = vmatprep.subr.bf16.mxu0 0
  %1365 = vmatpush1.bf16.msra.mxu0 0
  %1366 = vmatprep.subr.bf16.mxu0 0
  %1367 = vmatpush1.bf16.msra.mxu0 0
  %1368 = vmatprep.subr.bf16.mxu0 0
  %1369 = vmatpush1.bf16.msra.mxu0 0
  %1370 = vmatprep.subr.bf16.mxu0 %v1340
  %1371 = vmatpush1.bf16.msra.mxu0 %v1339
  %1372 = vmatprep.subr.bf16.mxu0 0
  %1373 = vmatpush2.bf16.msra.mxu0 0
  %1374 = vmatprep.subr.bf16.mxu0 0
  %1375 = vmatpush2.bf16.msra.mxu0 0
  %1376 = vmatprep.subr.bf16.mxu0 0
  %1377 = vmatpush2.bf16.msra.mxu0 0
  %1378 = vmatprep.subr.bf16.mxu0 0
  %1379 = vmatpush2.bf16.msra.mxu0 0
  %1380 = vmatprep.subr.bf16.mxu0 0
  %1381 = vmatpush2.bf16.msra.mxu0 0
  %1382 = vmatprep.subr.bf16.mxu0 0
  %1383 = vmatpush2.bf16.msra.mxu0 0
  %1384 = vmatprep.subr.bf16.mxu0 0
  %1385 = vmatpush2.bf16.msra.mxu0 0
  %1386 = vmatprep.subr.bf16.mxu0 0
  %1387 = vmatpush2.bf16.msra.mxu0 0
  %1388 = vmatprep.mubr.bf16.mxu0 0
  %1389 = vmatmul.mubr.bf16.gmra.mxu0 %v1348
  %v1390 = vpop.f32.mrf.mxu0
  %v1391 = vadd.f32 0.0, %v1390
  %v1392 = vpop.f32.mrf.mxu0
  %v1393 = vadd.f32 0.0, %v1392
  %v1394 = vpop.f32.mrf.mxu0
  %v1395 = vadd.f32 0.0, %v1394
  %v1396 = vpop.f32.mrf.mxu0
  %v1397 = vadd.f32 0.0, %v1396
  %1398 = vmatprep.mubr.bf16.mxu0 0
  %1399 = vmatmul.mubr.bf16.gmra.mxu0 %v1351
  %v1400 = vpop.f32.mrf.mxu0
  %v1401 = vadd.f32 0.0, %v1400
  %v1402 = vpop.f32.mrf.mxu0
  %v1403 = vadd.f32 0.0, %v1402
  %v1404 = vpop.f32.mrf.mxu0
  %v1405 = vadd.f32 0.0, %v1404
  %v1406 = vpop.f32.mrf.mxu0
  %v1407 = vadd.f32 0.0, %v1406
  %1408 = vmatprep.mubr.bf16.mxu0 0
  %1409 = vmatmul.mubr.bf16.gmra.mxu0 %v1354
  %v1410 = vpop.f32.mrf.mxu0
  %v1411 = vadd.f32 0.0, %v1410
  %v1412 = vpop.f32.mrf.mxu0
  %v1413 = vadd.f32 0.0, %v1412
  %v1414 = vpop.f32.mrf.mxu0
  %v1415 = vadd.f32 0.0, %v1414
  %v1416 = vpop.f32.mrf.mxu0
  %v1417 = vadd.f32 0.0, %v1416
  %1418 = vdwg.mxu0
  %1419 = vmatprep.subr.bf16.mxu0 0
  %1420 = vmatpush1.bf16.msra.mxu0 0
  %1421 = vmatprep.subr.bf16.mxu0 0
  %1422 = vmatpush1.bf16.msra.mxu0 0
  %1423 = vmatprep.subr.bf16.mxu0 0
  %1424 = vmatpush1.bf16.msra.mxu0 0
  %1425 = vmatprep.subr.bf16.mxu0 0
  %1426 = vmatpush1.bf16.msra.mxu0 0
  %1427 = vmatprep.subr.bf16.mxu0 0
  %1428 = vmatpush1.bf16.msra.mxu0 0
  %1429 = vmatprep.subr.bf16.mxu0 0
  %1430 = vmatpush1.bf16.msra.mxu0 0
  %1431 = vmatprep.subr.bf16.mxu0 0
  %1432 = vmatpush1.bf16.msra.mxu0 0
  %1433 = vmatprep.subr.bf16.mxu0 %v1342
  %1434 = vmatpush1.bf16.msra.mxu0 %v1341
  %1435 = vmatprep.subr.bf16.mxu0 0
  %1436 = vmatpush2.bf16.msra.mxu0 0
  %1437 = vmatprep.subr.bf16.mxu0 0
  %1438 = vmatpush2.bf16.msra.mxu0 0
  %1439 = vmatprep.subr.bf16.mxu0 0
  %1440 = vmatpush2.bf16.msra.mxu0 0
  %1441 = vmatprep.subr.bf16.mxu0 0
  %1442 = vmatpush2.bf16.msra.mxu0 0
  %1443 = vmatprep.subr.bf16.mxu0 0
  %1444 = vmatpush2.bf16.msra.mxu0 0
  %1445 = vmatprep.subr.bf16.mxu0 0
  %1446 = vmatpush2.bf16.msra.mxu0 0
  %1447 = vmatprep.subr.bf16.mxu0 0
  %1448 = vmatpush2.bf16.msra.mxu0 0
  %1449 = vmatprep.subr.bf16.mxu0 0
  %1450 = vmatpush2.bf16.msra.mxu0 0
  %1451 = vmatprep.mubr.bf16.mxu0 0
  %1452 = vmatmul.mubr.bf16.gmra.mxu0 %v1348
  %v1453 = vpop.f32.mrf.mxu0
  %v1454 = vadd.f32 0.0, %v1453
  %v1455 = vpop.f32.mrf.mxu0
  %v1456 = vadd.f32 0.0, %v1455
  %v1457 = vpop.f32.mrf.mxu0
  %v1458 = vadd.f32 0.0, %v1457
  %v1459 = vpop.f32.mrf.mxu0
  %v1460 = vadd.f32 0.0, %v1459
  %1461 = vmatprep.mubr.bf16.mxu0 0
  %1462 = vmatmul.mubr.bf16.gmra.mxu0 %v1351
  %v1463 = vpop.f32.mrf.mxu0
  %v1464 = vadd.f32 0.0, %v1463
  %v1465 = vpop.f32.mrf.mxu0
  %v1466 = vadd.f32 0.0, %v1465
  %v1467 = vpop.f32.mrf.mxu0
  %v1468 = vadd.f32 0.0, %v1467
  %v1469 = vpop.f32.mrf.mxu0
  %v1470 = vadd.f32 0.0, %v1469
  %1471 = vmatprep.mubr.bf16.mxu0 0
  %1472 = vmatmul.mubr.bf16.gmra.mxu0 %v1354
  %v1473 = vpop.f32.mrf.mxu0
  %v1474 = vadd.f32 0.0, %v1473
  %v1475 = vpop.f32.mrf.mxu0
  %v1476 = vadd.f32 0.0, %v1475
  %v1477 = vpop.f32.mrf.mxu0
  %v1478 = vadd.f32 0.0, %v1477
  %v1479 = vpop.f32.mrf.mxu0
  %v1480 = vadd.f32 0.0, %v1479
  %1481 = vdwg.mxu0
  %v1488 = vunpack.c.l.b16 %v1301
  %v1489 = vunpack.c.l.b16 %v1302
  %v1490 = vunpack.c.l.b16 %v1303
  %v1491 = vunpack.c.l.b16 %v1304
  %v1492 = vunpack.c.l.b16 %v1305
  %v1493 = vunpack.c.l.b16 %v1306
  %v1494 = vpack.c.b16 %v1489, %v1488
  %v1495 = vpack.c.b16 %v1491, %v1490
  %v1496 = vpack.c.b16 %v1493, %v1492
  %v1503 = vunpack.c.l.b16 %v1267
  %v1504 = vunpack.c.h.b16 %v1267
  %v1505 = vunpack.c.l.b16 %v1268
  %v1506 = vunpack.c.h.b16 %v1268
  %v1507 = vunpack.c.l.b16 %v1269
  %v1508 = vunpack.c.l.b16 %v1270
  %v1509 = vunpack.c.h.b16 %v1270
  %v1510 = vunpack.c.l.b16 %v1271
  %v1511 = vunpack.c.h.b16 %v1271
  %v1512 = vunpack.c.l.b16 %v1272
  %v1513 = vpack.c.b16 %v1508, %v1503
  %v1514 = vpack.c.b16 %v1509, %v1504
  %v1515 = vpack.c.b16 %v1510, %v1505
  %v1516 = vpack.c.b16 %v1511, %v1506
  %v1517 = vpack.c.b16 %v1512, %v1507
  %1518 = vrot.lane.b32.xlu0 %v1513, 1
  %v1519 = vpop.permute.xlu0 %1518
  %1520 = vrot.lane.b32.xlu0 %v1514, 1
  %v1521 = vpop.permute.xlu0 %1520
  %1522 = vrot.lane.b32.xlu0 %v1515, 1
  %v1523 = vpop.permute.xlu0 %1522
  %1524 = vrot.lane.b32.xlu0 %v1516, 1
  %v1525 = vpop.permute.xlu0 %1524
  %1526 = vrot.lane.b32.xlu0 %v1517, 1
  %v1527 = vpop.permute.xlu0 %1526
  %v1528 = vsel %vm178, %v1519, %v1521
  %v1529 = vsel %vm178, %v1521, %v1523
  %v1530 = vsel %vm178, %v1523, %v1525
  %v1531 = vsel %vm178, %v1525, %v1527
  %v1537 = vsel %vm963, %v1494, 0
  %v1540 = vsel %vm963, %v1495, 0
  %v1543 = vsel %vm963, %v1496, 0
  %1545 = vmatprep.subr.bf16.mxu0 0
  %1546 = vmatpush1.bf16.msra.mxu0 0
  %1547 = vmatprep.subr.bf16.mxu0 0
  %1548 = vmatpush1.bf16.msra.mxu0 0
  %1549 = vmatprep.subr.bf16.mxu0 0
  %1550 = vmatpush1.bf16.msra.mxu0 0
  %1551 = vmatprep.subr.bf16.mxu0 0
  %1552 = vmatpush1.bf16.msra.mxu0 0
  %1553 = vmatprep.subr.bf16.mxu0 0
  %1554 = vmatpush1.bf16.msra.mxu0 0
  %1555 = vmatprep.subr.bf16.mxu0 0
  %1556 = vmatpush1.bf16.msra.mxu0 0
  %1557 = vmatprep.subr.bf16.mxu0 0
  %1558 = vmatpush1.bf16.msra.mxu0 0
  %1559 = vmatprep.subr.bf16.mxu0 %v1529
  %1560 = vmatpush1.bf16.msra.mxu0 %v1528
  %1561 = vmatprep.subr.bf16.mxu0 0
  %1562 = vmatpush2.bf16.msra.mxu0 0
  %1563 = vmatprep.subr.bf16.mxu0 0
  %1564 = vmatpush2.bf16.msra.mxu0 0
  %1565 = vmatprep.subr.bf16.mxu0 0
  %1566 = vmatpush2.bf16.msra.mxu0 0
  %1567 = vmatprep.subr.bf16.mxu0 0
  %1568 = vmatpush2.bf16.msra.mxu0 0
  %1569 = vmatprep.subr.bf16.mxu0 0
  %1570 = vmatpush2.bf16.msra.mxu0 0
  %1571 = vmatprep.subr.bf16.mxu0 0
  %1572 = vmatpush2.bf16.msra.mxu0 0
  %1573 = vmatprep.subr.bf16.mxu0 0
  %1574 = vmatpush2.bf16.msra.mxu0 0
  %1575 = vmatprep.subr.bf16.mxu0 0
  %1576 = vmatpush2.bf16.msra.mxu0 0
  %1577 = vmatprep.mubr.bf16.mxu0 0
  %1578 = vmatmul.mubr.bf16.gmra.mxu0 %v1537
  %v1579 = vpop.f32.mrf.mxu0
  %v1580 = vadd.f32 %v1391, %v1579
  %v1581 = vpop.f32.mrf.mxu0
  %v1582 = vadd.f32 %v1393, %v1581
  %v1583 = vpop.f32.mrf.mxu0
  %v1584 = vadd.f32 %v1395, %v1583
  %v1585 = vpop.f32.mrf.mxu0
  %v1586 = vadd.f32 %v1397, %v1585
  %1587 = vmatprep.mubr.bf16.mxu0 0
  %1588 = vmatmul.mubr.bf16.gmra.mxu0 %v1540
  %v1589 = vpop.f32.mrf.mxu0
  %v1590 = vadd.f32 %v1401, %v1589
  %v1591 = vpop.f32.mrf.mxu0
  %v1592 = vadd.f32 %v1403, %v1591
  %v1593 = vpop.f32.mrf.mxu0
  %v1594 = vadd.f32 %v1405, %v1593
  %v1595 = vpop.f32.mrf.mxu0
  %v1596 = vadd.f32 %v1407, %v1595
  %1597 = vmatprep.mubr.bf16.mxu0 0
  %1598 = vmatmul.mubr.bf16.gmra.mxu0 %v1543
  %v1599 = vpop.f32.mrf.mxu0
  %v1600 = vadd.f32 %v1411, %v1599
  %v1601 = vpop.f32.mrf.mxu0
  %v1602 = vadd.f32 %v1413, %v1601
  %v1603 = vpop.f32.mrf.mxu0
  %v1604 = vadd.f32 %v1415, %v1603
  %v1605 = vpop.f32.mrf.mxu0
  %v1606 = vadd.f32 %v1417, %v1605
  %1607 = vdwg.mxu0
  %1608 = vmatprep.subr.bf16.mxu0 0
  %1609 = vmatpush1.bf16.msra.mxu0 0
  %1610 = vmatprep.subr.bf16.mxu0 0
  %1611 = vmatpush1.bf16.msra.mxu0 0
  %1612 = vmatprep.subr.bf16.mxu0 0
  %1613 = vmatpush1.bf16.msra.mxu0 0
  %1614 = vmatprep.subr.bf16.mxu0 0
  %1615 = vmatpush1.bf16.msra.mxu0 0
  %1616 = vmatprep.subr.bf16.mxu0 0
  %1617 = vmatpush1.bf16.msra.mxu0 0
  %1618 = vmatprep.subr.bf16.mxu0 0
  %1619 = vmatpush1.bf16.msra.mxu0 0
  %1620 = vmatprep.subr.bf16.mxu0 0
  %1621 = vmatpush1.bf16.msra.mxu0 0
  %1622 = vmatprep.subr.bf16.mxu0 %v1531
  %1623 = vmatpush1.bf16.msra.mxu0 %v1530
  %1624 = vmatprep.subr.bf16.mxu0 0
  %1625 = vmatpush2.bf16.msra.mxu0 0
  %1626 = vmatprep.subr.bf16.mxu0 0
  %1627 = vmatpush2.bf16.msra.mxu0 0
  %1628 = vmatprep.subr.bf16.mxu0 0
  %1629 = vmatpush2.bf16.msra.mxu0 0
  %1630 = vmatprep.subr.bf16.mxu0 0
  %1631 = vmatpush2.bf16.msra.mxu0 0
  %1632 = vmatprep.subr.bf16.mxu0 0
  %1633 = vmatpush2.bf16.msra.mxu0 0
  %1634 = vmatprep.subr.bf16.mxu0 0
  %1635 = vmatpush2.bf16.msra.mxu0 0
  %1636 = vmatprep.subr.bf16.mxu0 0
  %1637 = vmatpush2.bf16.msra.mxu0 0
  %1638 = vmatprep.subr.bf16.mxu0 0
  %1639 = vmatpush2.bf16.msra.mxu0 0
  %1640 = vmatprep.mubr.bf16.mxu0 0
  %1641 = vmatmul.mubr.bf16.gmra.mxu0 %v1537
  %v1642 = vpop.f32.mrf.mxu0
  %v1643 = vadd.f32 %v1454, %v1642
  %v1644 = vpop.f32.mrf.mxu0
  %v1645 = vadd.f32 %v1456, %v1644
  %v1646 = vpop.f32.mrf.mxu0
  %v1647 = vadd.f32 %v1458, %v1646
  %v1648 = vpop.f32.mrf.mxu0
  %v1649 = vadd.f32 %v1460, %v1648
  %1650 = vmatprep.mubr.bf16.mxu0 0
  %1651 = vmatmul.mubr.bf16.gmra.mxu0 %v1540
  %v1652 = vpop.f32.mrf.mxu0
  %v1653 = vadd.f32 %v1464, %v1652
  %v1654 = vpop.f32.mrf.mxu0
  %v1655 = vadd.f32 %v1466, %v1654
  %v1656 = vpop.f32.mrf.mxu0
  %v1657 = vadd.f32 %v1468, %v1656
  %v1658 = vpop.f32.mrf.mxu0
  %v1659 = vadd.f32 %v1470, %v1658
  %1660 = vmatprep.mubr.bf16.mxu0 0
  %1661 = vmatmul.mubr.bf16.gmra.mxu0 %v1543
  %v1662 = vpop.f32.mrf.mxu0
  %v1663 = vadd.f32 %v1474, %v1662
  %v1664 = vpop.f32.mrf.mxu0
  %v1665 = vadd.f32 %v1476, %v1664
  %v1666 = vpop.f32.mrf.mxu0
  %v1667 = vadd.f32 %v1478, %v1666
  %v1668 = vpop.f32.mrf.mxu0
  %v1669 = vadd.f32 %v1480, %v1668
  %1670 = vdwg.mxu0
  %s1671 = scalar_lea.vmem %s3, 48
  %v1672 = vld [vmem:[%s1671] sm:$0xf]
  %v1673 = vld [vmem:[%s1671 + $0x4] sm:$0xf]
  %v1674 = vld [vmem:[%s1671 + $0x8] sm:$0xf]
  %v1675 = vld [vmem:[%s1671 + $0xc] sm:$0xf]
  %v1676 = vld [vmem:[%s1671 + $0x10] sm:$0xf]
  %v1677 = vld [vmem:[%s1671 + $0x14] sm:$0xf]
  %v1684 = vunpack.c.l.b16 %v1672
  %v1685 = vunpack.c.l.b16 %v1673
  %v1686 = vunpack.c.l.b16 %v1674
  %v1687 = vunpack.c.l.b16 %v1675
  %v1688 = vunpack.c.l.b16 %v1676
  %v1689 = vunpack.c.l.b16 %v1677
  %v1690 = vpack.c.b16 %v1685, %v1684
  %v1691 = vpack.c.b16 %v1687, %v1686
  %v1692 = vpack.c.b16 %v1689, %v1688
  %v1699 = vunpack.c.l.b16 %v1295
  %v1700 = vunpack.c.h.b16 %v1295
  %v1701 = vunpack.c.l.b16 %v1296
  %v1702 = vunpack.c.h.b16 %v1296
  %v1703 = vunpack.c.l.b16 %v1297
  %v1704 = vunpack.c.l.b16 %v1298
  %v1705 = vunpack.c.h.b16 %v1298
  %v1706 = vunpack.c.l.b16 %v1299
  %v1707 = vunpack.c.h.b16 %v1299
  %v1708 = vunpack.c.l.b16 %v1300
  %v1709 = vpack.c.b16 %v1704, %v1699
  %v1710 = vpack.c.b16 %v1705, %v1700
  %v1711 = vpack.c.b16 %v1706, %v1701
  %v1712 = vpack.c.b16 %v1707, %v1702
  %v1713 = vpack.c.b16 %v1708, %v1703
  %1714 = vrot.lane.b32.xlu0 %v1709, 127
  %v1715 = vpop.permute.xlu0 %1714
  %1716 = vrot.lane.b32.xlu0 %v1710, 127
  %v1717 = vpop.permute.xlu0 %1716
  %1718 = vrot.lane.b32.xlu0 %v1711, 127
  %v1719 = vpop.permute.xlu0 %1718
  %1720 = vrot.lane.b32.xlu0 %v1712, 127
  %v1721 = vpop.permute.xlu0 %1720
  %1722 = vrot.lane.b32.xlu0 %v1713, 127
  %v1723 = vpop.permute.xlu0 %1722
  %v1724 = vsel %vm154, %v1715, %v1717
  %v1725 = vsel %vm154, %v1717, %v1719
  %v1726 = vsel %vm154, %v1719, %v1721
  %v1727 = vsel %vm154, %v1721, %v1723
  %v1733 = vsel %vm963, %v1690, 0
  %v1736 = vsel %vm963, %v1691, 0
  %v1739 = vsel %vm963, %v1692, 0
  %1741 = vmatprep.subr.bf16.mxu0 0
  %1742 = vmatpush1.bf16.msra.mxu0 0
  %1743 = vmatprep.subr.bf16.mxu0 0
  %1744 = vmatpush1.bf16.msra.mxu0 0
  %1745 = vmatprep.subr.bf16.mxu0 0
  %1746 = vmatpush1.bf16.msra.mxu0 0
  %1747 = vmatprep.subr.bf16.mxu0 0
  %1748 = vmatpush1.bf16.msra.mxu0 0
  %1749 = vmatprep.subr.bf16.mxu0 0
  %1750 = vmatpush1.bf16.msra.mxu0 0
  %1751 = vmatprep.subr.bf16.mxu0 0
  %1752 = vmatpush1.bf16.msra.mxu0 0
  %1753 = vmatprep.subr.bf16.mxu0 0
  %1754 = vmatpush1.bf16.msra.mxu0 0
  %1755 = vmatprep.subr.bf16.mxu0 %v1725
  %1756 = vmatpush1.bf16.msra.mxu0 %v1724
  %1757 = vmatprep.subr.bf16.mxu0 0
  %1758 = vmatpush2.bf16.msra.mxu0 0
  %1759 = vmatprep.subr.bf16.mxu0 0
  %1760 = vmatpush2.bf16.msra.mxu0 0
  %1761 = vmatprep.subr.bf16.mxu0 0
  %1762 = vmatpush2.bf16.msra.mxu0 0
  %1763 = vmatprep.subr.bf16.mxu0 0
  %1764 = vmatpush2.bf16.msra.mxu0 0
  %1765 = vmatprep.subr.bf16.mxu0 0
  %1766 = vmatpush2.bf16.msra.mxu0 0
  %1767 = vmatprep.subr.bf16.mxu0 0
  %1768 = vmatpush2.bf16.msra.mxu0 0
  %1769 = vmatprep.subr.bf16.mxu0 0
  %1770 = vmatpush2.bf16.msra.mxu0 0
  %1771 = vmatprep.subr.bf16.mxu0 0
  %1772 = vmatpush2.bf16.msra.mxu0 0
  %1773 = vmatprep.mubr.bf16.mxu0 0
  %1774 = vmatmul.mubr.bf16.gmra.mxu0 %v1733
  %v1775 = vpop.f32.mrf.mxu0
  %v1776 = vadd.f32 0.0, %v1775
  %v1777 = vpop.f32.mrf.mxu0
  %v1778 = vadd.f32 0.0, %v1777
  %v1779 = vpop.f32.mrf.mxu0
  %v1780 = vadd.f32 0.0, %v1779
  %v1781 = vpop.f32.mrf.mxu0
  %v1782 = vadd.f32 0.0, %v1781
  %1783 = vmatprep.mubr.bf16.mxu0 0
  %1784 = vmatmul.mubr.bf16.gmra.mxu0 %v1736
  %v1785 = vpop.f32.mrf.mxu0
  %v1786 = vadd.f32 0.0, %v1785
  %v1787 = vpop.f32.mrf.mxu0
  %v1788 = vadd.f32 0.0, %v1787
  %v1789 = vpop.f32.mrf.mxu0
  %v1790 = vadd.f32 0.0, %v1789
  %v1791 = vpop.f32.mrf.mxu0
  %v1792 = vadd.f32 0.0, %v1791
  %1793 = vmatprep.mubr.bf16.mxu0 0
  %1794 = vmatmul.mubr.bf16.gmra.mxu0 %v1739
  %v1795 = vpop.f32.mrf.mxu0
  %v1796 = vadd.f32 0.0, %v1795
  %v1797 = vpop.f32.mrf.mxu0
  %v1798 = vadd.f32 0.0, %v1797
  %v1799 = vpop.f32.mrf.mxu0
  %v1800 = vadd.f32 0.0, %v1799
  %v1801 = vpop.f32.mrf.mxu0
  %v1802 = vadd.f32 0.0, %v1801
  %1803 = vdwg.mxu0
  %1804 = vmatprep.subr.bf16.mxu0 0
  %1805 = vmatpush1.bf16.msra.mxu0 0
  %1806 = vmatprep.subr.bf16.mxu0 0
  %1807 = vmatpush1.bf16.msra.mxu0 0
  %1808 = vmatprep.subr.bf16.mxu0 0
  %1809 = vmatpush1.bf16.msra.mxu0 0
  %1810 = vmatprep.subr.bf16.mxu0 0
  %1811 = vmatpush1.bf16.msra.mxu0 0
  %1812 = vmatprep.subr.bf16.mxu0 0
  %1813 = vmatpush1.bf16.msra.mxu0 0
  %1814 = vmatprep.subr.bf16.mxu0 0
  %1815 = vmatpush1.bf16.msra.mxu0 0
  %1816 = vmatprep.subr.bf16.mxu0 0
  %1817 = vmatpush1.bf16.msra.mxu0 0
  %1818 = vmatprep.subr.bf16.mxu0 %v1727
  %1819 = vmatpush1.bf16.msra.mxu0 %v1726
  %1820 = vmatprep.subr.bf16.mxu0 0
  %1821 = vmatpush2.bf16.msra.mxu0 0
  %1822 = vmatprep.subr.bf16.mxu0 0
  %1823 = vmatpush2.bf16.msra.mxu0 0
  %1824 = vmatprep.subr.bf16.mxu0 0
  %1825 = vmatpush2.bf16.msra.mxu0 0
  %1826 = vmatprep.subr.bf16.mxu0 0
  %1827 = vmatpush2.bf16.msra.mxu0 0
  %1828 = vmatprep.subr.bf16.mxu0 0
  %1829 = vmatpush2.bf16.msra.mxu0 0
  %1830 = vmatprep.subr.bf16.mxu0 0
  %1831 = vmatpush2.bf16.msra.mxu0 0
  %1832 = vmatprep.subr.bf16.mxu0 0
  %1833 = vmatpush2.bf16.msra.mxu0 0
  %1834 = vmatprep.subr.bf16.mxu0 0
  %1835 = vmatpush2.bf16.msra.mxu0 0
  %1836 = vmatprep.mubr.bf16.mxu0 0
  %1837 = vmatmul.mubr.bf16.gmra.mxu0 %v1733
  %v1838 = vpop.f32.mrf.mxu0
  %v1839 = vadd.f32 0.0, %v1838
  %v1840 = vpop.f32.mrf.mxu0
  %v1841 = vadd.f32 0.0, %v1840
  %v1842 = vpop.f32.mrf.mxu0
  %v1843 = vadd.f32 0.0, %v1842
  %v1844 = vpop.f32.mrf.mxu0
  %v1845 = vadd.f32 0.0, %v1844
  %1846 = vmatprep.mubr.bf16.mxu0 0
  %1847 = vmatmul.mubr.bf16.gmra.mxu0 %v1736
  %v1848 = vpop.f32.mrf.mxu0
  %v1849 = vadd.f32 0.0, %v1848
  %v1850 = vpop.f32.mrf.mxu0
  %v1851 = vadd.f32 0.0, %v1850
  %v1852 = vpop.f32.mrf.mxu0
  %v1853 = vadd.f32 0.0, %v1852
  %v1854 = vpop.f32.mrf.mxu0
  %v1855 = vadd.f32 0.0, %v1854
  %1856 = vmatprep.mubr.bf16.mxu0 0
  %1857 = vmatmul.mubr.bf16.gmra.mxu0 %v1739
  %v1858 = vpop.f32.mrf.mxu0
  %v1859 = vadd.f32 0.0, %v1858
  %v1860 = vpop.f32.mrf.mxu0
  %v1861 = vadd.f32 0.0, %v1860
  %v1862 = vpop.f32.mrf.mxu0
  %v1863 = vadd.f32 0.0, %v1862
  %v1864 = vpop.f32.mrf.mxu0
  %v1865 = vadd.f32 0.0, %v1864
  %1866 = vdwg.mxu0
  %v1867 = vadd.f32 %v1580, %v1776
  %v1868 = vadd.f32 %v1582, %v1778
  %v1869 = vadd.f32 %v1643, %v1839
  %v1870 = vadd.f32 %v1645, %v1841
  %v1871 = vadd.f32 %v1584, %v1780
  %v1872 = vadd.f32 %v1586, %v1782
  %v1873 = vadd.f32 %v1647, %v1843
  %v1874 = vadd.f32 %v1649, %v1845
  %v1875 = vadd.f32 %v1590, %v1786
  %v1876 = vadd.f32 %v1592, %v1788
  %v1877 = vadd.f32 %v1653, %v1849
  %v1878 = vadd.f32 %v1655, %v1851
  %v1879 = vadd.f32 %v1594, %v1790
  %v1880 = vadd.f32 %v1596, %v1792
  %v1881 = vadd.f32 %v1657, %v1853
  %v1882 = vadd.f32 %v1659, %v1855
  %v1883 = vadd.f32 %v1600, %v1796
  %v1884 = vadd.f32 %v1602, %v1798
  %v1885 = vadd.f32 %v1663, %v1859
  %v1886 = vadd.f32 %v1665, %v1861
  %v1887 = vadd.f32 %v1604, %v1800
  %v1888 = vadd.f32 %v1606, %v1802
  %v1889 = vadd.f32 %v1667, %v1863
  %v1890 = vadd.f32 %v1669, %v1865
  %1891 = vst [vmem:[#allocation3 + $0x8] sm:$0xff] %v1867
  %1892 = vst [vmem:[#allocation3 + $0x10] sm:$0xff] %v1868
  %1893 = vst [vmem:[#allocation3 + $0x18] sm:$0xff] %v1869
  %1894 = vst [vmem:[#allocation3 + $0x20] sm:$0xff] %v1870
  %1895 = vst [vmem:[#allocation3 + $0x38] sm:$0xff] %v1871
  %1896 = vst [vmem:[#allocation3 + $0x40] sm:$0xff] %v1872
  %1897 = vst [vmem:[#allocation3 + $0x48] sm:$0xff] %v1873
  %1898 = vst [vmem:[#allocation3 + $0x50] sm:$0xff] %v1874
  %1899 = vst [vmem:[#allocation3 + $0x68] sm:$0xff] %v1883
  %1900 = vst [vmem:[#allocation3 + $0x70] sm:$0xff] %v1884
  %1901 = vst [vmem:[#allocation3 + $0x78] sm:$0xff] %v1885
  %1902 = vst [vmem:[#allocation3 + $0x80] sm:$0xff] %v1886
  %1903 = vst [vmem:[#allocation3 + $0x98] sm:$0xff] %v1887
  %1904 = vst [vmem:[#allocation3 + $0xa0] sm:$0xff] %v1888
  %1905 = vst [vmem:[#allocation3 + $0xa8] sm:$0xff] %v1889
  %1906 = vst [vmem:[#allocation3 + $0xb0] sm:$0xff] %v1890
  %v1907 = vld [vmem:[#allocation3] sm:$0xff]
  %v1908 = vld [vmem:[#allocation3 + $0x8] sm:$0xff]
  %v1909 = vld [vmem:[#allocation3 + $0x10] sm:$0xff]
  %v1910 = vld [vmem:[#allocation3 + $0x18] sm:$0xff]
  %v1911 = vld [vmem:[#allocation3 + $0x20] sm:$0xff]
  %v1912 = vld [vmem:[#allocation3 + $0x30] sm:$0xff]
  %v1913 = vld [vmem:[#allocation3 + $0x38] sm:$0xff]
  %v1914 = vld [vmem:[#allocation3 + $0x40] sm:$0xff]
  %v1915 = vld [vmem:[#allocation3 + $0x48] sm:$0xff]
  %v1916 = vld [vmem:[#allocation3 + $0x50] sm:$0xff]
  %1927 = vrot.lane.b32.xlu0 %v1907, 16
  %v1928 = vpop.permute.xlu0 %1927
  %1929 = vrot.lane.b32.xlu0 %v1908, 16
  %v1930 = vpop.permute.xlu0 %1929
  %1931 = vrot.lane.b32.xlu0 %v1909, 16
  %v1932 = vpop.permute.xlu0 %1931
  %1933 = vrot.lane.b32.xlu0 %v1910, 16
  %v1934 = vpop.permute.xlu0 %1933
  %1935 = vrot.lane.b32.xlu0 %v1911, 16
  %v1936 = vpop.permute.xlu0 %1935
  %1937 = vrot.lane.b32.xlu0 %v1912, 16
  %v1938 = vpop.permute.xlu0 %1937
  %1939 = vrot.lane.b32.xlu0 %v1913, 16
  %v1940 = vpop.permute.xlu0 %1939
  %1941 = vrot.lane.b32.xlu0 %v1914, 16
  %v1942 = vpop.permute.xlu0 %1941
  %1943 = vrot.lane.b32.xlu0 %v1915, 16
  %v1944 = vpop.permute.xlu0 %1943
  %1945 = vrot.lane.b32.xlu0 %v1916, 16
  %v1946 = vpop.permute.xlu0 %1945
  %v1947 = vsel %vm963, %v1928, %v1930
  %v1948 = vsel %vm963, %v1930, %v1932
  %v1949 = vsel %vm963, %v1932, %v1934
  %v1950 = vsel %vm963, %v1934, %v1936
  %v1951 = vsel %vm963, %v1938, %v1940
  %v1952 = vsel %vm963, %v1940, %v1942
  %v1953 = vsel %vm963, %v1942, %v1944
  %v1954 = vsel %vm963, %v1944, %v1946
  %v1963 = vsel %vm90, %v1947, 0.0
  %v1964 = vsel %vm91, %v1948, 0.0
  %v1965 = vsel %vm92, %v1949, 0.0
  %v1966 = vsel %vm93, %v1950, 0.0
  %v1967 = vsel %vm90, %v1951, 0.0
  %v1968 = vsel %vm91, %v1952, 0.0
  %v1969 = vsel %vm92, %v1953, 0.0
  %v1970 = vsel %vm93, %v1954, 0.0
  %v1971 = vadd.f32 %v1875, %v1963
  %v1972 = vadd.f32 %v1876, %v1964
  %v1973 = vadd.f32 %v1877, %v1965
  %v1974 = vadd.f32 %v1878, %v1966
  %v1975 = vadd.f32 %v1879, %v1967
  %v1976 = vadd.f32 %v1880, %v1968
  %v1977 = vadd.f32 %v1881, %v1969
  %v1978 = vadd.f32 %v1882, %v1970
  %v1979 = vld [vmem:[#allocation3 + $0x68] sm:$0xff]
  %v1980 = vld [vmem:[#allocation3 + $0x70] sm:$0xff]
  %v1981 = vld [vmem:[#allocation3 + $0x78] sm:$0xff]
  %v1982 = vld [vmem:[#allocation3 + $0x80] sm:$0xff]
  %v1983 = vld [vmem:[#allocation3 + $0x88] sm:$0xff]
  %v1984 = vld [vmem:[#allocation3 + $0x98] sm:$0xff]
  %v1985 = vld [vmem:[#allocation3 + $0xa0] sm:$0xff]
  %v1986 = vld [vmem:[#allocation3 + $0xa8] sm:$0xff]
  %v1987 = vld [vmem:[#allocation3 + $0xb0] sm:$0xff]
  %v1988 = vld [vmem:[#allocation3 + $0xb8] sm:$0xff]
  %1999 = vrot.lane.b32.xlu0 %v1979, 112
  %v2000 = vpop.permute.xlu0 %1999
  %2001 = vrot.lane.b32.xlu0 %v1980, 112
  %v2002 = vpop.permute.xlu0 %2001
  %2003 = vrot.lane.b32.xlu0 %v1981, 112
  %v2004 = vpop.permute.xlu0 %2003
  %2005 = vrot.lane.b32.xlu0 %v1982, 112
  %v2006 = vpop.permute.xlu0 %2005
  %2007 = vrot.lane.b32.xlu0 %v1983, 112
  %v2008 = vpop.permute.xlu0 %2007
  %2009 = vrot.lane.b32.xlu0 %v1984, 112
  %v2010 = vpop.permute.xlu0 %2009
  %2011 = vrot.lane.b32.xlu0 %v1985, 112
  %v2012 = vpop.permute.xlu0 %2011
  %2013 = vrot.lane.b32.xlu0 %v1986, 112
  %v2014 = vpop.permute.xlu0 %2013
  %2015 = vrot.lane.b32.xlu0 %v1987, 112
  %v2016 = vpop.permute.xlu0 %2015
  %2017 = vrot.lane.b32.xlu0 %v1988, 112
  %v2018 = vpop.permute.xlu0 %2017
  %v2019 = vsel %vm1078, %v2000, %v2002
  %v2020 = vsel %vm1078, %v2002, %v2004
  %v2021 = vsel %vm1078, %v2004, %v2006
  %v2022 = vsel %vm1078, %v2006, %v2008
  %v2023 = vsel %vm1078, %v2010, %v2012
  %v2024 = vsel %vm1078, %v2012, %v2014
  %v2025 = vsel %vm1078, %v2014, %v2016
  %v2026 = vsel %vm1078, %v2016, %v2018
  %v2035 = vsel %vm98, %v2019, 0.0
  %v2036 = vsel %vm99, %v2020, 0.0
  %v2037 = vsel %vm100, %v2021, 0.0
  %v2038 = vsel %vm101, %v2022, 0.0
  %v2039 = vsel %vm98, %v2023, 0.0
  %v2040 = vsel %vm99, %v2024, 0.0
  %v2041 = vsel %vm100, %v2025, 0.0
  %v2042 = vsel %vm101, %v2026, 0.0
  %v2043 = vadd.f32 %v1971, %v2035
  %v2044 = vadd.f32 %v1972, %v2036
  %v2045 = vadd.f32 %v1973, %v2037
  %v2046 = vadd.f32 %v1974, %v2038
  %v2047 = vadd.f32 %v1975, %v2039
  %v2048 = vadd.f32 %v1976, %v2040
  %v2049 = vadd.f32 %v1977, %v2041
  %v2050 = vadd.f32 %v1978, %v2042
  %v2051 = vld [vmem:[%s4] sm:$0xff]
  %v2052 = vld [vmem:[%s4 + $0x8] sm:$0xff]
  %2054 = vset.pattern.permute.xlu0 0
  %2055 = vperm.xlu0 %2054, %v2051
  %v2056 = vpop.permute.xlu0 %2055
  %2059 = vset.pattern.permute.xlu0 0
  %2060 = vperm.xlu0 %2059, %v2052
  %v2061 = vpop.permute.xlu0 %2060
  %v2063 = vadd.f32 %v2043, %v2056
  %v2064 = vadd.f32 %v2044, %v2056
  %v2065 = vadd.f32 %v2045, %v2056
  %v2066 = vadd.f32 %v2046, %v2056
  %v2067 = vadd.f32 %v2047, %v2061
  %v2068 = vadd.f32 %v2048, %v2061
  %v2069 = vadd.f32 %v2049, %v2061
  %v2070 = vadd.f32 %v2050, %v2061
  %v2071 = vmax.f32 %v2063, 0.0
  %v2072 = vmax.f32 %v2064, 0.0
  %v2073 = vmax.f32 %v2065, 0.0
  %v2074 = vmax.f32 %v2066, 0.0
  %v2075 = vmax.f32 %v2067, 0.0
  %v2076 = vmax.f32 %v2068, 0.0
  %v2077 = vmax.f32 %v2069, 0.0
  %v2078 = vmax.f32 %v2070, 0.0
  %v2079 = vpack.c.bf16 %v2075, %v2071
  %v2080 = vpack.c.bf16 %v2076, %v2072
  %v2081 = vpack.c.bf16 %v2077, %v2073
  %v2082 = vpack.c.bf16 %v2078, %v2074
  %v2087 = vunpack.c.l.b16 %v2079
  %v2088 = vunpack.c.l.b16 %v2080
  %v2089 = vunpack.c.l.b16 %v2081
  %v2090 = vunpack.c.l.b16 %v2082
  %v2091 = vunpack.c.h.b16 %v2079
  %v2092 = vunpack.c.h.b16 %v2080
  %v2093 = vunpack.c.h.b16 %v2081
  %v2094 = vunpack.c.h.b16 %v2082
  %v2095 = vpack.c.b16 %v2088, %v2087
  %v2096 = vpack.c.b16 %v2090, %v2089
  %v2097 = vpack.c.b16 %v2092, %v2091
  %v2098 = vpack.c.b16 %v2094, %v2093
  %2103 = vst [vmem:[#allocation2 + $0x4] sm:$0xff] %v2095
  %2104 = vst [vmem:[#allocation2 + $0xc] sm:$0xff] %v2096
  %2105 = vst [vmem:[#allocation2 + $0x1c] sm:$0xff] %v2097
  %2106 = vst [vmem:[#allocation2 + $0x24] sm:$0xff] %v2098
  %v2107 = vld [vmem:[#allocation2] sm:$0xff]
  %v2108 = vld [vmem:[#allocation2 + $0x8] sm:$0xff]
  %v2109 = vld [vmem:[#allocation2 + $0x10] sm:$0xf]
  %v2110 = vld [vmem:[#allocation2 + $0x18] sm:$0xff]
  %v2111 = vld [vmem:[#allocation2 + $0x20] sm:$0xff]
  %v2112 = vld [vmem:[#allocation2 + $0x28] sm:$0xf]
  %v2113 = vsel %vm1264, %v2107, 0
  %v2114 = vsel %vm1265, %v2108, 0
  %v2115 = vsel %vm1266, %v2109, 0
  %v2116 = vsel %vm1264, %v2110, 0
  %v2117 = vsel %vm1265, %v2111, 0
  %v2118 = vsel %vm1266, %v2112, 0
  %v2119 = vld [vmem:[#allocation2 + $0x4] sm:$0xff]
  %v2120 = vld [vmem:[#allocation2 + $0xc] sm:$0xff]
  %v2121 = vld [vmem:[#allocation2 + $0x14] sm:$0xf]
  %v2122 = vld [vmem:[#allocation2 + $0x1c] sm:$0xff]
  %v2123 = vld [vmem:[#allocation2 + $0x24] sm:$0xff]
  %v2124 = vld [vmem:[#allocation2 + $0x2c] sm:$0xf]
  %v2125 = vsel %vm1292, %v2119, 0
  %v2126 = vsel %vm1293, %v2120, 0
  %v2127 = vsel %vm1294, %v2121, 0
  %v2128 = vsel %vm1292, %v2122, 0
  %v2129 = vsel %vm1293, %v2123, 0
  %v2130 = vsel %vm1294, %v2124, 0
  %v2131 = vld [vmem:[%s5] sm:$0xf]
  %v2132 = vld [vmem:[%s5 + $0x4] sm:$0xf]
  %v2133 = vld [vmem:[%s5 + $0x8] sm:$0xf]
  %v2134 = vld [vmem:[%s5 + $0xc] sm:$0xf]
  %v2135 = vld [vmem:[%s5 + $0x10] sm:$0xf]
  %v2136 = vld [vmem:[%s5 + $0x14] sm:$0xf]
  %s2137 = scalar_lea.vmem %s5, 24
  %v2138 = vld [vmem:[%s2137] sm:$0xf]
  %v2139 = vld [vmem:[%s2137 + $0x4] sm:$0xf]
  %v2140 = vld [vmem:[%s2137 + $0x8] sm:$0xf]
  %v2141 = vld [vmem:[%s2137 + $0xc] sm:$0xf]
  %v2142 = vld [vmem:[%s2137 + $0x10] sm:$0xf]
  %v2143 = vld [vmem:[%s2137 + $0x14] sm:$0xf]
  %v2150 = vunpack.c.l.b16 %v2138
  %v2151 = vunpack.c.l.b16 %v2139
  %v2152 = vunpack.c.l.b16 %v2140
  %v2153 = vunpack.c.l.b16 %v2141
  %v2154 = vunpack.c.l.b16 %v2142
  %v2155 = vunpack.c.l.b16 %v2143
  %v2156 = vpack.c.b16 %v2151, %v2150
  %v2157 = vpack.c.b16 %v2153, %v2152
  %v2158 = vpack.c.b16 %v2155, %v2154
  %v2160 = vsel %vm963, %v2156, 0
  %v2163 = vsel %vm963, %v2157, 0
  %v2166 = vsel %vm963, %v2158, 0
  %2168 = vmatprep.subr.bf16.mxu0 0
  %2169 = vmatpush1.bf16.msra.mxu0 0
  %2170 = vmatprep.subr.bf16.mxu0 0
  %2171 = vmatpush1.bf16.msra.mxu0 0
  %2172 = vmatprep.subr.bf16.mxu0 0
  %2173 = vmatpush1.bf16.msra.mxu0 0
  %2174 = vmatprep.subr.bf16.mxu0 0
  %2175 = vmatpush1.bf16.msra.mxu0 0
  %2176 = vmatprep.subr.bf16.mxu0 0
  %2177 = vmatpush1.bf16.msra.mxu0 0
  %2178 = vmatprep.subr.bf16.mxu0 0
  %2179 = vmatpush1.bf16.msra.mxu0 0
  %2180 = vmatprep.subr.bf16.mxu0 0
  %2181 = vmatpush1.bf16.msra.mxu0 0
  %2182 = vmatprep.subr.bf16.mxu0 %v2080
  %2183 = vmatpush1.bf16.msra.mxu0 %v2079
  %2184 = vmatprep.subr.bf16.mxu0 0
  %2185 = vmatpush2.bf16.msra.mxu0 0
  %2186 = vmatprep.subr.bf16.mxu0 0
  %2187 = vmatpush2.bf16.msra.mxu0 0
  %2188 = vmatprep.subr.bf16.mxu0 0
  %2189 = vmatpush2.bf16.msra.mxu0 0
  %2190 = vmatprep.subr.bf16.mxu0 0
  %2191 = vmatpush2.bf16.msra.mxu0 0
  %2192 = vmatprep.subr.bf16.mxu0 0
  %2193 = vmatpush2.bf16.msra.mxu0 0
  %2194 = vmatprep.subr.bf16.mxu0 0
  %2195 = vmatpush2.bf16.msra.mxu0 0
  %2196 = vmatprep.subr.bf16.mxu0 0
  %2197 = vmatpush2.bf16.msra.mxu0 0
  %2198 = vmatprep.subr.bf16.mxu0 0
  %2199 = vmatpush2.bf16.msra.mxu0 0
  %2200 = vmatprep.mubr.bf16.mxu0 0
  %2201 = vmatmul.mubr.bf16.gmra.mxu0 %v2160
  %v2202 = vpop.f32.mrf.mxu0
  %v2203 = vadd.f32 0.0, %v2202
  %v2204 = vpop.f32.mrf.mxu0
  %v2205 = vadd.f32 0.0, %v2204
  %v2206 = vpop.f32.mrf.mxu0
  %v2207 = vadd.f32 0.0, %v2206
  %v2208 = vpop.f32.mrf.mxu0
  %v2209 = vadd.f32 0.0, %v2208
  %2210 = vmatprep.mubr.bf16.mxu0 0
  %2211 = vmatmul.mubr.bf16.gmra.mxu0 %v2163
  %v2212 = vpop.f32.mrf.mxu0
  %v2213 = vadd.f32 0.0, %v2212
  %v2214 = vpop.f32.mrf.mxu0
  %v2215 = vadd.f32 0.0, %v2214
  %v2216 = vpop.f32.mrf.mxu0
  %v2217 = vadd.f32 0.0, %v2216
  %v2218 = vpop.f32.mrf.mxu0
  %v2219 = vadd.f32 0.0, %v2218
  %2220 = vmatprep.mubr.bf16.mxu0 0
  %2221 = vmatmul.mubr.bf16.gmra.mxu0 %v2166
  %v2222 = vpop.f32.mrf.mxu0
  %v2223 = vadd.f32 0.0, %v2222
  %v2224 = vpop.f32.mrf.mxu0
  %v2225 = vadd.f32 0.0, %v2224
  %v2226 = vpop.f32.mrf.mxu0
  %v2227 = vadd.f32 0.0, %v2226
  %v2228 = vpop.f32.mrf.mxu0
  %v2229 = vadd.f32 0.0, %v2228
  %2230 = vdwg.mxu0
  %2231 = vmatprep.subr.bf16.mxu0 0
  %2232 = vmatpush1.bf16.msra.mxu0 0
  %2233 = vmatprep.subr.bf16.mxu0 0
  %2234 = vmatpush1.bf16.msra.mxu0 0
  %2235 = vmatprep.subr.bf16.mxu0 0
  %2236 = vmatpush1.bf16.msra.mxu0 0
  %2237 = vmatprep.subr.bf16.mxu0 0
  %2238 = vmatpush1.bf16.msra.mxu0 0
  %2239 = vmatprep.subr.bf16.mxu0 0
  %2240 = vmatpush1.bf16.msra.mxu0 0
  %2241 = vmatprep.subr.bf16.mxu0 0
  %2242 = vmatpush1.bf16.msra.mxu0 0
  %2243 = vmatprep.subr.bf16.mxu0 0
  %2244 = vmatpush1.bf16.msra.mxu0 0
  %2245 = vmatprep.subr.bf16.mxu0 %v2082
  %2246 = vmatpush1.bf16.msra.mxu0 %v2081
  %2247 = vmatprep.subr.bf16.mxu0 0
  %2248 = vmatpush2.bf16.msra.mxu0 0
  %2249 = vmatprep.subr.bf16.mxu0 0
  %2250 = vmatpush2.bf16.msra.mxu0 0
  %2251 = vmatprep.subr.bf16.mxu0 0
  %2252 = vmatpush2.bf16.msra.mxu0 0
  %2253 = vmatprep.subr.bf16.mxu0 0
  %2254 = vmatpush2.bf16.msra.mxu0 0
  %2255 = vmatprep.subr.bf16.mxu0 0
  %2256 = vmatpush2.bf16.msra.mxu0 0
  %2257 = vmatprep.subr.bf16.mxu0 0
  %2258 = vmatpush2.bf16.msra.mxu0 0
  %2259 = vmatprep.subr.bf16.mxu0 0
  %2260 = vmatpush2.bf16.msra.mxu0 0
  %2261 = vmatprep.subr.bf16.mxu0 0
  %2262 = vmatpush2.bf16.msra.mxu0 0
  %2263 = vmatprep.mubr.bf16.mxu0 0
  %2264 = vmatmul.mubr.bf16.gmra.mxu0 %v2160
  %v2265 = vpop.f32.mrf.mxu0
  %v2266 = vadd.f32 0.0, %v2265
  %v2267 = vpop.f32.mrf.mxu0
  %v2268 = vadd.f32 0.0, %v2267
  %v2269 = vpop.f32.mrf.mxu0
  %v2270 = vadd.f32 0.0, %v2269
  %v2271 = vpop.f32.mrf.mxu0
  %v2272 = vadd.f32 0.0, %v2271
  %2273 = vmatprep.mubr.bf16.mxu0 0
  %2274 = vmatmul.mubr.bf16.gmra.mxu0 %v2163
  %v2275 = vpop.f32.mrf.mxu0
  %v2276 = vadd.f32 0.0, %v2275
  %v2277 = vpop.f32.mrf.mxu0
  %v2278 = vadd.f32 0.0, %v2277
  %v2279 = vpop.f32.mrf.mxu0
  %v2280 = vadd.f32 0.0, %v2279
  %v2281 = vpop.f32.mrf.mxu0
  %v2282 = vadd.f32 0.0, %v2281
  %2283 = vmatprep.mubr.bf16.mxu0 0
  %2284 = vmatmul.mubr.bf16.gmra.mxu0 %v2166
  %v2285 = vpop.f32.mrf.mxu0
  %v2286 = vadd.f32 0.0, %v2285
  %v2287 = vpop.f32.mrf.mxu0
  %v2288 = vadd.f32 0.0, %v2287
  %v2289 = vpop.f32.mrf.mxu0
  %v2290 = vadd.f32 0.0, %v2289
  %v2291 = vpop.f32.mrf.mxu0
  %v2292 = vadd.f32 0.0, %v2291
  %2293 = vdwg.mxu0
  %v2300 = vunpack.c.l.b16 %v2131
  %v2301 = vunpack.c.l.b16 %v2132
  %v2302 = vunpack.c.l.b16 %v2133
  %v2303 = vunpack.c.l.b16 %v2134
  %v2304 = vunpack.c.l.b16 %v2135
  %v2305 = vunpack.c.l.b16 %v2136
  %v2306 = vpack.c.b16 %v2301, %v2300
  %v2307 = vpack.c.b16 %v2303, %v2302
  %v2308 = vpack.c.b16 %v2305, %v2304
  %v2315 = vunpack.c.l.b16 %v2113
  %v2316 = vunpack.c.h.b16 %v2113
  %v2317 = vunpack.c.l.b16 %v2114
  %v2318 = vunpack.c.h.b16 %v2114
  %v2319 = vunpack.c.l.b16 %v2115
  %v2320 = vunpack.c.l.b16 %v2116
  %v2321 = vunpack.c.h.b16 %v2116
  %v2322 = vunpack.c.l.b16 %v2117
  %v2323 = vunpack.c.h.b16 %v2117
  %v2324 = vunpack.c.l.b16 %v2118
  %v2325 = vpack.c.b16 %v2320, %v2315
  %v2326 = vpack.c.b16 %v2321, %v2316
  %v2327 = vpack.c.b16 %v2322, %v2317
  %v2328 = vpack.c.b16 %v2323, %v2318
  %v2329 = vpack.c.b16 %v2324, %v2319
  %2330 = vrot.lane.b32.xlu0 %v2325, 1
  %v2331 = vpop.permute.xlu0 %2330
  %2332 = vrot.lane.b32.xlu0 %v2326, 1
  %v2333 = vpop.permute.xlu0 %2332
  %2334 = vrot.lane.b32.xlu0 %v2327, 1
  %v2335 = vpop.permute.xlu0 %2334
  %2336 = vrot.lane.b32.xlu0 %v2328, 1
  %v2337 = vpop.permute.xlu0 %2336
  %2338 = vrot.lane.b32.xlu0 %v2329, 1
  %v2339 = vpop.permute.xlu0 %2338
  %v2340 = vsel %vm178, %v2331, %v2333
  %v2341 = vsel %vm178, %v2333, %v2335
  %v2342 = vsel %vm178, %v2335, %v2337
  %v2343 = vsel %vm178, %v2337, %v2339
  %v2349 = vsel %vm963, %v2306, 0
  %v2352 = vsel %vm963, %v2307, 0
  %v2355 = vsel %vm963, %v2308, 0
  %2357 = vmatprep.subr.bf16.mxu0 0
  %2358 = vmatpush1.bf16.msra.mxu0 0
  %2359 = vmatprep.subr.bf16.mxu0 0
  %2360 = vmatpush1.bf16.msra.mxu0 0
  %2361 = vmatprep.subr.bf16.mxu0 0
  %2362 = vmatpush1.bf16.msra.mxu0 0
  %2363 = vmatprep.subr.bf16.mxu0 0
  %2364 = vmatpush1.bf16.msra.mxu0 0
  %2365 = vmatprep.subr.bf16.mxu0 0
  %2366 = vmatpush1.bf16.msra.mxu0 0
  %2367 = vmatprep.subr.bf16.mxu0 0
  %2368 = vmatpush1.bf16.msra.mxu0 0
  %2369 = vmatprep.subr.bf16.mxu0 0
  %2370 = vmatpush1.bf16.msra.mxu0 0
  %2371 = vmatprep.subr.bf16.mxu0 %v2341
  %2372 = vmatpush1.bf16.msra.mxu0 %v2340
  %2373 = vmatprep.subr.bf16.mxu0 0
  %2374 = vmatpush2.bf16.msra.mxu0 0
  %2375 = vmatprep.subr.bf16.mxu0 0
  %2376 = vmatpush2.bf16.msra.mxu0 0
  %2377 = vmatprep.subr.bf16.mxu0 0
  %2378 = vmatpush2.bf16.msra.mxu0 0
  %2379 = vmatprep.subr.bf16.mxu0 0
  %2380 = vmatpush2.bf16.msra.mxu0 0
  %2381 = vmatprep.subr.bf16.mxu0 0
  %2382 = vmatpush2.bf16.msra.mxu0 0
  %2383 = vmatprep.subr.bf16.mxu0 0
  %2384 = vmatpush2.bf16.msra.mxu0 0
  %2385 = vmatprep.subr.bf16.mxu0 0
  %2386 = vmatpush2.bf16.msra.mxu0 0
  %2387 = vmatprep.subr.bf16.mxu0 0
  %2388 = vmatpush2.bf16.msra.mxu0 0
  %2389 = vmatprep.mubr.bf16.mxu0 0
  %2390 = vmatmul.mubr.bf16.gmra.mxu0 %v2349
  %v2391 = vpop.f32.mrf.mxu0
  %v2392 = vadd.f32 %v2203, %v2391
  %v2393 = vpop.f32.mrf.mxu0
  %v2394 = vadd.f32 %v2205, %v2393
  %v2395 = vpop.f32.mrf.mxu0
  %v2396 = vadd.f32 %v2207, %v2395
  %v2397 = vpop.f32.mrf.mxu0
  %v2398 = vadd.f32 %v2209, %v2397
  %2399 = vmatprep.mubr.bf16.mxu0 0
  %2400 = vmatmul.mubr.bf16.gmra.mxu0 %v2352
  %v2401 = vpop.f32.mrf.mxu0
  %v2402 = vadd.f32 %v2213, %v2401
  %v2403 = vpop.f32.mrf.mxu0
  %v2404 = vadd.f32 %v2215, %v2403
  %v2405 = vpop.f32.mrf.mxu0
  %v2406 = vadd.f32 %v2217, %v2405
  %v2407 = vpop.f32.mrf.mxu0
  %v2408 = vadd.f32 %v2219, %v2407
  %2409 = vmatprep.mubr.bf16.mxu0 0
  %2410 = vmatmul.mubr.bf16.gmra.mxu0 %v2355
  %v2411 = vpop.f32.mrf.mxu0
  %v2412 = vadd.f32 %v2223, %v2411
  %v2413 = vpop.f32.mrf.mxu0
  %v2414 = vadd.f32 %v2225, %v2413
  %v2415 = vpop.f32.mrf.mxu0
  %v2416 = vadd.f32 %v2227, %v2415
  %v2417 = vpop.f32.mrf.mxu0
  %v2418 = vadd.f32 %v2229, %v2417
  %2419 = vdwg.mxu0
  %2420 = vmatprep.subr.bf16.mxu0 0
  %2421 = vmatpush1.bf16.msra.mxu0 0
  %2422 = vmatprep.subr.bf16.mxu0 0
  %2423 = vmatpush1.bf16.msra.mxu0 0
  %2424 = vmatprep.subr.bf16.mxu0 0
  %2425 = vmatpush1.bf16.msra.mxu0 0
  %2426 = vmatprep.subr.bf16.mxu0 0
  %2427 = vmatpush1.bf16.msra.mxu0 0
  %2428 = vmatprep.subr.bf16.mxu0 0
  %2429 = vmatpush1.bf16.msra.mxu0 0
  %2430 = vmatprep.subr.bf16.mxu0 0
  %2431 = vmatpush1.bf16.msra.mxu0 0
  %2432 = vmatprep.subr.bf16.mxu0 0
  %2433 = vmatpush1.bf16.msra.mxu0 0
  %2434 = vmatprep.subr.bf16.mxu0 %v2343
  %2435 = vmatpush1.bf16.msra.mxu0 %v2342
  %2436 = vmatprep.subr.bf16.mxu0 0
  %2437 = vmatpush2.bf16.msra.mxu0 0
  %2438 = vmatprep.subr.bf16.mxu0 0
  %2439 = vmatpush2.bf16.msra.mxu0 0
  %2440 = vmatprep.subr.bf16.mxu0 0
  %2441 = vmatpush2.bf16.msra.mxu0 0
  %2442 = vmatprep.subr.bf16.mxu0 0
  %2443 = vmatpush2.bf16.msra.mxu0 0
  %2444 = vmatprep.subr.bf16.mxu0 0
  %2445 = vmatpush2.bf16.msra.mxu0 0
  %2446 = vmatprep.subr.bf16.mxu0 0
  %2447 = vmatpush2.bf16.msra.mxu0 0
  %2448 = vmatprep.subr.bf16.mxu0 0
  %2449 = vmatpush2.bf16.msra.mxu0 0
  %2450 = vmatprep.subr.bf16.mxu0 0
  %2451 = vmatpush2.bf16.msra.mxu0 0
  %2452 = vmatprep.mubr.bf16.mxu0 0
  %2453 = vmatmul.mubr.bf16.gmra.mxu0 %v2349
  %v2454 = vpop.f32.mrf.mxu0
  %v2455 = vadd.f32 %v2266, %v2454
  %v2456 = vpop.f32.mrf.mxu0
  %v2457 = vadd.f32 %v2268, %v2456
  %v2458 = vpop.f32.mrf.mxu0
  %v2459 = vadd.f32 %v2270, %v2458
  %v2460 = vpop.f32.mrf.mxu0
  %v2461 = vadd.f32 %v2272, %v2460
  %2462 = vmatprep.mubr.bf16.mxu0 0
  %2463 = vmatmul.mubr.bf16.gmra.mxu0 %v2352
  %v2464 = vpop.f32.mrf.mxu0
  %v2465 = vadd.f32 %v2276, %v2464
  %v2466 = vpop.f32.mrf.mxu0
  %v2467 = vadd.f32 %v2278, %v2466
  %v2468 = vpop.f32.mrf.mxu0
  %v2469 = vadd.f32 %v2280, %v2468
  %v2470 = vpop.f32.mrf.mxu0
  %v2471 = vadd.f32 %v2282, %v2470
  %2472 = vmatprep.mubr.bf16.mxu0 0
  %2473 = vmatmul.mubr.bf16.gmra.mxu0 %v2355
  %v2474 = vpop.f32.mrf.mxu0
  %v2475 = vadd.f32 %v2286, %v2474
  %v2476 = vpop.f32.mrf.mxu0
  %v2477 = vadd.f32 %v2288, %v2476
  %v2478 = vpop.f32.mrf.mxu0
  %v2479 = vadd.f32 %v2290, %v2478
  %v2480 = vpop.f32.mrf.mxu0
  %v2481 = vadd.f32 %v2292, %v2480
  %2482 = vdwg.mxu0
  %s2483 = scalar_lea.vmem %s5, 48
  %v2484 = vld [vmem:[%s2483] sm:$0xf]
  %v2485 = vld [vmem:[%s2483 + $0x4] sm:$0xf]
  %v2486 = vld [vmem:[%s2483 + $0x8] sm:$0xf]
  %v2487 = vld [vmem:[%s2483 + $0xc] sm:$0xf]
  %v2488 = vld [vmem:[%s2483 + $0x10] sm:$0xf]
  %v2489 = vld [vmem:[%s2483 + $0x14] sm:$0xf]
  %v2496 = vunpack.c.l.b16 %v2484
  %v2497 = vunpack.c.l.b16 %v2485
  %v2498 = vunpack.c.l.b16 %v2486
  %v2499 = vunpack.c.l.b16 %v2487
  %v2500 = vunpack.c.l.b16 %v2488
  %v2501 = vunpack.c.l.b16 %v2489
  %v2502 = vpack.c.b16 %v2497, %v2496
  %v2503 = vpack.c.b16 %v2499, %v2498
  %v2504 = vpack.c.b16 %v2501, %v2500
  %v2511 = vunpack.c.l.b16 %v2125
  %v2512 = vunpack.c.h.b16 %v2125
  %v2513 = vunpack.c.l.b16 %v2126
  %v2514 = vunpack.c.h.b16 %v2126
  %v2515 = vunpack.c.l.b16 %v2127
  %v2516 = vunpack.c.l.b16 %v2128
  %v2517 = vunpack.c.h.b16 %v2128
  %v2518 = vunpack.c.l.b16 %v2129
  %v2519 = vunpack.c.h.b16 %v2129
  %v2520 = vunpack.c.l.b16 %v2130
  %v2521 = vpack.c.b16 %v2516, %v2511
  %v2522 = vpack.c.b16 %v2517, %v2512
  %v2523 = vpack.c.b16 %v2518, %v2513
  %v2524 = vpack.c.b16 %v2519, %v2514
  %v2525 = vpack.c.b16 %v2520, %v2515
  %2526 = vrot.lane.b32.xlu0 %v2521, 127
  %v2527 = vpop.permute.xlu0 %2526
  %2528 = vrot.lane.b32.xlu0 %v2522, 127
  %v2529 = vpop.permute.xlu0 %2528
  %2530 = vrot.lane.b32.xlu0 %v2523, 127
  %v2531 = vpop.permute.xlu0 %2530
  %2532 = vrot.lane.b32.xlu0 %v2524, 127
  %v2533 = vpop.permute.xlu0 %2532
  %2534 = vrot.lane.b32.xlu0 %v2525, 127
  %v2535 = vpop.permute.xlu0 %2534
  %v2536 = vsel %vm154, %v2527, %v2529
  %v2537 = vsel %vm154, %v2529, %v2531
  %v2538 = vsel %vm154, %v2531, %v2533
  %v2539 = vsel %vm154, %v2533, %v2535
  %v2545 = vsel %vm963, %v2502, 0
  %v2548 = vsel %vm963, %v2503, 0
  %v2551 = vsel %vm963, %v2504, 0
  %2553 = vmatprep.subr.bf16.mxu0 0
  %2554 = vmatpush1.bf16.msra.mxu0 0
  %2555 = vmatprep.subr.bf16.mxu0 0
  %2556 = vmatpush1.bf16.msra.mxu0 0
  %2557 = vmatprep.subr.bf16.mxu0 0
  %2558 = vmatpush1.bf16.msra.mxu0 0
  %2559 = vmatprep.subr.bf16.mxu0 0
  %2560 = vmatpush1.bf16.msra.mxu0 0
  %2561 = vmatprep.subr.bf16.mxu0 0
  %2562 = vmatpush1.bf16.msra.mxu0 0
  %2563 = vmatprep.subr.bf16.mxu0 0
  %2564 = vmatpush1.bf16.msra.mxu0 0
  %2565 = vmatprep.subr.bf16.mxu0 0
  %2566 = vmatpush1.bf16.msra.mxu0 0
  %2567 = vmatprep.subr.bf16.mxu0 %v2537
  %2568 = vmatpush1.bf16.msra.mxu0 %v2536
  %2569 = vmatprep.subr.bf16.mxu0 0
  %2570 = vmatpush2.bf16.msra.mxu0 0
  %2571 = vmatprep.subr.bf16.mxu0 0
  %2572 = vmatpush2.bf16.msra.mxu0 0
  %2573 = vmatprep.subr.bf16.mxu0 0
  %2574 = vmatpush2.bf16.msra.mxu0 0
  %2575 = vmatprep.subr.bf16.mxu0 0
  %2576 = vmatpush2.bf16.msra.mxu0 0
  %2577 = vmatprep.subr.bf16.mxu0 0
  %2578 = vmatpush2.bf16.msra.mxu0 0
  %2579 = vmatprep.subr.bf16.mxu0 0
  %2580 = vmatpush2.bf16.msra.mxu0 0
  %2581 = vmatprep.subr.bf16.mxu0 0
  %2582 = vmatpush2.bf16.msra.mxu0 0
  %2583 = vmatprep.subr.bf16.mxu0 0
  %2584 = vmatpush2.bf16.msra.mxu0 0
  %2585 = vmatprep.mubr.bf16.mxu0 0
  %2586 = vmatmul.mubr.bf16.gmra.mxu0 %v2545
  %v2587 = vpop.f32.mrf.mxu0
  %v2588 = vadd.f32 0.0, %v2587
  %v2589 = vpop.f32.mrf.mxu0
  %v2590 = vadd.f32 0.0, %v2589
  %v2591 = vpop.f32.mrf.mxu0
  %v2592 = vadd.f32 0.0, %v2591
  %v2593 = vpop.f32.mrf.mxu0
  %v2594 = vadd.f32 0.0, %v2593
  %2595 = vmatprep.mubr.bf16.mxu0 0
  %2596 = vmatmul.mubr.bf16.gmra.mxu0 %v2548
  %v2597 = vpop.f32.mrf.mxu0
  %v2598 = vadd.f32 0.0, %v2597
  %v2599 = vpop.f32.mrf.mxu0
  %v2600 = vadd.f32 0.0, %v2599
  %v2601 = vpop.f32.mrf.mxu0
  %v2602 = vadd.f32 0.0, %v2601
  %v2603 = vpop.f32.mrf.mxu0
  %v2604 = vadd.f32 0.0, %v2603
  %2605 = vmatprep.mubr.bf16.mxu0 0
  %2606 = vmatmul.mubr.bf16.gmra.mxu0 %v2551
  %v2607 = vpop.f32.mrf.mxu0
  %v2608 = vadd.f32 0.0, %v2607
  %v2609 = vpop.f32.mrf.mxu0
  %v2610 = vadd.f32 0.0, %v2609
  %v2611 = vpop.f32.mrf.mxu0
  %v2612 = vadd.f32 0.0, %v2611
  %v2613 = vpop.f32.mrf.mxu0
  %v2614 = vadd.f32 0.0, %v2613
  %2615 = vdwg.mxu0
  %2616 = vmatprep.subr.bf16.mxu0 0
  %2617 = vmatpush1.bf16.msra.mxu0 0
  %2618 = vmatprep.subr.bf16.mxu0 0
  %2619 = vmatpush1.bf16.msra.mxu0 0
  %2620 = vmatprep.subr.bf16.mxu0 0
  %2621 = vmatpush1.bf16.msra.mxu0 0
  %2622 = vmatprep.subr.bf16.mxu0 0
  %2623 = vmatpush1.bf16.msra.mxu0 0
  %2624 = vmatprep.subr.bf16.mxu0 0
  %2625 = vmatpush1.bf16.msra.mxu0 0
  %2626 = vmatprep.subr.bf16.mxu0 0
  %2627 = vmatpush1.bf16.msra.mxu0 0
  %2628 = vmatprep.subr.bf16.mxu0 0
  %2629 = vmatpush1.bf16.msra.mxu0 0
  %2630 = vmatprep.subr.bf16.mxu0 %v2539
  %2631 = vmatpush1.bf16.msra.mxu0 %v2538
  %2632 = vmatprep.subr.bf16.mxu0 0
  %2633 = vmatpush2.bf16.msra.mxu0 0
  %2634 = vmatprep.subr.bf16.mxu0 0
  %2635 = vmatpush2.bf16.msra.mxu0 0
  %2636 = vmatprep.subr.bf16.mxu0 0
  %2637 = vmatpush2.bf16.msra.mxu0 0
  %2638 = vmatprep.subr.bf16.mxu0 0
  %2639 = vmatpush2.bf16.msra.mxu0 0
  %2640 = vmatprep.subr.bf16.mxu0 0
  %2641 = vmatpush2.bf16.msra.mxu0 0
  %2642 = vmatprep.subr.bf16.mxu0 0
  %2643 = vmatpush2.bf16.msra.mxu0 0
  %2644 = vmatprep.subr.bf16.mxu0 0
  %2645 = vmatpush2.bf16.msra.mxu0 0
  %2646 = vmatprep.subr.bf16.mxu0 0
  %2647 = vmatpush2.bf16.msra.mxu0 0
  %2648 = vmatprep.mubr.bf16.mxu0 0
  %2649 = vmatmul.mubr.bf16.gmra.mxu0 %v2545
  %v2650 = vpop.f32.mrf.mxu0
  %v2651 = vadd.f32 0.0, %v2650
  %v2652 = vpop.f32.mrf.mxu0
  %v2653 = vadd.f32 0.0, %v2652
  %v2654 = vpop.f32.mrf.mxu0
  %v2655 = vadd.f32 0.0, %v2654
  %v2656 = vpop.f32.mrf.mxu0
  %v2657 = vadd.f32 0.0, %v2656
  %2658 = vmatprep.mubr.bf16.mxu0 0
  %2659 = vmatmul.mubr.bf16.gmra.mxu0 %v2548
  %v2660 = vpop.f32.mrf.mxu0
  %v2661 = vadd.f32 0.0, %v2660
  %v2662 = vpop.f32.mrf.mxu0
  %v2663 = vadd.f32 0.0, %v2662
  %v2664 = vpop.f32.mrf.mxu0
  %v2665 = vadd.f32 0.0, %v2664
  %v2666 = vpop.f32.mrf.mxu0
  %v2667 = vadd.f32 0.0, %v2666
  %2668 = vmatprep.mubr.bf16.mxu0 0
  %2669 = vmatmul.mubr.bf16.gmra.mxu0 %v2551
  %v2670 = vpop.f32.mrf.mxu0
  %v2671 = vadd.f32 0.0, %v2670
  %v2672 = vpop.f32.mrf.mxu0
  %v2673 = vadd.f32 0.0, %v2672
  %v2674 = vpop.f32.mrf.mxu0
  %v2675 = vadd.f32 0.0, %v2674
  %v2676 = vpop.f32.mrf.mxu0
  %v2677 = vadd.f32 0.0, %v2676
  %2678 = vdwg.mxu0
  %v2679 = vadd.f32 %v2392, %v2588
  %v2680 = vadd.f32 %v2394, %v2590
  %v2681 = vadd.f32 %v2455, %v2651
  %v2682 = vadd.f32 %v2457, %v2653
  %v2683 = vadd.f32 %v2396, %v2592
  %v2684 = vadd.f32 %v2398, %v2594
  %v2685 = vadd.f32 %v2459, %v2655
  %v2686 = vadd.f32 %v2461, %v2657
  %v2687 = vadd.f32 %v2402, %v2598
  %v2688 = vadd.f32 %v2404, %v2600
  %v2689 = vadd.f32 %v2465, %v2661
  %v2690 = vadd.f32 %v2467, %v2663
  %v2691 = vadd.f32 %v2406, %v2602
  %v2692 = vadd.f32 %v2408, %v2604
  %v2693 = vadd.f32 %v2469, %v2665
  %v2694 = vadd.f32 %v2471, %v2667
  %v2695 = vadd.f32 %v2412, %v2608
  %v2696 = vadd.f32 %v2414, %v2610
  %v2697 = vadd.f32 %v2475, %v2671
  %v2698 = vadd.f32 %v2477, %v2673
  %v2699 = vadd.f32 %v2416, %v2612
  %v2700 = vadd.f32 %v2418, %v2614
  %v2701 = vadd.f32 %v2479, %v2675
  %v2702 = vadd.f32 %v2481, %v2677
  %2703 = vst [vmem:[#allocation3 + $0x8] sm:$0xff] %v2679
  %2704 = vst [vmem:[#allocation3 + $0x10] sm:$0xff] %v2680
  %2705 = vst [vmem:[#allocation3 + $0x18] sm:$0xff] %v2681
  %2706 = vst [vmem:[#allocation3 + $0x20] sm:$0xff] %v2682
  %2707 = vst [vmem:[#allocation3 + $0x38] sm:$0xff] %v2683
  %2708 = vst [vmem:[#allocation3 + $0x40] sm:$0xff] %v2684
  %2709 = vst [vmem:[#allocation3 + $0x48] sm:$0xff] %v2685
  %2710 = vst [vmem:[#allocation3 + $0x50] sm:$0xff] %v2686
  %2711 = vst [vmem:[#allocation3 + $0x68] sm:$0xff] %v2695
  %2712 = vst [vmem:[#allocation3 + $0x70] sm:$0xff] %v2696
  %2713 = vst [vmem:[#allocation3 + $0x78] sm:$0xff] %v2697
  %2714 = vst [vmem:[#allocation3 + $0x80] sm:$0xff] %v2698
  %2715 = vst [vmem:[#allocation3 + $0x98] sm:$0xff] %v2699
  %2716 = vst [vmem:[#allocation3 + $0xa0] sm:$0xff] %v2700
  %2717 = vst [vmem:[#allocation3 + $0xa8] sm:$0xff] %v2701
  %2718 = vst [vmem:[#allocation3 + $0xb0] sm:$0xff] %v2702
  %v2719 = vld [vmem:[#allocation3] sm:$0xff]
  %v2720 = vld [vmem:[#allocation3 + $0x8] sm:$0xff]
  %v2721 = vld [vmem:[#allocation3 + $0x10] sm:$0xff]
  %v2722 = vld [vmem:[#allocation3 + $0x18] sm:$0xff]
  %v2723 = vld [vmem:[#allocation3 + $0x20] sm:$0xff]
  %v2724 = vld [vmem:[#allocation3 + $0x30] sm:$0xff]
  %v2725 = vld [vmem:[#allocation3 + $0x38] sm:$0xff]
  %v2726 = vld [vmem:[#allocation3 + $0x40] sm:$0xff]
  %v2727 = vld [vmem:[#allocation3 + $0x48] sm:$0xff]
  %v2728 = vld [vmem:[#allocation3 + $0x50] sm:$0xff]
  %2739 = vrot.lane.b32.xlu0 %v2719, 16
  %v2740 = vpop.permute.xlu0 %2739
  %2741 = vrot.lane.b32.xlu0 %v2720, 16
  %v2742 = vpop.permute.xlu0 %2741
  %2743 = vrot.lane.b32.xlu0 %v2721, 16
  %v2744 = vpop.permute.xlu0 %2743
  %2745 = vrot.lane.b32.xlu0 %v2722, 16
  %v2746 = vpop.permute.xlu0 %2745
  %2747 = vrot.lane.b32.xlu0 %v2723, 16
  %v2748 = vpop.permute.xlu0 %2747
  %2749 = vrot.lane.b32.xlu0 %v2724, 16
  %v2750 = vpop.permute.xlu0 %2749
  %2751 = vrot.lane.b32.xlu0 %v2725, 16
  %v2752 = vpop.permute.xlu0 %2751
  %2753 = vrot.lane.b32.xlu0 %v2726, 16
  %v2754 = vpop.permute.xlu0 %2753
  %2755 = vrot.lane.b32.xlu0 %v2727, 16
  %v2756 = vpop.permute.xlu0 %2755
  %2757 = vrot.lane.b32.xlu0 %v2728, 16
  %v2758 = vpop.permute.xlu0 %2757
  %v2759 = vsel %vm963, %v2740, %v2742
  %v2760 = vsel %vm963, %v2742, %v2744
  %v2761 = vsel %vm963, %v2744, %v2746
  %v2762 = vsel %vm963, %v2746, %v2748
  %v2763 = vsel %vm963, %v2750, %v2752
  %v2764 = vsel %vm963, %v2752, %v2754
  %v2765 = vsel %vm963, %v2754, %v2756
  %v2766 = vsel %vm963, %v2756, %v2758
  %v2775 = vsel %vm90, %v2759, 0.0
  %v2776 = vsel %vm91, %v2760, 0.0
  %v2777 = vsel %vm92, %v2761, 0.0
  %v2778 = vsel %vm93, %v2762, 0.0
  %v2779 = vsel %vm90, %v2763, 0.0
  %v2780 = vsel %vm91, %v2764, 0.0
  %v2781 = vsel %vm92, %v2765, 0.0
  %v2782 = vsel %vm93, %v2766, 0.0
  %v2783 = vadd.f32 %v2687, %v2775
  %v2784 = vadd.f32 %v2688, %v2776
  %v2785 = vadd.f32 %v2689, %v2777
  %v2786 = vadd.f32 %v2690, %v2778
  %v2787 = vadd.f32 %v2691, %v2779
  %v2788 = vadd.f32 %v2692, %v2780
  %v2789 = vadd.f32 %v2693, %v2781
  %v2790 = vadd.f32 %v2694, %v2782
  %v2791 = vld [vmem:[#allocation3 + $0x68] sm:$0xff]
  %v2792 = vld [vmem:[#allocation3 + $0x70] sm:$0xff]
  %v2793 = vld [vmem:[#allocation3 + $0x78] sm:$0xff]
  %v2794 = vld [vmem:[#allocation3 + $0x80] sm:$0xff]
  %v2795 = vld [vmem:[#allocation3 + $0x88] sm:$0xff]
  %v2796 = vld [vmem:[#allocation3 + $0x98] sm:$0xff]
  %v2797 = vld [vmem:[#allocation3 + $0xa0] sm:$0xff]
  %v2798 = vld [vmem:[#allocation3 + $0xa8] sm:$0xff]
  %v2799 = vld [vmem:[#allocation3 + $0xb0] sm:$0xff]
  %v2800 = vld [vmem:[#allocation3 + $0xb8] sm:$0xff]
  %2811 = vrot.lane.b32.xlu0 %v2791, 112
  %v2812 = vpop.permute.xlu0 %2811
  %2813 = vrot.lane.b32.xlu0 %v2792, 112
  %v2814 = vpop.permute.xlu0 %2813
  %2815 = vrot.lane.b32.xlu0 %v2793, 112
  %v2816 = vpop.permute.xlu0 %2815
  %2817 = vrot.lane.b32.xlu0 %v2794, 112
  %v2818 = vpop.permute.xlu0 %2817
  %2819 = vrot.lane.b32.xlu0 %v2795, 112
  %v2820 = vpop.permute.xlu0 %2819
  %2821 = vrot.lane.b32.xlu0 %v2796, 112
  %v2822 = vpop.permute.xlu0 %2821
  %2823 = vrot.lane.b32.xlu0 %v2797, 112
  %v2824 = vpop.permute.xlu0 %2823
  %2825 = vrot.lane.b32.xlu0 %v2798, 112
  %v2826 = vpop.permute.xlu0 %2825
  %2827 = vrot.lane.b32.xlu0 %v2799, 112
  %v2828 = vpop.permute.xlu0 %2827
  %2829 = vrot.lane.b32.xlu0 %v2800, 112
  %v2830 = vpop.permute.xlu0 %2829
  %v2831 = vsel %vm1078, %v2812, %v2814
  %v2832 = vsel %vm1078, %v2814, %v2816
  %v2833 = vsel %vm1078, %v2816, %v2818
  %v2834 = vsel %vm1078, %v2818, %v2820
  %v2835 = vsel %vm1078, %v2822, %v2824
  %v2836 = vsel %vm1078, %v2824, %v2826
  %v2837 = vsel %vm1078, %v2826, %v2828
  %v2838 = vsel %vm1078, %v2828, %v2830
  %v2847 = vsel %vm98, %v2831, 0.0
  %v2848 = vsel %vm99, %v2832, 0.0
  %v2849 = vsel %vm100, %v2833, 0.0
  %v2850 = vsel %vm101, %v2834, 0.0
  %v2851 = vsel %vm98, %v2835, 0.0
  %v2852 = vsel %vm99, %v2836, 0.0
  %v2853 = vsel %vm100, %v2837, 0.0
  %v2854 = vsel %vm101, %v2838, 0.0
  %v2855 = vadd.f32 %v2783, %v2847
  %v2856 = vadd.f32 %v2784, %v2848
  %v2857 = vadd.f32 %v2785, %v2849
  %v2858 = vadd.f32 %v2786, %v2850
  %v2859 = vadd.f32 %v2787, %v2851
  %v2860 = vadd.f32 %v2788, %v2852
  %v2861 = vadd.f32 %v2789, %v2853
  %v2862 = vadd.f32 %v2790, %v2854
  %v2863 = vld [vmem:[%s6] sm:$0xff]
  %v2864 = vld [vmem:[%s6 + $0x8] sm:$0xff]
  %2866 = vset.pattern.permute.xlu0 0
  %2867 = vperm.xlu0 %2866, %v2863
  %v2868 = vpop.permute.xlu0 %2867
  %2871 = vset.pattern.permute.xlu0 0
  %2872 = vperm.xlu0 %2871, %v2864
  %v2873 = vpop.permute.xlu0 %2872
  %v2875 = vadd.f32 %v2855, %v2868
  %v2876 = vadd.f32 %v2856, %v2868
  %v2877 = vadd.f32 %v2857, %v2868
  %v2878 = vadd.f32 %v2858, %v2868
  %v2879 = vadd.f32 %v2859, %v2873
  %v2880 = vadd.f32 %v2860, %v2873
  %v2881 = vadd.f32 %v2861, %v2873
  %v2882 = vadd.f32 %v2862, %v2873
  %v2883 = vmax.f32 %v2875, 0.0
  %v2884 = vmax.f32 %v2876, 0.0
  %v2885 = vmax.f32 %v2877, 0.0
  %v2886 = vmax.f32 %v2878, 0.0
  %v2887 = vmax.f32 %v2879, 0.0
  %v2888 = vmax.f32 %v2880, 0.0
  %v2889 = vmax.f32 %v2881, 0.0
  %v2890 = vmax.f32 %v2882, 0.0
  %v2891 = vpack.c.bf16 %v2887, %v2883
  %v2892 = vpack.c.bf16 %v2888, %v2884
  %v2893 = vpack.c.bf16 %v2889, %v2885
  %v2894 = vpack.c.bf16 %v2890, %v2886
  %v2899 = vunpack.c.l.b16 %v2891
  %v2900 = vunpack.c.l.b16 %v2892
  %v2901 = vunpack.c.l.b16 %v2893
  %v2902 = vunpack.c.l.b16 %v2894
  %v2903 = vunpack.c.h.b16 %v2891
  %v2904 = vunpack.c.h.b16 %v2892
  %v2905 = vunpack.c.h.b16 %v2893
  %v2906 = vunpack.c.h.b16 %v2894
  %v2907 = vpack.c.b16 %v2900, %v2899
  %v2908 = vpack.c.b16 %v2902, %v2901
  %v2909 = vpack.c.b16 %v2904, %v2903
  %v2910 = vpack.c.b16 %v2906, %v2905
  %2915 = vst [vmem:[#allocation2 + $0x4] sm:$0xff] %v2907
  %2916 = vst [vmem:[#allocation2 + $0xc] sm:$0xff] %v2908
  %2917 = vst [vmem:[#allocation2 + $0x1c] sm:$0xff] %v2909
  %2918 = vst [vmem:[#allocation2 + $0x24] sm:$0xff] %v2910
  %v2919 = vld [vmem:[#allocation2] sm:$0xff]
  %v2920 = vld [vmem:[#allocation2 + $0x8] sm:$0xff]
  %v2921 = vld [vmem:[#allocation2 + $0x10] sm:$0xf]
  %v2922 = vld [vmem:[#allocation2 + $0x18] sm:$0xff]
  %v2923 = vld [vmem:[#allocation2 + $0x20] sm:$0xff]
  %v2924 = vld [vmem:[#allocation2 + $0x28] sm:$0xf]
  %v2925 = vsel %vm1264, %v2919, 0
  %v2926 = vsel %vm1265, %v2920, 0
  %v2927 = vsel %vm1266, %v2921, 0
  %v2928 = vsel %vm1264, %v2922, 0
  %v2929 = vsel %vm1265, %v2923, 0
  %v2930 = vsel %vm1266, %v2924, 0
  %v2931 = vld [vmem:[#allocation2 + $0x4] sm:$0xff]
  %v2932 = vld [vmem:[#allocation2 + $0xc] sm:$0xff]
  %v2933 = vld [vmem:[#allocation2 + $0x14] sm:$0xf]
  %v2934 = vld [vmem:[#allocation2 + $0x1c] sm:$0xff]
  %v2935 = vld [vmem:[#allocation2 + $0x24] sm:$0xff]
  %v2936 = vld [vmem:[#allocation2 + $0x2c] sm:$0xf]
  %v2937 = vsel %vm1292, %v2931, 0
  %v2938 = vsel %vm1293, %v2932, 0
  %v2939 = vsel %vm1294, %v2933, 0
  %v2940 = vsel %vm1292, %v2934, 0
  %v2941 = vsel %vm1293, %v2935, 0
  %v2942 = vsel %vm1294, %v2936, 0
  %v2943 = vld [vmem:[%s7] sm:$0x3]
  %s2944 = scalar_lea.vmem %s7, 2
  %v2945 = vld [vmem:[%s2944] sm:$0x3]
  %v2947 = vsel %vm963, %v2945, 0
  %2949 = vmatprep.subr.bf16.mxu0 0
  %2950 = vmatpush1.bf16.msra.mxu0 0
  %2951 = vmatprep.subr.bf16.mxu0 0
  %2952 = vmatpush1.bf16.msra.mxu0 0
  %2953 = vmatprep.subr.bf16.mxu0 0
  %2954 = vmatpush1.bf16.msra.mxu0 0
  %2955 = vmatprep.subr.bf16.mxu0 0
  %2956 = vmatpush1.bf16.msra.mxu0 0
  %2957 = vmatprep.subr.bf16.mxu0 0
  %2958 = vmatpush1.bf16.msra.mxu0 0
  %2959 = vmatprep.subr.bf16.mxu0 0
  %2960 = vmatpush1.bf16.msra.mxu0 0
  %2961 = vmatprep.subr.bf16.mxu0 0
  %2962 = vmatpush1.bf16.msra.mxu0 0
  %2963 = vmatprep.subr.bf16.mxu0 %v2892
  %2964 = vmatpush1.bf16.msra.mxu0 %v2891
  %2965 = vmatprep.subr.bf16.mxu0 0
  %2966 = vmatpush2.bf16.msra.mxu0 0
  %2967 = vmatprep.subr.bf16.mxu0 0
  %2968 = vmatpush2.bf16.msra.mxu0 0
  %2969 = vmatprep.subr.bf16.mxu0 0
  %2970 = vmatpush2.bf16.msra.mxu0 0
  %2971 = vmatprep.subr.bf16.mxu0 0
  %2972 = vmatpush2.bf16.msra.mxu0 0
  %2973 = vmatprep.subr.bf16.mxu0 0
  %2974 = vmatpush2.bf16.msra.mxu0 0
  %2975 = vmatprep.subr.bf16.mxu0 0
  %2976 = vmatpush2.bf16.msra.mxu0 0
  %2977 = vmatprep.subr.bf16.mxu0 0
  %2978 = vmatpush2.bf16.msra.mxu0 0
  %2979 = vmatprep.subr.bf16.mxu0 0
  %2980 = vmatpush2.bf16.msra.mxu0 0
  %2981 = vmatprep.mubr.bf16.mxu0 0
  %2982 = vmatmul.mubr.bf16.gmra.mxu0 %v2947
  %v2983 = vpop.f32.mrf.mxu0
  %v2984 = vadd.f32 0.0, %v2983
  %v2985 = vpop.f32.mrf.mxu0
  %v2986 = vadd.f32 0.0, %v2985
  %v2987 = vpop.f32.mrf.mxu0
  %v2988 = vpop.f32.mrf.mxu0
  %2989 = vdwg.mxu0
  %2990 = vmatprep.subr.bf16.mxu0 0
  %2991 = vmatpush1.bf16.msra.mxu0 0
  %2992 = vmatprep.subr.bf16.mxu0 0
  %2993 = vmatpush1.bf16.msra.mxu0 0
  %2994 = vmatprep.subr.bf16.mxu0 0
  %2995 = vmatpush1.bf16.msra.mxu0 0
  %2996 = vmatprep.subr.bf16.mxu0 0
  %2997 = vmatpush1.bf16.msra.mxu0 0
  %2998 = vmatprep.subr.bf16.mxu0 0
  %2999 = vmatpush1.bf16.msra.mxu0 0
  %3000 = vmatprep.subr.bf16.mxu0 0
  %3001 = vmatpush1.bf16.msra.mxu0 0
  %3002 = vmatprep.subr.bf16.mxu0 0
  %3003 = vmatpush1.bf16.msra.mxu0 0
  %3004 = vmatprep.subr.bf16.mxu0 %v2894
  %3005 = vmatpush1.bf16.msra.mxu0 %v2893
  %3006 = vmatprep.subr.bf16.mxu0 0
  %3007 = vmatpush2.bf16.msra.mxu0 0
  %3008 = vmatprep.subr.bf16.mxu0 0
  %3009 = vmatpush2.bf16.msra.mxu0 0
  %3010 = vmatprep.subr.bf16.mxu0 0
  %3011 = vmatpush2.bf16.msra.mxu0 0
  %3012 = vmatprep.subr.bf16.mxu0 0
  %3013 = vmatpush2.bf16.msra.mxu0 0
  %3014 = vmatprep.subr.bf16.mxu0 0
  %3015 = vmatpush2.bf16.msra.mxu0 0
  %3016 = vmatprep.subr.bf16.mxu0 0
  %3017 = vmatpush2.bf16.msra.mxu0 0
  %3018 = vmatprep.subr.bf16.mxu0 0
  %3019 = vmatpush2.bf16.msra.mxu0 0
  %3020 = vmatprep.subr.bf16.mxu0 0
  %3021 = vmatpush2.bf16.msra.mxu0 0
  %3022 = vmatprep.mubr.bf16.mxu0 0
  %3023 = vmatmul.mubr.bf16.gmra.mxu0 %v2947
  %v3024 = vpop.f32.mrf.mxu0
  %v3025 = vadd.f32 0.0, %v3024
  %v3026 = vpop.f32.mrf.mxu0
  %v3027 = vadd.f32 0.0, %v3026
  %v3028 = vpop.f32.mrf.mxu0
  %v3029 = vpop.f32.mrf.mxu0
  %3030 = vdwg.mxu0
  %v3037 = vunpack.c.l.b16 %v2925
  %v3038 = vunpack.c.h.b16 %v2925
  %v3039 = vunpack.c.l.b16 %v2926
  %v3040 = vunpack.c.h.b16 %v2926
  %v3041 = vunpack.c.l.b16 %v2927
  %v3042 = vunpack.c.l.b16 %v2928
  %v3043 = vunpack.c.h.b16 %v2928
  %v3044 = vunpack.c.l.b16 %v2929
  %v3045 = vunpack.c.h.b16 %v2929
  %v3046 = vunpack.c.l.b16 %v2930
  %v3047 = vpack.c.b16 %v3042, %v3037
  %v3048 = vpack.c.b16 %v3043, %v3038
  %v3049 = vpack.c.b16 %v3044, %v3039
  %v3050 = vpack.c.b16 %v3045, %v3040
  %v3051 = vpack.c.b16 %v3046, %v3041
  %3052 = vrot.lane.b32.xlu0 %v3047, 1
  %v3053 = vpop.permute.xlu0 %3052
  %3054 = vrot.lane.b32.xlu0 %v3048, 1
  %v3055 = vpop.permute.xlu0 %3054
  %3056 = vrot.lane.b32.xlu0 %v3049, 1
  %v3057 = vpop.permute.xlu0 %3056
  %3058 = vrot.lane.b32.xlu0 %v3050, 1
  %v3059 = vpop.permute.xlu0 %3058
  %3060 = vrot.lane.b32.xlu0 %v3051, 1
  %v3061 = vpop.permute.xlu0 %3060
  %v3062 = vsel %vm178, %v3053, %v3055
  %v3063 = vsel %vm178, %v3055, %v3057
  %v3064 = vsel %vm178, %v3057, %v3059
  %v3065 = vsel %vm178, %v3059, %v3061
  %v3071 = vsel %vm963, %v2943, 0
  %3073 = vmatprep.subr.bf16.mxu0 0
  %3074 = vmatpush1.bf16.msra.mxu0 0
  %3075 = vmatprep.subr.bf16.mxu0 0
  %3076 = vmatpush1.bf16.msra.mxu0 0
  %3077 = vmatprep.subr.bf16.mxu0 0
  %3078 = vmatpush1.bf16.msra.mxu0 0
  %3079 = vmatprep.subr.bf16.mxu0 0
  %3080 = vmatpush1.bf16.msra.mxu0 0
  %3081 = vmatprep.subr.bf16.mxu0 0
  %3082 = vmatpush1.bf16.msra.mxu0 0
  %3083 = vmatprep.subr.bf16.mxu0 0
  %3084 = vmatpush1.bf16.msra.mxu0 0
  %3085 = vmatprep.subr.bf16.mxu0 0
  %3086 = vmatpush1.bf16.msra.mxu0 0
  %3087 = vmatprep.subr.bf16.mxu0 %v3063
  %3088 = vmatpush1.bf16.msra.mxu0 %v3062
  %3089 = vmatprep.subr.bf16.mxu0 0
  %3090 = vmatpush2.bf16.msra.mxu0 0
  %3091 = vmatprep.subr.bf16.mxu0 0
  %3092 = vmatpush2.bf16.msra.mxu0 0
  %3093 = vmatprep.subr.bf16.mxu0 0
  %3094 = vmatpush2.bf16.msra.mxu0 0
  %3095 = vmatprep.subr.bf16.mxu0 0
  %3096 = vmatpush2.bf16.msra.mxu0 0
  %3097 = vmatprep.subr.bf16.mxu0 0
  %3098 = vmatpush2.bf16.msra.mxu0 0
  %3099 = vmatprep.subr.bf16.mxu0 0
  %3100 = vmatpush2.bf16.msra.mxu0 0
  %3101 = vmatprep.subr.bf16.mxu0 0
  %3102 = vmatpush2.bf16.msra.mxu0 0
  %3103 = vmatprep.subr.bf16.mxu0 0
  %3104 = vmatpush2.bf16.msra.mxu0 0
  %3105 = vmatprep.mubr.bf16.mxu0 0
  %3106 = vmatmul.mubr.bf16.gmra.mxu0 %v3071
  %v3107 = vpop.f32.mrf.mxu0
  %v3108 = vadd.f32 %v2984, %v3107
  %v3109 = vpop.f32.mrf.mxu0
  %v3110 = vadd.f32 %v2986, %v3109
  %v3111 = vpop.f32.mrf.mxu0
  %v3112 = vpop.f32.mrf.mxu0
  %3113 = vdwg.mxu0
  %3114 = vmatprep.subr.bf16.mxu0 0
  %3115 = vmatpush1.bf16.msra.mxu0 0
  %3116 = vmatprep.subr.bf16.mxu0 0
  %3117 = vmatpush1.bf16.msra.mxu0 0
  %3118 = vmatprep.subr.bf16.mxu0 0
  %3119 = vmatpush1.bf16.msra.mxu0 0
  %3120 = vmatprep.subr.bf16.mxu0 0
  %3121 = vmatpush1.bf16.msra.mxu0 0
  %3122 = vmatprep.subr.bf16.mxu0 0
  %3123 = vmatpush1.bf16.msra.mxu0 0
  %3124 = vmatprep.subr.bf16.mxu0 0
  %3125 = vmatpush1.bf16.msra.mxu0 0
  %3126 = vmatprep.subr.bf16.mxu0 0
  %3127 = vmatpush1.bf16.msra.mxu0 0
  %3128 = vmatprep.subr.bf16.mxu0 %v3065
  %3129 = vmatpush1.bf16.msra.mxu0 %v3064
  %3130 = vmatprep.subr.bf16.mxu0 0
  %3131 = vmatpush2.bf16.msra.mxu0 0
  %3132 = vmatprep.subr.bf16.mxu0 0
  %3133 = vmatpush2.bf16.msra.mxu0 0
  %3134 = vmatprep.subr.bf16.mxu0 0
  %3135 = vmatpush2.bf16.msra.mxu0 0
  %3136 = vmatprep.subr.bf16.mxu0 0
  %3137 = vmatpush2.bf16.msra.mxu0 0
  %3138 = vmatprep.subr.bf16.mxu0 0
  %3139 = vmatpush2.bf16.msra.mxu0 0
  %3140 = vmatprep.subr.bf16.mxu0 0
  %3141 = vmatpush2.bf16.msra.mxu0 0
  %3142 = vmatprep.subr.bf16.mxu0 0
  %3143 = vmatpush2.bf16.msra.mxu0 0
  %3144 = vmatprep.subr.bf16.mxu0 0
  %3145 = vmatpush2.bf16.msra.mxu0 0
  %3146 = vmatprep.mubr.bf16.mxu0 0
  %3147 = vmatmul.mubr.bf16.gmra.mxu0 %v3071
  %v3148 = vpop.f32.mrf.mxu0
  %v3149 = vadd.f32 %v3025, %v3148
  %v3150 = vpop.f32.mrf.mxu0
  %v3151 = vadd.f32 %v3027, %v3150
  %v3152 = vpop.f32.mrf.mxu0
  %v3153 = vpop.f32.mrf.mxu0
  %3154 = vdwg.mxu0
  %s3155 = scalar_lea.vmem %s7, 4
  %v3156 = vld [vmem:[%s3155] sm:$0x3]
  %v3163 = vunpack.c.l.b16 %v2937
  %v3164 = vunpack.c.h.b16 %v2937
  %v3165 = vunpack.c.l.b16 %v2938
  %v3166 = vunpack.c.h.b16 %v2938
  %v3167 = vunpack.c.l.b16 %v2939
  %v3168 = vunpack.c.l.b16 %v2940
  %v3169 = vunpack.c.h.b16 %v2940
  %v3170 = vunpack.c.l.b16 %v2941
  %v3171 = vunpack.c.h.b16 %v2941
  %v3172 = vunpack.c.l.b16 %v2942
  %v3173 = vpack.c.b16 %v3168, %v3163
  %v3174 = vpack.c.b16 %v3169, %v3164
  %v3175 = vpack.c.b16 %v3170, %v3165
  %v3176 = vpack.c.b16 %v3171, %v3166
  %v3177 = vpack.c.b16 %v3172, %v3167
  %3178 = vrot.lane.b32.xlu0 %v3173, 127
  %v3179 = vpop.permute.xlu0 %3178
  %3180 = vrot.lane.b32.xlu0 %v3174, 127
  %v3181 = vpop.permute.xlu0 %3180
  %3182 = vrot.lane.b32.xlu0 %v3175, 127
  %v3183 = vpop.permute.xlu0 %3182
  %3184 = vrot.lane.b32.xlu0 %v3176, 127
  %v3185 = vpop.permute.xlu0 %3184
  %3186 = vrot.lane.b32.xlu0 %v3177, 127
  %v3187 = vpop.permute.xlu0 %3186
  %v3188 = vsel %vm154, %v3179, %v3181
  %v3189 = vsel %vm154, %v3181, %v3183
  %v3190 = vsel %vm154, %v3183, %v3185
  %v3191 = vsel %vm154, %v3185, %v3187
  %v3197 = vsel %vm963, %v3156, 0
  %3199 = vmatprep.subr.bf16.mxu0 0
  %3200 = vmatpush1.bf16.msra.mxu0 0
  %3201 = vmatprep.subr.bf16.mxu0 0
  %3202 = vmatpush1.bf16.msra.mxu0 0
  %3203 = vmatprep.subr.bf16.mxu0 0
  %3204 = vmatpush1.bf16.msra.mxu0 0
  %3205 = vmatprep.subr.bf16.mxu0 0
  %3206 = vmatpush1.bf16.msra.mxu0 0
  %3207 = vmatprep.subr.bf16.mxu0 0
  %3208 = vmatpush1.bf16.msra.mxu0 0
  %3209 = vmatprep.subr.bf16.mxu0 0
  %3210 = vmatpush1.bf16.msra.mxu0 0
  %3211 = vmatprep.subr.bf16.mxu0 0
  %3212 = vmatpush1.bf16.msra.mxu0 0
  %3213 = vmatprep.subr.bf16.mxu0 %v3189
  %3214 = vmatpush1.bf16.msra.mxu0 %v3188
  %3215 = vmatprep.subr.bf16.mxu0 0
  %3216 = vmatpush2.bf16.msra.mxu0 0
  %3217 = vmatprep.subr.bf16.mxu0 0
  %3218 = vmatpush2.bf16.msra.mxu0 0
  %3219 = vmatprep.subr.bf16.mxu0 0
  %3220 = vmatpush2.bf16.msra.mxu0 0
  %3221 = vmatprep.subr.bf16.mxu0 0
  %3222 = vmatpush2.bf16.msra.mxu0 0
  %3223 = vmatprep.subr.bf16.mxu0 0
  %3224 = vmatpush2.bf16.msra.mxu0 0
  %3225 = vmatprep.subr.bf16.mxu0 0
  %3226 = vmatpush2.bf16.msra.mxu0 0
  %3227 = vmatprep.subr.bf16.mxu0 0
  %3228 = vmatpush2.bf16.msra.mxu0 0
  %3229 = vmatprep.subr.bf16.mxu0 0
  %3230 = vmatpush2.bf16.msra.mxu0 0
  %3231 = vmatprep.mubr.bf16.mxu0 0
  %3232 = vmatmul.mubr.bf16.gmra.mxu0 %v3197
  %v3233 = vpop.f32.mrf.mxu0
  %v3234 = vadd.f32 0.0, %v3233
  %v3235 = vpop.f32.mrf.mxu0
  %v3236 = vadd.f32 0.0, %v3235
  %v3237 = vpop.f32.mrf.mxu0
  %v3238 = vpop.f32.mrf.mxu0
  %3239 = vdwg.mxu0
  %3240 = vmatprep.subr.bf16.mxu0 0
  %3241 = vmatpush1.bf16.msra.mxu0 0
  %3242 = vmatprep.subr.bf16.mxu0 0
  %3243 = vmatpush1.bf16.msra.mxu0 0
  %3244 = vmatprep.subr.bf16.mxu0 0
  %3245 = vmatpush1.bf16.msra.mxu0 0
  %3246 = vmatprep.subr.bf16.mxu0 0
  %3247 = vmatpush1.bf16.msra.mxu0 0
  %3248 = vmatprep.subr.bf16.mxu0 0
  %3249 = vmatpush1.bf16.msra.mxu0 0
  %3250 = vmatprep.subr.bf16.mxu0 0
  %3251 = vmatpush1.bf16.msra.mxu0 0
  %3252 = vmatprep.subr.bf16.mxu0 0
  %3253 = vmatpush1.bf16.msra.mxu0 0
  %3254 = vmatprep.subr.bf16.mxu0 %v3191
  %3255 = vmatpush1.bf16.msra.mxu0 %v3190
  %3256 = vmatprep.subr.bf16.mxu0 0
  %3257 = vmatpush2.bf16.msra.mxu0 0
  %3258 = vmatprep.subr.bf16.mxu0 0
  %3259 = vmatpush2.bf16.msra.mxu0 0
  %3260 = vmatprep.subr.bf16.mxu0 0
  %3261 = vmatpush2.bf16.msra.mxu0 0
  %3262 = vmatprep.subr.bf16.mxu0 0
  %3263 = vmatpush2.bf16.msra.mxu0 0
  %3264 = vmatprep.subr.bf16.mxu0 0
  %3265 = vmatpush2.bf16.msra.mxu0 0
  %3266 = vmatprep.subr.bf16.mxu0 0
  %3267 = vmatpush2.bf16.msra.mxu0 0
  %3268 = vmatprep.subr.bf16.mxu0 0
  %3269 = vmatpush2.bf16.msra.mxu0 0
  %3270 = vmatprep.subr.bf16.mxu0 0
  %3271 = vmatpush2.bf16.msra.mxu0 0
  %3272 = vmatprep.mubr.bf16.mxu0 0
  %3273 = vmatmul.mubr.bf16.gmra.mxu0 %v3197
  %v3274 = vpop.f32.mrf.mxu0
  %v3275 = vadd.f32 0.0, %v3274
  %v3276 = vpop.f32.mrf.mxu0
  %v3277 = vadd.f32 0.0, %v3276
  %v3278 = vpop.f32.mrf.mxu0
  %v3279 = vpop.f32.mrf.mxu0
  %3280 = vdwg.mxu0
  %v3281 = vadd.f32 %v3108, %v3234
  %v3282 = vadd.f32 %v3110, %v3236
  %v3283 = vadd.f32 %v3149, %v3275
  %v3284 = vadd.f32 %v3151, %v3277
  %v3289 = vcombine.low %v3281, %v3282
  %v3290 = vcombine.low %v3283, %v3284
  %v3292 = vunpack.c.l.s4 1966171168
  %v3293 = vunpack.c.0.s8 %v3292
  %v3294 = vlaneseq
  %v3295 = vshrl.u32 %v3294, 7
  %v3296 = vsub.s32 %v3293, %v3295
  %v3297 = vrot.slane %v3289, %v3296
  %v3299 = vunpack.c.l.s4 1966171168
  %v3300 = vunpack.c.0.s8 %v3299
  %v3301 = vlaneseq
  %v3302 = vshrl.u32 %v3301, 7
  %v3303 = vsub.s32 %v3300, %v3302
  %v3304 = vrot.slane %v3290, %v3303
  %v3305 = vcombine.low %v3297, %v3304
  %v3307 = vunpack.c.l.s4 1966171168
  %v3308 = vunpack.c.0.s8 %v3307
  %v3309 = vlaneseq
  %v3310 = vshrl.u32 %v3309, 7
  %v3311 = vsub.s32 %v3308, %v3310
  %v3312 = vrot.slane %v3305, %v3311
  %v3314 = vlaneseq
  %vm3315 = vcmp.ge.s32.totalorder %v3314, 0
  %vm3316 = vcmp.lt.s32.totalorder %v3314, 512
  %vm3317 = vmand %vm3315, %vm3316
  %s3318 = scalar_lea.vmem [#allocation3], 8
  %3319 = vst.msk [vmem:[%s3318] ss:$8 sm:$0xf] %vm3317, %v3312
  %3320 = vst.msk [vmem:[%s3318] ss:$8 sm:$0x0] %vm3317, %v3312
  %v3321 = vcombine.high %v3312, %v3312
  %s3323 = scalar_lea.vmem [#allocation3], 9
  %3324 = vst.msk [vmem:[%s3323] ss:$8 sm:$0xf] %vm3317, %v3321
  %3325 = vst.msk [vmem:[%s3323] ss:$8 sm:$0x0] %vm3317, %v3321
  %v3326 = vld [vmem:[#allocation3] ss:$8 sm:$0xf]
  %v3327 = vld [vmem:[#allocation3] ss:$8 sm:$0x10]
  %v3328 = vor.u32 %v3326, %v3327
  %v3330 = vlaneseq
  %v3331 = vshrl.u32 %v3330, 7
  %v3332 = vsub.s32 0, %v3331
  %v3333 = vrot.slane %v3328, %v3332
  %v3334 = vlaneseq
  %v3335 = vshrl.u32 %v3334, 7
  %v3336 = vsub.s32 1, %v3335
  %v3337 = vrot.slane %v3328, %v3336
  %v3338 = vlaneseq
  %v3339 = vshrl.u32 %v3338, 7
  %v3340 = vsub.s32 2, %v3339
  %v3341 = vrot.slane %v3328, %v3340
  %v3342 = vlaneseq
  %v3343 = vshrl.u32 %v3342, 7
  %v3344 = vsub.s32 3, %v3343
  %v3345 = vrot.slane %v3328, %v3344
  %v3346 = vlaneseq
  %v3347 = vshrl.u32 %v3346, 7
  %v3348 = vsub.s32 4, %v3347
  %v3349 = vrot.slane %v3328, %v3348
  %3350 = vrot.lane.b32.xlu0 %v3333, 16
  %v3351 = vpop.permute.xlu0 %3350
  %3352 = vrot.lane.b32.xlu0 %v3337, 16
  %v3353 = vpop.permute.xlu0 %3352
  %3354 = vrot.lane.b32.xlu0 %v3341, 16
  %v3355 = vpop.permute.xlu0 %3354
  %3356 = vrot.lane.b32.xlu0 %v3345, 16
  %v3357 = vpop.permute.xlu0 %3356
  %3358 = vrot.lane.b32.xlu0 %v3349, 16
  %v3359 = vpop.permute.xlu0 %3358
  %v3360 = vsel %vm963, %v3351, %v3353
  %v3361 = vsel %vm963, %v3353, %v3355
  %v3362 = vsel %vm963, %v3355, %v3357
  %v3363 = vsel %vm963, %v3357, %v3359
  %v3368 = vsel %vm62, %v3360, 0.0
  %v3369 = vsel %vm63, %v3361, 0.0
  %v3370 = vsel %vm64, %v3362, 0.0
  %v3371 = vsel %vm65, %v3363, 0.0
  %v3376 = vrot.slane %v3368, 7
  %v3377 = vrot.slane %v3369, 7
  %v3378 = vrot.slane %v3370, 7
  %v3379 = vrot.slane %v3371, 7
  %v3384 = vadd.f32 %v3281, %v3376
  %v3385 = vadd.f32 %v3282, %v3377
  %v3386 = vadd.f32 %v3283, %v3378
  %v3387 = vadd.f32 %v3284, %v3379
  %v3388 = vld [vmem:[%s3323] ss:$8 sm:$0xf]
  %v3389 = vld [vmem:[%s3323] ss:$8 sm:$0x10]
  %v3390 = vor.u32 %v3388, %v3389
  %v3392 = vlaneseq
  %v3393 = vshrl.u32 %v3392, 7
  %v3394 = vsub.s32 0, %v3393
  %v3395 = vrot.slane %v3390, %v3394
  %v3396 = vlaneseq
  %v3397 = vshrl.u32 %v3396, 7
  %v3398 = vsub.s32 1, %v3397
  %v3399 = vrot.slane %v3390, %v3398
  %v3400 = vlaneseq
  %v3401 = vshrl.u32 %v3400, 7
  %v3402 = vsub.s32 2, %v3401
  %v3403 = vrot.slane %v3390, %v3402
  %v3404 = vlaneseq
  %v3405 = vshrl.u32 %v3404, 7
  %v3406 = vsub.s32 3, %v3405
  %v3407 = vrot.slane %v3390, %v3406
  %v3408 = vlaneseq
  %v3409 = vshrl.u32 %v3408, 7
  %v3410 = vsub.s32 4, %v3409
  %v3411 = vrot.slane %v3390, %v3410
  %3412 = vrot.lane.b32.xlu0 %v3395, 112
  %v3413 = vpop.permute.xlu0 %3412
  %3414 = vrot.lane.b32.xlu0 %v3399, 112
  %v3415 = vpop.permute.xlu0 %3414
  %3416 = vrot.lane.b32.xlu0 %v3403, 112
  %v3417 = vpop.permute.xlu0 %3416
  %3418 = vrot.lane.b32.xlu0 %v3407, 112
  %v3419 = vpop.permute.xlu0 %3418
  %3420 = vrot.lane.b32.xlu0 %v3411, 112
  %v3421 = vpop.permute.xlu0 %3420
  %v3422 = vsel %vm1078, %v3413, %v3415
  %v3423 = vsel %vm1078, %v3415, %v3417
  %v3424 = vsel %vm1078, %v3417, %v3419
  %v3425 = vsel %vm1078, %v3419, %v3421
  %v3430 = vsel %vm66, %v3422, 0.0
  %v3431 = vsel %vm67, %v3423, 0.0
  %v3432 = vsel %vm68, %v3424, 0.0
  %v3433 = vsel %vm69, %v3425, 0.0
  %v3438 = vrot.slane %v3430, 7
  %v3439 = vrot.slane %v3431, 7
  %v3440 = vrot.slane %v3432, 7
  %v3441 = vrot.slane %v3433, 7
  %v3446 = vadd.f32 %v3384, %v3438
  %v3447 = vadd.f32 %v3385, %v3439
  %v3448 = vadd.f32 %v3386, %v3440
  %v3449 = vadd.f32 %v3387, %v3441
  %v3450 = vld [vmem:[#allocation4] sm:$0x1]
  %3452 = vset.pattern.permute.xlu0 0
  %3453 = vperm.xlu0 %3452, %v3450
  %v3454 = vpop.permute.xlu0 %3453
  %v3456 = vlaneseq
  %v3457 = vshrl.u32 %v3456, 7
  %v3458 = vsub.s32 0, %v3457
  %v3459 = vrot.slane %v3454, %v3458
  %v3460 = vadd.f32 %v3446, %v3459
  %v3461 = vadd.f32 %v3447, %v3459
  %v3462 = vadd.f32 %v3448, %v3459
  %v3463 = vadd.f32 %v3449, %v3459
  %v3464 = vsub.f32 0.0, %v3460
  %v3465 = vsub.f32 0.0, %v3461
  %v3466 = vsub.f32 0.0, %v3462
  %v3467 = vsub.f32 0.0, %v3463
  %v3468 = vmul.f32 %v3464, 1.442695
  %v3469 = vpow.pop %v3468
  %v3470 = vmul.f32 %v3465, 1.442695
  %v3471 = vpow.pop %v3470
  %v3472 = vmul.f32 %v3466, 1.442695
  %v3473 = vpow.pop %v3472
  %v3474 = vmul.f32 %v3467, 1.442695
  %v3475 = vpow.pop %v3474
  %v3476 = vadd.f32 %v3469, 1.0
  %v3477 = vadd.f32 %v3471, 1.0
  %v3478 = vadd.f32 %v3473, 1.0
  %v3479 = vadd.f32 %v3475, 1.0
  %v3480 = vrcp.pop %v3476
  %v3481 = vmul.f32 1.0, %v3480
  %v3482 = vrcp.pop %v3477
  %v3483 = vmul.f32 1.0, %v3482
  %v3484 = vrcp.pop %v3478
  %v3485 = vmul.f32 1.0, %v3484
  %v3486 = vrcp.pop %v3479
  %v3487 = vmul.f32 1.0, %v3486
  %v3492 = vcombine.low %v3481, %v3483
  %v3493 = vcombine.low %v3485, %v3487
  %v3495 = vunpack.c.l.s4 1966171168
  %v3496 = vunpack.c.0.s8 %v3495
  %v3497 = vlaneseq
  %v3498 = vshrl.u32 %v3497, 7
  %v3499 = vsub.s32 %v3496, %v3498
  %v3500 = vrot.slane %v3492, %v3499
  %v3502 = vunpack.c.l.s4 1966171168
  %v3503 = vunpack.c.0.s8 %v3502
  %v3504 = vlaneseq
  %v3505 = vshrl.u32 %v3504, 7
  %v3506 = vsub.s32 %v3503, %v3505
  %v3507 = vrot.slane %v3493, %v3506
  %v3508 = vcombine.high %v3500, %v3507
  %v3510 = vunpack.c.l.s4 1966171168
  %v3511 = vunpack.c.0.s8 %v3510
  %v3512 = vlaneseq
  %v3513 = vshrl.u32 %v3512, 7
  %v3514 = vsub.s32 %v3511, %v3513
  %v3515 = vrot.slane %v3508, %v3514
  %3517 = vst.msk [vmem:[%s9] sm:$0xf] %vm3317, %v3515
  // Predicated region
  $region38: #{fastlf_forward.1} parent=0 // pred_check
    _
  $region39: #{fastlf_forward.1} parent=0 // pred_check_branch
    %3519 = sbr.rel (0) target = $region41
  $region40: #{fastlf_forward.1} parent=0 // pred_region
    _
  $region41: #{fastlf_forward.1} parent=0 // pred_fallthru
    _
  // Predicated region
  $region42: #{fastlf_forward.1} parent=0 // pred_check
    _
  $region43: #{fastlf_forward.1} parent=0 // pred_check_branch
    %3521 = sbr.rel (0) target = $region45
  $region44: #{fastlf_forward.1} parent=0 // pred_region
    _
  $region45: #{fastlf_forward.1} parent=0 // pred_fallthru
    _

</llo_original>
